<compile_context>
chip_gen: v7x
topology: tpu7x:2x2x1
jax: 0.10.0
libtpu: 0.0.40
codegen_flags: <defaults>
</compile_context>

<pallas_src>
import jax
import jax.numpy as jnp
from jax import lax
from jax.experimental import pallas as pl
from jax.experimental.pallas import tpu as pltpu

LN_EPS = 1e-5    # torch.nn.LayerNorm default eps
GEN_EPS = 1e-7   # GENConv message eps


def _layer_norm(x, gamma, beta):
    mu = jnp.mean(x, axis=-1, keepdims=True)
    var = jnp.mean((x - mu) ** 2, axis=-1, keepdims=True)
    return (x - mu) * lax.rsqrt(var + LN_EPS) * gamma + beta


def _bdot(a, w):
    # bf16 MXU operands, f32 accumulation (native MXU dtype on v6e/v7x).
    return jnp.dot(a.astype(jnp.bfloat16), w.astype(jnp.bfloat16),
                   preferred_element_type=jnp.float32)


# ------------------------------------------------------------------ kernel ---
def _deeper_gcn_layers_kernel(
        # inputs
        src_ref, tgt_ref, h0_ref, ea_ref, t_ref,
        pg_ref, pb_ref, w1_ref, b1_ref, g1_ref, be1_ref, w2_ref, b2_ref,
        # output
        h_out_ref,
        # VMEM scratch (persists across the layer grid axis)
        h_s, hin_s, oh_se_s, oh_ne_s):
    l = pl.program_id(0)
    n_layers = pl.num_programs(0)
    n_edges, n_nodes = oh_se_s.shape

    # ---- grid step 0: seed carried state + layer-invariant one-hot operands ----
    @pl.when(l == 0)
    def _():
        h_s[...] = h0_ref[...]
        hin_s[...] = h0_ref[...]        # layer-0 conv sees the raw encoding (no h_s round-trip)
        # one-hot gather matrix  oh_se[e, n] = (src[e] == n)   (E, N)
        oh_se_s[...] = (lax.broadcasted_iota(jnp.int32, (n_edges, n_nodes), 1)
                        == src_ref[...]).astype(jnp.float32)
        # one-hot scatter matrix oh_ne[n, e] = (tgt[e] == n)   (N, E)
        oh_ne_s[...] = (lax.broadcasted_iota(jnp.int32, (n_nodes, n_edges), 0)
                        == tgt_ref[...]).astype(jnp.float32)

    # ---- DeepGCNLayer 'res+' pre-activation: LN -> ReLU (dropout is identity in eval) ----
    @pl.when(l > 0)
    def _():
        hin_s[...] = jnp.maximum(_layer_norm(h_s[...], pg_ref[0], pb_ref[0]), 0.0)

    hin = hin_s[...]

    # ---- GENConv softmax aggregation: fully vectorized, no per-edge loops ----
    t = t_ref[l, 0]

    # gather x_src = hin[src]  via one-hot MXU matmul (exact selection, f32 accumulate)
    x_src = jnp.dot(oh_se_s[...], hin, preferred_element_type=jnp.float32)      # (E, H)
    msg = jnp.maximum(x_src + ea_ref[...], 0.0) + GEN_EPS                        # (E, H)
    s = t * msg
    # per-channel shift: softmax is shift-invariant per segment, so a global (per-channel)
    # max is numerically safe and mathematically equal to PyG's per-segment max of t*msg.
    smax = jnp.max(s, axis=0, keepdims=True)                                     # (1, H)
    p = jnp.exp(s - smax)                                                        # (E, H) EUP slab
    pm = p * msg

    # segment sums via one-hot MXU matmuls (f32 accumulate)
    den = jnp.dot(oh_ne_s[...], p, preferred_element_type=jnp.float32)           # (N, H)
    num = jnp.dot(oh_ne_s[...], pm, preferred_element_type=jnp.float32)          # (N, H)
    inv = pl.reciprocal(jnp.maximum(den, 1e-30), approx=True)                    # EUP
    agg = jnp.where(den > 0.0, num * inv, 0.0)                                   # isolated nodes -> 0
    z = agg + hin                                                                # + x_dst

    # ---- GENConv MLP: Linear -> LayerNorm -> ReLU -> Linear ----
    hid = jnp.maximum(_layer_norm(_bdot(z, w1_ref[0]) + b1_ref[0],
                                  g1_ref[0], be1_ref[0]), 0.0)
    conv = _bdot(hid, w2_ref[0]) + b2_ref[0]

    # ---- residual ('res+'; layer 0 is the bare conv) ----
    @pl.when(l == 0)
    def _():
        h_s[...] = conv

    @pl.when(l > 0)
    def _():
        h_s[...] = h_s[...] + conv

    @pl.when(l == n_layers - 1)
    def _():
        h_out_ref[...] = h_s[...]


# ----------------------------------------------------------------- wrapper ---
def _vmem_limit_bytes():
    # Generation-aware budget: ~7/8 of physical VMEM (v7x 64 MiB -> 56; v5e/v6e 128 -> 112).
    try:
        cap = int(pltpu.get_tpu_info().vmem_capacity_bytes)
    except Exception:
        cap = 64 * 1024 * 1024
    return max(32 * 1024 * 1024, min(cap - cap // 8, 112 * 1024 * 1024))


def deeper_gcn_forward(params, x, edge_index, edge_attr, num_nodes):
    N = int(num_nodes)
    E = int(edge_index.shape[1])
    H = int(params["node_w"].shape[1])
    H2 = int(params["w1"].shape[2])
    L = int(params["w1"].shape[0])

    # Node / edge encoders as plain XLA (perf review: step-0-only work evicted from kernel).
    h0 = _bdot(x.astype(jnp.float32), params["node_w"]) + params["node_b"]        # (N, H)
    ea = _bdot(edge_attr.astype(jnp.float32), params["edge_w"]) + params["edge_b"]  # (E, H)

    src = edge_index[0].astype(jnp.int32).reshape(E, 1)
    tgt = edge_index[1].astype(jnp.int32).reshape(1, E)

    w1 = params["w1"].astype(jnp.bfloat16)
    w2 = params["w2"].astype(jnp.bfloat16)

    const = lambda l: (0, 0)
    per3 = lambda l: (l, 0, 0)

    grid_spec = pltpu.PrefetchScalarGridSpec(
        num_scalar_prefetch=0,
        grid=(L,),                      # sequential layer axis; activations stay in VMEM
        in_specs=[
            pl.BlockSpec((E, 1), const),          # src indices (int32)
            pl.BlockSpec((1, E), const),          # tgt indices (int32)
            pl.BlockSpec((N, H), const),          # encoded node features h0
            pl.BlockSpec((E, H), const),          # encoded edge features
            pl.BlockSpec(memory_space=pltpu.MemorySpace.SMEM),   # per-layer temperature t
            pl.BlockSpec((1, 1, H), per3),        # res+ pre-norm gamma
            pl.BlockSpec((1, 1, H), per3),        # res+ pre-norm beta
            pl.BlockSpec((1, H, H2), per3),       # MLP W1 (bf16)
            pl.BlockSpec((1, 1, H2), per3),       # MLP b1
            pl.BlockSpec((1, 1, H2), per3),       # MLP LN gamma
            pl.BlockSpec((1, 1, H2), per3),       # MLP LN beta
            pl.BlockSpec((1, H2, H), per3),       # MLP W2 (bf16)
            pl.BlockSpec((1, 1, H), per3),        # MLP b2
        ],
        out_specs=pl.BlockSpec((N, H), const),
        scratch_shapes=[
            pltpu.VMEM((N, H), jnp.float32),      # h   (carried across layers)
            pltpu.VMEM((N, H), jnp.float32),      # hin (pre-activation conv input)
            pltpu.VMEM((E, N), jnp.float32),      # one-hot gather matrix  (built once)
            pltpu.VMEM((N, E), jnp.float32),      # one-hot scatter matrix (built once)
        ],
    )

    h = pl.pallas_call(
        _deeper_gcn_layers_kernel,
        out_shape=jax.ShapeDtypeStruct((N, H), jnp.float32),
        grid_spec=grid_spec,
        compiler_params=pltpu.CompilerParams(
            dimension_semantics=("arbitrary",),          # layer axis is sequential
            vmem_limit_bytes=_vmem_limit_bytes()),
    )(src, tgt, h0, ea,
      params["t"], params["pre_gamma"], params["pre_beta"],
      w1, params["b1"], params["ln_gamma"], params["ln_beta"], w2, params["b2"])

    # Head: ReLU(LN_0(h)) -> Linear; dropout(p=0.1) is identity in eval mode.  Plain XLA
    # per perf review (last-step-only work).
    hf = jnp.maximum(_layer_norm(h, params["pre_gamma"][0], params["pre_beta"][0]), 0.0)
    return _bdot(hf, params["lin_w"]) + params["lin_b"]


# ------------------------------------------------------- reference (jnp) -----
def reference_forward(params, x, edge_index, edge_attr, num_nodes):
    """Pure-jnp reference mirroring PyG semantics (per-segment max stabilization on t*msg,
    exact segment sums); matmul numerics match the kernel (bf16 MXU operands, f32 acc)."""
    src, tgt = edge_index[0], edge_index[1]
    L = params["w1"].shape[0]

    def ln(v, g, b):
        mu = v.mean(-1, keepdims=True)
        var = ((v - mu) ** 2).mean(-1, keepdims=True)
        return (v - mu) * lax.rsqrt(var + LN_EPS) * g + b

    def conv(h, ea, i):
        msg = jnp.maximum(h[src] + ea, 0.0) + GEN_EPS
        s = params["t"][i, 0] * msg
        smax = jax.ops.segment_max(s, tgt, num_segments=num_nodes)
        p = jnp.exp(s - smax[tgt])
        den = jax.ops.segment_sum(p, tgt, num_segments=num_nodes)
        num = jax.ops.segment_sum(p * msg, tgt, num_segments=num_nodes)
        agg = jnp.where(den > 0.0, num / jnp.maximum(den, 1e-30), 0.0)
        z = agg + h
        hid = jnp.maximum(ln(_bdot(z, params["w1"][i]) + params["b1"][i],
                             params["ln_gamma"][i], params["ln_beta"][i]), 0.0)
        return _bdot(hid, params["w2"][i]) + params["b2"][i]

    h = _bdot(x, params["node_w"]) + params["node_b"]
    ea = _bdot(edge_attr, params["edge_w"]) + params["edge_b"]
    h = conv(h, ea, 0)
    for i in range(1, L):
        pre = jnp.maximum(ln(h, params["pre_gamma"][i], params["pre_beta"][i]), 0.0)
        h = h + conv(pre, ea, i)
    hf = jnp.maximum(ln(h, params["pre_gamma"][0], params["pre_beta"][0]), 0.0)
    return _bdot(hf, params["lin_w"]) + params["lin_b"]


# ------------------------------------------------------------ param init -----
def init_params(key, node_feat, edge_feat, hidden, num_layers, out_dim):
    ks = jax.random.split(key, 3 + 2 * num_layers)

    def lin_init(k, fin, fout):
        k1, k2 = jax.random.split(k)
        s = 1.0 / (fin ** 0.5)
        w = jax.random.uniform(k1, (fin, fout), jnp.float32, -s, s)
        b = jax.random.uniform(k2, (1, fout), jnp.float32, -s, s)
        return w, b

    node_w, node_b = lin_init(ks[0], node_feat, hidden)
    edge_w, edge_b = lin_init(ks[1], edge_feat, hidden)
    lin_w, lin_b = lin_init(ks[2], hidden, out_dim)

    w1s, b1s, w2s, b2s = [], [], [], []
    for i in range(num_layers):
        w1, b1 = lin_init(ks[3 + 2 * i], hidden, 2 * hidden)    # GENConv MLP expansion=2
        w2, b2 = lin_init(ks[4 + 2 * i], 2 * hidden, hidden)
        w1s.append(w1); b1s.append(b1); w2s.append(w2); b2s.append(b2)

    return dict(
        node_w=node_w, node_b=node_b, edge_w=edge_w, edge_b=edge_b,
        lin_w=lin_w, lin_b=lin_b,
        t=jnp.ones((num_layers, 1), jnp.float32),                      # learn_t, init 1.0
        pre_gamma=jnp.ones((num_layers, 1, hidden), jnp.float32),      # DeepGCNLayer LN
        pre_beta=jnp.zeros((num_layers, 1, hidden), jnp.float32),
        w1=jnp.stack(w1s), b1=jnp.stack(b1s),
        ln_gamma=jnp.ones((num_layers, 1, 2 * hidden), jnp.float32),   # MLP-internal LN
        ln_beta=jnp.zeros((num_layers, 1, 2 * hidden), jnp.float32),
        w2=jnp.stack(w2s), b2=jnp.stack(b2s))


# ------------------------------------------------------------------- main ----
if __name__ == "__main__":
    N, E = 64, 256                         # nodes, edges (multiples of 8 / 128)
    NODE_F, EDGE_F = 8, 8                  # ogbn-proteins: 8 node / 8 edge features
    HIDDEN, NUM_LAYERS, OUT = 128, 3, 112  # lane-dense hidden; 112 protein tasks

    key = jax.random.PRNGKey(0)
    kx, ke, kei, kp = jax.random.split(key, 4)
    x = jax.random.normal(kx, (N, NODE_F), jnp.float32)
    edge_attr = jax.random.normal(ke, (E, EDGE_F), jnp.float32)
    edge_index = jax.random.randint(kei, (2, E), 0, N)

    params = init_params(kp, NODE_F, EDGE_F, HIDDEN, NUM_LAYERS, OUT)

    out = deeper_gcn_forward(params, x, edge_index, edge_attr, N)
    out = jax.block_until_ready(out)

    ref = reference_forward(params, x, edge_index, edge_attr, N)
    assert out.shape == (N, OUT)
    assert bool(jnp.all(jnp.isfinite(out)))
    err = float(jnp.max(jnp.abs(out - ref)))
    assert err < 2e-2, f"pallas vs reference mismatch: {err}"
    # TODO(synk): dropout(p=0.1) / ckpt_grad are training-only; eval-mode (identity) semantics.
    print("KERNEL_OK")
</pallas_src>

<mosaic_0001>
module attributes {stable_mosaic.version = 11 : i64} {
  func.func @_deeper_gcn_layers_kernel(%arg0: i32, %arg1: memref<256x1xi32, #tpu.memory_space<vmem>>, %arg2: memref<1x256xi32, #tpu.memory_space<vmem>>, %arg3: memref<64x128xf32, #tpu.memory_space<vmem>>, %arg4: memref<256x128xf32, #tpu.memory_space<vmem>>, %arg5: memref<3x1xf32, #tpu.memory_space<smem>>, %arg6: memref<1x1x128xf32, #tpu.memory_space<vmem>>, %arg7: memref<1x1x128xf32, #tpu.memory_space<vmem>>, %arg8: memref<1x128x256xbf16, #tpu.memory_space<vmem>>, %arg9: memref<1x1x256xf32, #tpu.memory_space<vmem>>, %arg10: memref<1x1x256xf32, #tpu.memory_space<vmem>>, %arg11: memref<1x1x256xf32, #tpu.memory_space<vmem>>, %arg12: memref<1x256x128xbf16, #tpu.memory_space<vmem>>, %arg13: memref<1x1x128xf32, #tpu.memory_space<vmem>>, %arg14: memref<64x128xf32, #tpu.memory_space<vmem>>, %arg15: memref<64x128xf32, #tpu.memory_space<vmem>>, %arg16: memref<64x128xf32, #tpu.memory_space<vmem>>, %arg17: memref<256x64xf32, #tpu.memory_space<vmem>>, %arg18: memref<64x256xf32, #tpu.memory_space<vmem>>) attributes {dimension_semantics = [#tpu.dimension_semantics<arbitrary>], iteration_bounds = array<i64: 3>, scalar_prefetch = 0 : i64, scratch_operands = 4 : i64, tpu.core_type = #tpu.core_type<tc>, window_params = [{pipeline_mode = #tpu.pipeline_mode<synchronous>, transform_indices = @transform_0, window_bounds = array<i64: 256, 1>}, {pipeline_mode = #tpu.pipeline_mode<synchronous>, transform_indices = @transform_1, window_bounds = array<i64: 1, 256>}, {pipeline_mode = #tpu.pipeline_mode<synchronous>, transform_indices = @transform_2, window_bounds = array<i64: 64, 128>}, {pipeline_mode = #tpu.pipeline_mode<synchronous>, transform_indices = @transform_3, window_bounds = array<i64: 256, 128>}, {transform_indices = @transform_4, window_bounds = array<i64: 3, 1>}, {transform_indices = @transform_5, window_bounds = array<i64: 1, 1, 128>}, {transform_indices = @transform_6, window_bounds = array<i64: 1, 1, 128>}, {transform_indices = @transform_7, window_bounds = array<i64: 1, 128, 256>}, {transform_indices = @transform_8, window_bounds = array<i64: 1, 1, 256>}, {transform_indices = @transform_9, window_bounds = array<i64: 1, 1, 256>}, {transform_indices = @transform_10, window_bounds = array<i64: 1, 1, 256>}, {transform_indices = @transform_11, window_bounds = array<i64: 1, 256, 128>}, {transform_indices = @transform_12, window_bounds = array<i64: 1, 1, 128>}, {pipeline_mode = #tpu.pipeline_mode<synchronous>, transform_indices = @transform_13, window_bounds = array<i64: 64, 128>}]} {
    %c0_i32 = arith.constant 0 : i32
    %0 = arith.cmpi eq, %arg0, %c0_i32 : i32
    %1 = arith.extui %0 : i1 to i32
    %c0_i32_0 = arith.constant 0 : i32
    %2 = arith.cmpi ne, %1, %c0_i32_0 : i32
    scf.if %2 {
      %c0_52 = arith.constant 0 : index
      %c0_53 = arith.constant 0 : index
      %91 = vector.load %arg3[%c0_52, %c0_53] : memref<64x128xf32, #tpu.memory_space<vmem>>, vector<64x128xf32>
      %c0_54 = arith.constant 0 : index
      %c0_55 = arith.constant 0 : index
      %92 = vector.load %arg15[%c0_54, %c0_55] : memref<64x128xf32, #tpu.memory_space<vmem>>, vector<64x128xf32>
      tpu.vector_store %arg15[%c0_54, %c0_55], %91 {strides = array<i32>} : memref<64x128xf32, #tpu.memory_space<vmem>>, vector<64x128xf32>,
      %c0_56 = arith.constant 0 : index
      %c0_57 = arith.constant 0 : index
      %93 = vector.load %arg3[%c0_56, %c0_57] : memref<64x128xf32, #tpu.memory_space<vmem>>, vector<64x128xf32>
      %c0_58 = arith.constant 0 : index
      %c0_59 = arith.constant 0 : index
      %94 = vector.load %arg16[%c0_58, %c0_59] : memref<64x128xf32, #tpu.memory_space<vmem>>, vector<64x128xf32>
      tpu.vector_store %arg16[%c0_58, %c0_59], %93 {strides = array<i32>} : memref<64x128xf32, #tpu.memory_space<vmem>>, vector<64x128xf32>,
      %95 = tpu.iota {dimensions = array<i32: 1>} : vector<256x64xi32>
      %c0_60 = arith.constant 0 : index
      %c0_61 = arith.constant 0 : index
      %96 = vector.load %arg1[%c0_60, %c0_61] : memref<256x1xi32, #tpu.memory_space<vmem>>, vector<256x1xi32>
      %97 = vector.broadcast %96 : vector<256x1xi32> to vector<256x64xi32>
      %98 = arith.cmpi eq, %95, %97 : vector<256x64xi32>
      %99 = arith.extui %98 : vector<256x64xi1> to vector<256x64xi32>
      %100 = arith.sitofp %99 : vector<256x64xi32> to vector<256x64xf32>
      %c0_62 = arith.constant 0 : index
      %c0_63 = arith.constant 0 : index
      %101 = vector.load %arg17[%c0_62, %c0_63] : memref<256x64xf32, #tpu.memory_space<vmem>>, vector<256x64xf32>
      tpu.vector_store %arg17[%c0_62, %c0_63], %100 {strides = array<i32>} : memref<256x64xf32, #tpu.memory_space<vmem>>, vector<256x64xf32>,
      %102 = tpu.iota {dimensions = array<i32: 0>} : vector<64x256xi32>
      %c0_64 = arith.constant 0 : index
      %c0_65 = arith.constant 0 : index
      %103 = vector.load %arg2[%c0_64, %c0_65] : memref<1x256xi32, #tpu.memory_space<vmem>>, vector<1x256xi32>
      %104 = vector.broadcast %103 : vector<1x256xi32> to vector<64x256xi32>
      %105 = arith.cmpi eq, %102, %104 : vector<64x256xi32>
      %106 = arith.extui %105 : vector<64x256xi1> to vector<64x256xi32>
      %107 = arith.sitofp %106 : vector<64x256xi32> to vector<64x256xf32>
      %c0_66 = arith.constant 0 : index
      %c0_67 = arith.constant 0 : index
      %108 = vector.load %arg18[%c0_66, %c0_67] : memref<64x256xf32, #tpu.memory_space<vmem>>, vector<64x256xf32>
      tpu.vector_store %arg18[%c0_66, %c0_67], %107 {strides = array<i32>} : memref<64x256xf32, #tpu.memory_space<vmem>>, vector<64x256xf32>,
    } else {
    }
    %c0_i32_1 = arith.constant 0 : i32
    %3 = arith.cmpi sgt, %arg0, %c0_i32_1 : i32
    %4 = arith.extui %3 : i1 to i32
    %c0_i32_2 = arith.constant 0 : i32
    %5 = arith.cmpi ne, %4, %c0_i32_2 : i32
    scf.if %5 {
      %c0_52 = arith.constant 0 : index
      %c0_53 = arith.constant 0 : index
      %91 = vector.load %arg15[%c0_52, %c0_53] : memref<64x128xf32, #tpu.memory_space<vmem>>, vector<64x128xf32>
      %c0_54 = arith.constant 0 : index
      %c0_55 = arith.constant 0 : index
      %c0_56 = arith.constant 0 : index
      %92 = vector.load %arg6[%c0_54, %c0_55, %c0_56] : memref<1x1x128xf32, #tpu.memory_space<vmem>>, vector<1x1x128xf32>
      %93 = vector.shape_cast %92 : vector<1x1x128xf32> to vector<1x128xf32>
      %c0_57 = arith.constant 0 : index
      %c0_58 = arith.constant 0 : index
      %c0_59 = arith.constant 0 : index
      %94 = vector.load %arg7[%c0_57, %c0_58, %c0_59] : memref<1x1x128xf32, #tpu.memory_space<vmem>>, vector<1x1x128xf32>
      %95 = vector.shape_cast %94 : vector<1x1x128xf32> to vector<1x128xf32>
      %cst_60 = arith.constant dense<0.000000e+00> : vector<64xf32>
      %96 = vector.multi_reduction <add>, %91, %cst_60 [1] : vector<64x128xf32> to vector<64xf32>
      %97 = vector.shape_cast %96 : vector<64xf32> to vector<64x1xf32>
      %cst_61 = arith.constant 1.280000e+02 : f32
      %98 = vector.broadcast %cst_61 : f32 to vector<64x1xf32>
      %99 = arith.divf %97, %98 : vector<64x1xf32>
      %100 = vector.broadcast %99 : vector<64x1xf32> to vector<64x128xf32>
      %101 = arith.subf %91, %100 : vector<64x128xf32>
      %102 = arith.mulf %101, %101 : vector<64x128xf32>
      %cst_62 = arith.constant dense<0.000000e+00> : vector<64xf32>
      %103 = vector.multi_reduction <add>, %102, %cst_62 [1] : vector<64x128xf32> to vector<64xf32>
      %104 = vector.shape_cast %103 : vector<64xf32> to vector<64x1xf32>
      %cst_63 = arith.constant 1.280000e+02 : f32
      %105 = vector.broadcast %cst_63 : f32 to vector<64x1xf32>
      %106 = arith.divf %104, %105 : vector<64x1xf32>
      %107 = vector.broadcast %99 : vector<64x1xf32> to vector<64x128xf32>
      %108 = arith.subf %91, %107 : vector<64x128xf32>
      %cst_64 = arith.constant 9.99999974E-6 : f32
      %109 = vector.broadcast %cst_64 : f32 to vector<64x1xf32>
      %110 = arith.addf %106, %109 : vector<64x1xf32>
      %111 = math.rsqrt %110 : vector<64x1xf32>
      %112 = vector.broadcast %111 : vector<64x1xf32> to vector<64x128xf32>
      %113 = arith.mulf %108, %112 : vector<64x128xf32>
      %114 = vector.broadcast %93 : vector<1x128xf32> to vector<64x128xf32>
      %115 = arith.mulf %113, %114 : vector<64x128xf32>
      %116 = vector.broadcast %95 : vector<1x128xf32> to vector<64x128xf32>
      %117 = arith.addf %115, %116 : vector<64x128xf32>
      %cst_65 = arith.constant 0.000000e+00 : f32
      %118 = vector.broadcast %cst_65 : f32 to vector<64x128xf32>
      %119 = arith.maximumf %117, %118 : vector<64x128xf32>
      %c0_66 = arith.constant 0 : index
      %c0_67 = arith.constant 0 : index
      %120 = vector.load %arg16[%c0_66, %c0_67] : memref<64x128xf32, #tpu.memory_space<vmem>>, vector<64x128xf32>
      tpu.vector_store %arg16[%c0_66, %c0_67], %119 {strides = array<i32>} : memref<64x128xf32, #tpu.memory_space<vmem>>, vector<64x128xf32>,
    } else {
    }
    %c0 = arith.constant 0 : index
    %c0_3 = arith.constant 0 : index
    %6 = vector.load %arg16[%c0, %c0_3] : memref<64x128xf32, #tpu.memory_space<vmem>>, vector<64x128xf32>
    %7 = arith.index_cast %arg0 : i32 to index
    %c0_4 = arith.constant 0 : index
    %8 = memref.load %arg5[%7, %c0_4] : memref<3x1xf32, #tpu.memory_space<smem>>
    %c0_5 = arith.constant 0 : index
    %c0_6 = arith.constant 0 : index
    %9 = vector.load %arg17[%c0_5, %c0_6] : memref<256x64xf32, #tpu.memory_space<vmem>>, vector<256x64xf32>
    %cst = arith.constant dense<0.000000e+00> : vector<256x128xf32>
    %10 = tpu.matmul %9, %6, %cst {dimension_numbers = #tpu.dot_dimension_numbers<[1], [0], [0], [1], [0, 0, 1, 1], [], []>} : vector<256x64xf32>, vector<64x128xf32>, vector<256x128xf32> -> vector<256x128xf32>
    %c0_7 = arith.constant 0 : index
    %c0_8 = arith.constant 0 : index
    %11 = vector.load %arg4[%c0_7, %c0_8] : memref<256x128xf32, #tpu.memory_space<vmem>>, vector<256x128xf32>
    %12 = arith.addf %10, %11 : vector<256x128xf32>
    %cst_9 = arith.constant 0.000000e+00 : f32
    %13 = vector.broadcast %cst_9 : f32 to vector<256x128xf32>
    %14 = arith.maximumf %12, %13 : vector<256x128xf32>
    %cst_10 = arith.constant 1.000000e-07 : f32
    %15 = vector.broadcast %cst_10 : f32 to vector<256x128xf32>
    %16 = arith.addf %14, %15 : vector<256x128xf32>
    %17 = vector.broadcast %8 : f32 to vector<256x128xf32>
    %18 = arith.mulf %17, %16 : vector<256x128xf32>
    %cst_11 = arith.constant dense<0xFF800000> : vector<128xf32>
    %19 = vector.multi_reduction <maximumf>, %18, %cst_11 [0] : vector<256x128xf32> to vector<128xf32>
    %20 = vector.shape_cast %19 : vector<128xf32> to vector<1x128xf32>
    %21 = vector.broadcast %20 : vector<1x128xf32> to vector<256x128xf32>
    %22 = arith.subf %18, %21 : vector<256x128xf32>
    %23 = math.exp %22 : vector<256x128xf32>
    %24 = arith.mulf %23, %16 : vector<256x128xf32>
    %c0_12 = arith.constant 0 : index
    %c0_13 = arith.constant 0 : index
    %25 = vector.load %arg18[%c0_12, %c0_13] : memref<64x256xf32, #tpu.memory_space<vmem>>, vector<64x256xf32>
    %cst_14 = arith.constant dense<0.000000e+00> : vector<64x128xf32>
    %26 = tpu.matmul %25, %23, %cst_14 {dimension_numbers = #tpu.dot_dimension_numbers<[1], [0], [0], [1], [0, 0, 1, 1], [], []>} : vector<64x256xf32>, vector<256x128xf32>, vector<64x128xf32> -> vector<64x128xf32>
    %c0_15 = arith.constant 0 : index
    %c0_16 = arith.constant 0 : index
    %27 = vector.load %arg18[%c0_15, %c0_16] : memref<64x256xf32, #tpu.memory_space<vmem>>, vector<64x256xf32>
    %cst_17 = arith.constant dense<0.000000e+00> : vector<64x128xf32>
    %28 = tpu.matmul %27, %24, %cst_17 {dimension_numbers = #tpu.dot_dimension_numbers<[1], [0], [0], [1], [0, 0, 1, 1], [], []>} : vector<64x256xf32>, vector<256x128xf32>, vector<64x128xf32> -> vector<64x128xf32>
    %cst_18 = arith.constant 1.000000e-30 : f32
    %29 = vector.broadcast %cst_18 : f32 to vector<64x128xf32>
    %30 = arith.maximumf %26, %29 : vector<64x128xf32>
    %31 = tpu.reciprocal %30 {approx = true} : vector<64x128xf32> -> vector<64x128xf32>
    %cst_19 = arith.constant 0.000000e+00 : f32
    %32 = vector.broadcast %cst_19 : f32 to vector<64x128xf32>
    %33 = arith.cmpf ogt, %26, %32 : vector<64x128xf32>
    %34 = arith.mulf %28, %31 : vector<64x128xf32>
    %cst_20 = arith.constant 0.000000e+00 : f32
    %35 = vector.broadcast %cst_20 : f32 to vector<64x128xf32>
    %36 = arith.select %33, %34, %35 : vector<64x128xi1>, vector<64x128xf32>
    %37 = arith.addf %36, %6 : vector<64x128xf32>
    %c0_21 = arith.constant 0 : index
    %c0_22 = arith.constant 0 : index
    %c0_23 = arith.constant 0 : index
    %38 = vector.load %arg8[%c0_21, %c0_22, %c0_23] : memref<1x128x256xbf16, #tpu.memory_space<vmem>>, vector<1x128x256xbf16>
    %39 = vector.shape_cast %38 : vector<1x128x256xbf16> to vector<128x256xbf16>
    %40 = arith.truncf %37 : vector<64x128xf32> to vector<64x128xbf16>
    %cst_24 = arith.constant dense<0.000000e+00> : vector<64x256xf32>
    %41 = tpu.matmul %40, %39, %cst_24 {dimension_numbers = #tpu.dot_dimension_numbers<[1], [0], [0], [1], [0, 0, 1, 1], [], []>} : vector<64x128xbf16>, vector<128x256xbf16>, vector<64x256xf32> -> vector<64x256xf32>
    %c0_25 = arith.constant 0 : index
    %c0_26 = arith.constant 0 : index
    %c0_27 = arith.constant 0 : index
    %42 = vector.load %arg9[%c0_25, %c0_26, %c0_27] : memref<1x1x256xf32, #tpu.memory_space<vmem>>, vector<1x1x256xf32>
    %43 = vector.shape_cast %42 : vector<1x1x256xf32> to vector<1x256xf32>
    %44 = vector.broadcast %43 : vector<1x256xf32> to vector<64x256xf32>
    %45 = arith.addf %41, %44 : vector<64x256xf32>
    %c0_28 = arith.constant 0 : index
    %c0_29 = arith.constant 0 : index
    %c0_30 = arith.constant 0 : index
    %46 = vector.load %arg10[%c0_28, %c0_29, %c0_30] : memref<1x1x256xf32, #tpu.memory_space<vmem>>, vector<1x1x256xf32>
    %47 = vector.shape_cast %46 : vector<1x1x256xf32> to vector<1x256xf32>
    %c0_31 = arith.constant 0 : index
    %c0_32 = arith.constant 0 : index
    %c0_33 = arith.constant 0 : index
    %48 = vector.load %arg11[%c0_31, %c0_32, %c0_33] : memref<1x1x256xf32, #tpu.memory_space<vmem>>, vector<1x1x256xf32>
    %49 = vector.shape_cast %48 : vector<1x1x256xf32> to vector<1x256xf32>
    %cst_34 = arith.constant dense<0.000000e+00> : vector<64xf32>
    %50 = vector.multi_reduction <add>, %45, %cst_34 [1] : vector<64x256xf32> to vector<64xf32>
    %51 = vector.shape_cast %50 : vector<64xf32> to vector<64x1xf32>
    %cst_35 = arith.constant 2.560000e+02 : f32
    %52 = vector.broadcast %cst_35 : f32 to vector<64x1xf32>
    %53 = arith.divf %51, %52 : vector<64x1xf32>
    %54 = vector.broadcast %53 : vector<64x1xf32> to vector<64x256xf32>
    %55 = arith.subf %45, %54 : vector<64x256xf32>
    %56 = arith.mulf %55, %55 : vector<64x256xf32>
    %cst_36 = arith.constant dense<0.000000e+00> : vector<64xf32>
    %57 = vector.multi_reduction <add>, %56, %cst_36 [1] : vector<64x256xf32> to vector<64xf32>
    %58 = vector.shape_cast %57 : vector<64xf32> to vector<64x1xf32>
    %cst_37 = arith.constant 2.560000e+02 : f32
    %59 = vector.broadcast %cst_37 : f32 to vector<64x1xf32>
    %60 = arith.divf %58, %59 : vector<64x1xf32>
    %61 = vector.broadcast %53 : vector<64x1xf32> to vector<64x256xf32>
    %62 = arith.subf %45, %61 : vector<64x256xf32>
    %cst_38 = arith.constant 9.99999974E-6 : f32
    %63 = vector.broadcast %cst_38 : f32 to vector<64x1xf32>
    %64 = arith.addf %60, %63 : vector<64x1xf32>
    %65 = math.rsqrt %64 : vector<64x1xf32>
    %66 = vector.broadcast %65 : vector<64x1xf32> to vector<64x256xf32>
    %67 = arith.mulf %62, %66 : vector<64x256xf32>
    %68 = vector.broadcast %47 : vector<1x256xf32> to vector<64x256xf32>
    %69 = arith.mulf %67, %68 : vector<64x256xf32>
    %70 = vector.broadcast %49 : vector<1x256xf32> to vector<64x256xf32>
    %71 = arith.addf %69, %70 : vector<64x256xf32>
    %cst_39 = arith.constant 0.000000e+00 : f32
    %72 = vector.broadcast %cst_39 : f32 to vector<64x256xf32>
    %73 = arith.maximumf %71, %72 : vector<64x256xf32>
    %c0_40 = arith.constant 0 : index
    %c0_41 = arith.constant 0 : index
    %c0_42 = arith.constant 0 : index
    %74 = vector.load %arg12[%c0_40, %c0_41, %c0_42] : memref<1x256x128xbf16, #tpu.memory_space<vmem>>, vector<1x256x128xbf16>
    %75 = vector.shape_cast %74 : vector<1x256x128xbf16> to vector<256x128xbf16>
    %76 = arith.truncf %73 : vector<64x256xf32> to vector<64x256xbf16>
    %cst_43 = arith.constant dense<0.000000e+00> : vector<64x128xf32>
    %77 = tpu.matmul %76, %75, %cst_43 {dimension_numbers = #tpu.dot_dimension_numbers<[1], [0], [0], [1], [0, 0, 1, 1], [], []>} : vector<64x256xbf16>, vector<256x128xbf16>, vector<64x128xf32> -> vector<64x128xf32>
    %c0_44 = arith.constant 0 : index
    %c0_45 = arith.constant 0 : index
    %c0_46 = arith.constant 0 : index
    %78 = vector.load %arg13[%c0_44, %c0_45, %c0_46] : memref<1x1x128xf32, #tpu.memory_space<vmem>>, vector<1x1x128xf32>
    %79 = vector.shape_cast %78 : vector<1x1x128xf32> to vector<1x128xf32>
    %80 = vector.broadcast %79 : vector<1x128xf32> to vector<64x128xf32>
    %81 = arith.addf %77, %80 : vector<64x128xf32>
    %c0_i32_47 = arith.constant 0 : i32
    %82 = arith.cmpi eq, %arg0, %c0_i32_47 : i32
    %83 = arith.extui %82 : i1 to i32
    %c0_i32_48 = arith.constant 0 : i32
    %84 = arith.cmpi ne, %83, %c0_i32_48 : i32
    scf.if %84 {
      %c0_52 = arith.constant 0 : index
      %c0_53 = arith.constant 0 : index
      %91 = vector.load %arg15[%c0_52, %c0_53] : memref<64x128xf32, #tpu.memory_space<vmem>>, vector<64x128xf32>
      tpu.vector_store %arg15[%c0_52, %c0_53], %81 {strides = array<i32>} : memref<64x128xf32, #tpu.memory_space<vmem>>, vector<64x128xf32>,
    } else {
    }
    %c0_i32_49 = arith.constant 0 : i32
    %85 = arith.cmpi sgt, %arg0, %c0_i32_49 : i32
    %86 = arith.extui %85 : i1 to i32
    %c0_i32_50 = arith.constant 0 : i32
    %87 = arith.cmpi ne, %86, %c0_i32_50 : i32
    scf.if %87 {
      %c0_52 = arith.constant 0 : index
      %c0_53 = arith.constant 0 : index
      %91 = vector.load %arg15[%c0_52, %c0_53] : memref<64x128xf32, #tpu.memory_space<vmem>>, vector<64x128xf32>
      %92 = arith.addf %91, %81 : vector<64x128xf32>
      %c0_54 = arith.constant 0 : index
      %c0_55 = arith.constant 0 : index
      %93 = vector.load %arg15[%c0_54, %c0_55] : memref<64x128xf32, #tpu.memory_space<vmem>>, vector<64x128xf32>
      tpu.vector_store %arg15[%c0_54, %c0_55], %92 {strides = array<i32>} : memref<64x128xf32, #tpu.memory_space<vmem>>, vector<64x128xf32>,
    } else {
    }
    %c2_i32 = arith.constant 2 : i32
    %88 = arith.cmpi eq, %arg0, %c2_i32 : i32
    %89 = arith.extui %88 : i1 to i32
    %c0_i32_51 = arith.constant 0 : i32
    %90 = arith.cmpi ne, %89, %c0_i32_51 : i32
    scf.if %90 {
      %c0_52 = arith.constant 0 : index
      %c0_53 = arith.constant 0 : index
      %91 = vector.load %arg15[%c0_52, %c0_53] : memref<64x128xf32, #tpu.memory_space<vmem>>, vector<64x128xf32>
      %c0_54 = arith.constant 0 : index
      %c0_55 = arith.constant 0 : index
      %92 = vector.load %arg14[%c0_54, %c0_55] : memref<64x128xf32, #tpu.memory_space<vmem>>, vector<64x128xf32>
      tpu.vector_store %arg14[%c0_54, %c0_55], %91 {strides = array<i32>} : memref<64x128xf32, #tpu.memory_space<vmem>>, vector<64x128xf32>,
    } else {
    }
    return
  }
  func.func @transform_0(%arg0: i32) -> (i32, i32) {
    %c0_i32 = arith.constant 0 : i32
    %c0_i32_0 = arith.constant 0 : i32
    %c0_i32_1 = arith.constant 0 : i32
    return %c0_i32, %c0_i32_0 : i32, i32
  }
  func.func @transform_1(%arg0: i32) -> (i32, i32) {
    %c0_i32 = arith.constant 0 : i32
    %c0_i32_0 = arith.constant 0 : i32
    %c0_i32_1 = arith.constant 0 : i32
    return %c0_i32, %c0_i32_0 : i32, i32
  }
  func.func @transform_2(%arg0: i32) -> (i32, i32) {
    %c0_i32 = arith.constant 0 : i32
    %c0_i32_0 = arith.constant 0 : i32
    %c0_i32_1 = arith.constant 0 : i32
    return %c0_i32, %c0_i32_0 : i32, i32
  }
  func.func @transform_3(%arg0: i32) -> (i32, i32) {
    %c0_i32 = arith.constant 0 : i32
    %c0_i32_0 = arith.constant 0 : i32
    %c0_i32_1 = arith.constant 0 : i32
    return %c0_i32, %c0_i32_0 : i32, i32
  }
  func.func @transform_4(%arg0: i32) -> (i32, i32) {
    %c0_i32 = arith.constant 0 : i32
    %c0_i32_0 = arith.constant 0 : i32
    %c0_i32_1 = arith.constant 0 : i32
    return %c0_i32, %c0_i32_0 : i32, i32
  }
  func.func @transform_5(%arg0: i32) -> (i32, i32, i32) {
    %c0_i32 = arith.constant 0 : i32
    %c0_i32_0 = arith.constant 0 : i32
    %c0_i32_1 = arith.constant 0 : i32
    return %arg0, %c0_i32, %c0_i32_0 : i32, i32, i32
  }
  func.func @transform_6(%arg0: i32) -> (i32, i32, i32) {
    %c0_i32 = arith.constant 0 : i32
    %c0_i32_0 = arith.constant 0 : i32
    %c0_i32_1 = arith.constant 0 : i32
    return %arg0, %c0_i32, %c0_i32_0 : i32, i32, i32
  }
  func.func @transform_7(%arg0: i32) -> (i32, i32, i32) {
    %c0_i32 = arith.constant 0 : i32
    %c0_i32_0 = arith.constant 0 : i32
    %c0_i32_1 = arith.constant 0 : i32
    return %arg0, %c0_i32, %c0_i32_0 : i32, i32, i32
  }
  func.func @transform_8(%arg0: i32) -> (i32, i32, i32) {
    %c0_i32 = arith.constant 0 : i32
    %c0_i32_0 = arith.constant 0 : i32
    %c0_i32_1 = arith.constant 0 : i32
    return %arg0, %c0_i32, %c0_i32_0 : i32, i32, i32
  }
  func.func @transform_9(%arg0: i32) -> (i32, i32, i32) {
    %c0_i32 = arith.constant 0 : i32
    %c0_i32_0 = arith.constant 0 : i32
    %c0_i32_1 = arith.constant 0 : i32
    return %arg0, %c0_i32, %c0_i32_0 : i32, i32, i32
  }
  func.func @transform_10(%arg0: i32) -> (i32, i32, i32) {
    %c0_i32 = arith.constant 0 : i32
    %c0_i32_0 = arith.constant 0 : i32
    %c0_i32_1 = arith.constant 0 : i32
    return %arg0, %c0_i32, %c0_i32_0 : i32, i32, i32
  }
  func.func @transform_11(%arg0: i32) -> (i32, i32, i32) {
    %c0_i32 = arith.constant 0 : i32
    %c0_i32_0 = arith.constant 0 : i32
    %c0_i32_1 = arith.constant 0 : i32
    return %arg0, %c0_i32, %c0_i32_0 : i32, i32, i32
  }
  func.func @transform_12(%arg0: i32) -> (i32, i32, i32) {
    %c0_i32 = arith.constant 0 : i32
    %c0_i32_0 = arith.constant 0 : i32
    %c0_i32_1 = arith.constant 0 : i32
    return %arg0, %c0_i32, %c0_i32_0 : i32, i32, i32
  }
  func.func @transform_13(%arg0: i32) -> (i32, i32) {
    %c0_i32 = arith.constant 0 : i32
    %c0_i32_0 = arith.constant 0 : i32
    %c0_i32_1 = arith.constant 0 : i32
    return %c0_i32, %c0_i32_0 : i32, i32
  }
}

</mosaic_0001>

<llo_original>
// kernel: tpu_custom_call.1
$region0: #{tpu_custom_call.1}
  #allocation0 [shape = 'u32[]', space=smem, size = 0x4, offset = 0x4, fixed_abs, tag = 'smem constant byte address 0x4 - core index']
  #allocation1 [shape = 'u32[144,128]{1,0:T(1,128)}', space=vmem, size = 0x12000, scoped, tag = 'internal scratch']
  #allocation2 [shape = 'f32[64,128]{1,0:T(8,128)}', space=vmem, size = 0x8000, scoped, tag = 'scratch operand']
  #allocation3 [shape = 'f32[64,128]{1,0:T(8,128)}', space=vmem, size = 0x8000, scoped, tag = 'scratch operand']
  #allocation4 [shape = 'f32[256,64]{1,0:T(8,128)}', space=vmem, size = 0x20000, scoped, tag = 'scratch operand']
  #allocation5 [shape = 'f32[64,256]{1,0:T(8,128)}', space=vmem, size = 0x10000, scoped, tag = 'scratch operand']
  %s0 = inlined_call_operand.vmem [shape: s32[256,1], index: 0, kind: input, shape index: {}]
  %s1 = inlined_call_operand.hbm [shape: s32[1,256], index: 1, kind: input, shape index: {}]
  %s2 = inlined_call_operand.hbm [shape: f32[64,128], index: 2, kind: input, shape index: {}]
  %s3 = inlined_call_operand.vmem [shape: f32[256,128], index: 3, kind: input, shape index: {}]
  %s4 = inlined_call_operand.vmem [shape: f32[3,1], index: 4, kind: input, shape index: {}]
  %s5 = inlined_call_operand.vmem [shape: f32[3,1,128], index: 5, kind: input, shape index: {}]
  %s6 = inlined_call_operand.vmem [shape: f32[3,1,128], index: 6, kind: input, shape index: {}]
  %s7 = inlined_call_operand.hbm [shape: bf16[3,128,256], index: 7, kind: input, shape index: {}]
  %s8 = inlined_call_operand.vmem [shape: f32[3,1,256], index: 8, kind: input, shape index: {}]
  %s9 = inlined_call_operand.vmem [shape: f32[3,1,256], index: 9, kind: input, shape index: {}]
  %s10 = inlined_call_operand.vmem [shape: f32[3,1,256], index: 10, kind: input, shape index: {}]
  %s11 = inlined_call_operand.hbm [shape: bf16[3,256,128], index: 11, kind: input, shape index: {}]
  %s12 = inlined_call_operand.vmem [shape: f32[3,1,128], index: 12, kind: input, shape index: {}]
  %s13 = inlined_call_operand.hbm [shape: f32[64,128], index: 13, kind: output, shape index: {}]
  %s14 = sld [smem:[#allocation0]]
  $region125: #{tpu_custom_call.1} parent=0
    _
  %s16 = ssub.s32 1, %s14
  %s17 = scalar_select 0, %s16, %s14
  $region1: #{tpu_custom_call.1} parent=0
    #allocation6 [shape = 'u8[1024]{0}', space=vmem, size = 0x400, scoped, tag = 'input window, operand 1, single buffered']
    #allocation7 [shape = 's32[2]{0}', space=sflag, size = 0x8, scoped, tag = 'scoped memory for tpu_custom_call.1']
    #allocation8 [shape = 's32[2]{0}', space=sflag, size = 0x8, scoped, tag = 'scoped memory for tpu_custom_call.1']
    #allocation9 [shape = 's32[2]{0}', space=sflag, size = 0x8, scoped, tag = 'scoped memory for tpu_custom_call.1']
    #allocation10 [shape = 'u8[32768]{0}', space=vmem, size = 0x8000, scoped, tag = 'input window, operand 2, single buffered']
    #allocation11 [shape = 's32[1]{0}', space=sflag, size = 0x4, scoped, tag = 'scoped memory for tpu_custom_call.1']
    #allocation12 [shape = 'u8[2048]{0}', space=smem, size = 0x800, scoped, tag = 'input window, operand 4, single buffered']
    #allocation13 [shape = 'u8[131072]{0}', space=vmem, size = 0x20000, scoped, tag = 'input window, operand 7']
    #allocation14 [shape = 'u8[131072]{0}', space=vmem, size = 0x20000, scoped, tag = 'input window, operand 11']
    #allocation15 [shape = 'u8[32768]{0}', space=vmem, size = 0x8000, scoped, tag = 'output window, operand 0, single buffered']
    %18 = vsyncpa [#allocation7], 0
    %19 = vsyncpa [#allocation11], 0
    %20 = vsyncpa [#allocation9], 0
    %21 = vsyncpa [#allocation8], 0
    loop: start=0, step=1, limit=5
    $region2: #{tpu_custom_call.1} parent=1 // loop_pre_header
      _
    $region3: #{tpu_custom_call.1} parent=1 // loop_header
      %s23 = sphi 0, %s27
      %p24 = scmp.ge.s32.totalorder %s23, 5
      %s31 = sphi 0, %s31
      %s33 = sphi 0, %s31
      %s34 = sphi 0, %s33
      %s48 = sphi 0, %s34
      %s52 = sphi 0, %s52
      %s54 = sphi 0, %s52
      %s55 = sphi 0, %s54
      %s69 = sphi 0, %s55
      %s73 = sphi 0, %s73
      %s75 = sphi 0, %s73
      %s76 = sphi 0, %s75
      %s90 = sphi 0, %s76
      %s94 = sphi 0, %s94
      %s96 = sphi 0, %s94
      %s97 = sphi 0, %s96
      %s111 = sphi 0, %s97
      %s115 = sphi 0, %s115
      %s117 = sphi 0, %s115
      %s118 = sphi 0, %s117
      %s132 = sphi 0, %s118
      %s138 = sphi 0, %s140
      %s141 = sphi 0, %s138
      %s142 = sphi 0, %s141
      %s158 = sphi 0, %s142
      %s164 = sphi 0, %s166
      %s167 = sphi 0, %s164
      %s168 = sphi 0, %s167
      %s184 = sphi 0, %s168
      %s190 = sphi 0, %s192
      %s193 = sphi 0, %s190
      %s194 = sphi 0, %s193
      %s210 = sphi 0, %s194
      %s216 = sphi 0, %s218
      %s219 = sphi 0, %s216
      %s220 = sphi 0, %s219
      %s236 = sphi 0, %s220
      %s242 = sphi 0, %s244
      %s245 = sphi 0, %s242
      %s246 = sphi 0, %s245
      %s262 = sphi 0, %s246
      %s268 = sphi 0, %s270
      %s271 = sphi 0, %s268
      %s272 = sphi 0, %s271
      %s288 = sphi 0, %s272
      %s294 = sphi 0, %s296
      %s297 = sphi 0, %s294
      %s298 = sphi 0, %s297
      %s314 = sphi 0, %s298
      %s320 = sphi 0, %s322
      %s323 = sphi 0, %s320
      %s324 = sphi 0, %s323
      %s340 = sphi 0, %s324
      %s344 = sphi 0, %s344
      %s346 = sphi 0, %s344
      %s347 = sphi 0, %s346
      %s361 = sphi 0, %s347
    $region4: #{tpu_custom_call.1} parent=1 // loop_header_branch
      %26 = sbr.rel (%p24) target = $region8
    $region5: #{tpu_custom_call.1} parent=1 // loop_body
      %s28 = ssub.s32 %s23, 1
      %s29 = ssub.s32 %s23, 2
      %s30 = sadd.s32 %s23, 1
      %s32 = sadd.s32 %s31, 1
      %p35 = scmp.eq.s32.totalorder %s23, 2
      %p36 = scmp.ne.s32.totalorder %s31, %s33
      %p37 = scmp.eq.s32.totalorder %s23, 0
      %p38 = por %p36, %p37
      %p39 = scmp.ne.s32.totalorder %s31, %s33
      %p40 = scmp.eq.s32.totalorder %s28, 2
      %p41 = por %p39, %p40
      %p42 = scmp.ne.s32.totalorder %s33, %s34
      %p43 = scmp.eq.s32.totalorder %s28, 0
      %p44 = por %p42, %p43
      %p45 = scmp.ne.s32.totalorder %s33, %s34
      %p46 = scmp.eq.s32.totalorder %s29, 2
      %p47 = por %p45, %p46
      %p49 = scmp.ne.s32.totalorder %s34, %s48
      %p50 = scmp.eq.s32.totalorder %s29, 0
      %p51 = por %p49, %p50
      %s53 = sadd.s32 %s52, 1
      %p56 = scmp.eq.s32.totalorder %s23, 2
      %p57 = scmp.ne.s32.totalorder %s52, %s54
      %p58 = scmp.eq.s32.totalorder %s23, 0
      %p59 = por %p57, %p58
      %p60 = scmp.ne.s32.totalorder %s52, %s54
      %p61 = scmp.eq.s32.totalorder %s28, 2
      %p62 = por %p60, %p61
      %p63 = scmp.ne.s32.totalorder %s54, %s55
      %p64 = scmp.eq.s32.totalorder %s28, 0
      %p65 = por %p63, %p64
      %p66 = scmp.ne.s32.totalorder %s54, %s55
      %p67 = scmp.eq.s32.totalorder %s29, 2
      %p68 = por %p66, %p67
      %p70 = scmp.ne.s32.totalorder %s55, %s69
      %p71 = scmp.eq.s32.totalorder %s29, 0
      %p72 = por %p70, %p71
      %s74 = sadd.s32 %s73, 1
      %p77 = scmp.eq.s32.totalorder %s23, 2
      %p78 = scmp.ne.s32.totalorder %s73, %s75
      %p79 = scmp.eq.s32.totalorder %s23, 0
      %p80 = por %p78, %p79
      %p81 = scmp.ne.s32.totalorder %s73, %s75
      %p82 = scmp.eq.s32.totalorder %s28, 2
      %p83 = por %p81, %p82
      %p84 = scmp.ne.s32.totalorder %s75, %s76
      %p85 = scmp.eq.s32.totalorder %s28, 0
      %p86 = por %p84, %p85
      %p87 = scmp.ne.s32.totalorder %s75, %s76
      %p88 = scmp.eq.s32.totalorder %s29, 2
      %p89 = por %p87, %p88
      %p91 = scmp.ne.s32.totalorder %s76, %s90
      %p92 = scmp.eq.s32.totalorder %s29, 0
      %p93 = por %p91, %p92
      %s95 = sadd.s32 %s94, 1
      %p98 = scmp.eq.s32.totalorder %s23, 2
      %p99 = scmp.ne.s32.totalorder %s94, %s96
      %p100 = scmp.eq.s32.totalorder %s23, 0
      %p101 = por %p99, %p100
      %p102 = scmp.ne.s32.totalorder %s94, %s96
      %p103 = scmp.eq.s32.totalorder %s28, 2
      %p104 = por %p102, %p103
      %p105 = scmp.ne.s32.totalorder %s96, %s97
      %p106 = scmp.eq.s32.totalorder %s28, 0
      %p107 = por %p105, %p106
      %p108 = scmp.ne.s32.totalorder %s96, %s97
      %p109 = scmp.eq.s32.totalorder %s29, 2
      %p110 = por %p108, %p109
      %p112 = scmp.ne.s32.totalorder %s97, %s111
      %p113 = scmp.eq.s32.totalorder %s29, 0
      %p114 = por %p112, %p113
      %s116 = sadd.s32 %s115, 1
      %p119 = scmp.eq.s32.totalorder %s23, 2
      %p120 = scmp.ne.s32.totalorder %s115, %s117
      %p121 = scmp.eq.s32.totalorder %s23, 0
      %p122 = por %p120, %p121
      %p123 = scmp.ne.s32.totalorder %s115, %s117
      %p124 = scmp.eq.s32.totalorder %s28, 2
      %p125 = por %p123, %p124
      %p126 = scmp.ne.s32.totalorder %s117, %s118
      %p127 = scmp.eq.s32.totalorder %s28, 0
      %p128 = por %p126, %p127
      %p129 = scmp.ne.s32.totalorder %s117, %s118
      %p130 = scmp.eq.s32.totalorder %s29, 2
      %p131 = por %p129, %p130
      %p133 = scmp.ne.s32.totalorder %s118, %s132
      %p134 = scmp.eq.s32.totalorder %s29, 0
      %p135 = por %p133, %p134
      %s136 = ssub.s32 %s23, %s30
      %p137 = scmp.eq.s32.totalorder %s136, 0
      %s139 = sadd.s32 %s138, 1
      %s140 = scalar_select %p137, %s138, %s139
      %p143 = pneg %p137
      %p144 = scmp.eq.s32.totalorder %s23, 2
      %p145 = por %p143, %p144
      %p146 = scmp.ne.s32.totalorder %s138, %s141
      %p147 = scmp.eq.s32.totalorder %s23, 0
      %p148 = por %p146, %p147
      %p149 = scmp.ne.s32.totalorder %s138, %s141
      %p150 = scmp.eq.s32.totalorder %s28, 2
      %p151 = por %p149, %p150
      %p152 = scmp.ne.s32.totalorder %s141, %s142
      %p153 = scmp.eq.s32.totalorder %s28, 0
      %p154 = por %p152, %p153
      %p155 = scmp.ne.s32.totalorder %s141, %s142
      %p156 = scmp.eq.s32.totalorder %s29, 2
      %p157 = por %p155, %p156
      %p159 = scmp.ne.s32.totalorder %s142, %s158
      %p160 = scmp.eq.s32.totalorder %s29, 0
      %p161 = por %p159, %p160
      %s162 = ssub.s32 %s23, %s30
      %p163 = scmp.eq.s32.totalorder %s162, 0
      %s165 = sadd.s32 %s164, 1
      %s166 = scalar_select %p163, %s164, %s165
      %p169 = pneg %p163
      %p170 = scmp.eq.s32.totalorder %s23, 2
      %p171 = por %p169, %p170
      %p172 = scmp.ne.s32.totalorder %s164, %s167
      %p173 = scmp.eq.s32.totalorder %s23, 0
      %p174 = por %p172, %p173
      %p175 = scmp.ne.s32.totalorder %s164, %s167
      %p176 = scmp.eq.s32.totalorder %s28, 2
      %p177 = por %p175, %p176
      %p178 = scmp.ne.s32.totalorder %s167, %s168
      %p179 = scmp.eq.s32.totalorder %s28, 0
      %p180 = por %p178, %p179
      %p181 = scmp.ne.s32.totalorder %s167, %s168
      %p182 = scmp.eq.s32.totalorder %s29, 2
      %p183 = por %p181, %p182
      %p185 = scmp.ne.s32.totalorder %s168, %s184
      %p186 = scmp.eq.s32.totalorder %s29, 0
      %p187 = por %p185, %p186
      %s188 = ssub.s32 %s23, %s30
      %p189 = scmp.eq.s32.totalorder %s188, 0
      %s191 = sadd.s32 %s190, 1
      %s192 = scalar_select %p189, %s190, %s191
      %p195 = pneg %p189
      %p196 = scmp.eq.s32.totalorder %s23, 2
      %p197 = por %p195, %p196
      %p198 = scmp.ne.s32.totalorder %s190, %s193
      %p199 = scmp.eq.s32.totalorder %s23, 0
      %p200 = por %p198, %p199
      %p201 = scmp.ne.s32.totalorder %s190, %s193
      %p202 = scmp.eq.s32.totalorder %s28, 2
      %p203 = por %p201, %p202
      %p204 = scmp.ne.s32.totalorder %s193, %s194
      %p205 = scmp.eq.s32.totalorder %s28, 0
      %p206 = por %p204, %p205
      %p207 = scmp.ne.s32.totalorder %s193, %s194
      %p208 = scmp.eq.s32.totalorder %s29, 2
      %p209 = por %p207, %p208
      %p211 = scmp.ne.s32.totalorder %s194, %s210
      %p212 = scmp.eq.s32.totalorder %s29, 0
      %p213 = por %p211, %p212
      %s214 = ssub.s32 %s23, %s30
      %p215 = scmp.eq.s32.totalorder %s214, 0
      %s217 = sadd.s32 %s216, 1
      %s218 = scalar_select %p215, %s216, %s217
      %p221 = pneg %p215
      %p222 = scmp.eq.s32.totalorder %s23, 2
      %p223 = por %p221, %p222
      %p224 = scmp.ne.s32.totalorder %s216, %s219
      %p225 = scmp.eq.s32.totalorder %s23, 0
      %p226 = por %p224, %p225
      %p227 = scmp.ne.s32.totalorder %s216, %s219
      %p228 = scmp.eq.s32.totalorder %s28, 2
      %p229 = por %p227, %p228
      %p230 = scmp.ne.s32.totalorder %s219, %s220
      %p231 = scmp.eq.s32.totalorder %s28, 0
      %p232 = por %p230, %p231
      %p233 = scmp.ne.s32.totalorder %s219, %s220
      %p234 = scmp.eq.s32.totalorder %s29, 2
      %p235 = por %p233, %p234
      %p237 = scmp.ne.s32.totalorder %s220, %s236
      %p238 = scmp.eq.s32.totalorder %s29, 0
      %p239 = por %p237, %p238
      %s240 = ssub.s32 %s23, %s30
      %p241 = scmp.eq.s32.totalorder %s240, 0
      %s243 = sadd.s32 %s242, 1
      %s244 = scalar_select %p241, %s242, %s243
      %p247 = pneg %p241
      %p248 = scmp.eq.s32.totalorder %s23, 2
      %p249 = por %p247, %p248
      %p250 = scmp.ne.s32.totalorder %s242, %s245
      %p251 = scmp.eq.s32.totalorder %s23, 0
      %p252 = por %p250, %p251
      %p253 = scmp.ne.s32.totalorder %s242, %s245
      %p254 = scmp.eq.s32.totalorder %s28, 2
      %p255 = por %p253, %p254
      %p256 = scmp.ne.s32.totalorder %s245, %s246
      %p257 = scmp.eq.s32.totalorder %s28, 0
      %p258 = por %p256, %p257
      %p259 = scmp.ne.s32.totalorder %s245, %s246
      %p260 = scmp.eq.s32.totalorder %s29, 2
      %p261 = por %p259, %p260
      %p263 = scmp.ne.s32.totalorder %s246, %s262
      %p264 = scmp.eq.s32.totalorder %s29, 0
      %p265 = por %p263, %p264
      %s266 = ssub.s32 %s23, %s30
      %p267 = scmp.eq.s32.totalorder %s266, 0
      %s269 = sadd.s32 %s268, 1
      %s270 = scalar_select %p267, %s268, %s269
      %p273 = pneg %p267
      %p274 = scmp.eq.s32.totalorder %s23, 2
      %p275 = por %p273, %p274
      %p276 = scmp.ne.s32.totalorder %s268, %s271
      %p277 = scmp.eq.s32.totalorder %s23, 0
      %p278 = por %p276, %p277
      %p279 = scmp.ne.s32.totalorder %s268, %s271
      %p280 = scmp.eq.s32.totalorder %s28, 2
      %p281 = por %p279, %p280
      %p282 = scmp.ne.s32.totalorder %s271, %s272
      %p283 = scmp.eq.s32.totalorder %s28, 0
      %p284 = por %p282, %p283
      %p285 = scmp.ne.s32.totalorder %s271, %s272
      %p286 = scmp.eq.s32.totalorder %s29, 2
      %p287 = por %p285, %p286
      %p289 = scmp.ne.s32.totalorder %s272, %s288
      %p290 = scmp.eq.s32.totalorder %s29, 0
      %p291 = por %p289, %p290
      %s292 = ssub.s32 %s23, %s30
      %p293 = scmp.eq.s32.totalorder %s292, 0
      %s295 = sadd.s32 %s294, 1
      %s296 = scalar_select %p293, %s294, %s295
      %p299 = pneg %p293
      %p300 = scmp.eq.s32.totalorder %s23, 2
      %p301 = por %p299, %p300
      %p302 = scmp.ne.s32.totalorder %s294, %s297
      %p303 = scmp.eq.s32.totalorder %s23, 0
      %p304 = por %p302, %p303
      %p305 = scmp.ne.s32.totalorder %s294, %s297
      %p306 = scmp.eq.s32.totalorder %s28, 2
      %p307 = por %p305, %p306
      %p308 = scmp.ne.s32.totalorder %s297, %s298
      %p309 = scmp.eq.s32.totalorder %s28, 0
      %p310 = por %p308, %p309
      %p311 = scmp.ne.s32.totalorder %s297, %s298
      %p312 = scmp.eq.s32.totalorder %s29, 2
      %p313 = por %p311, %p312
      %p315 = scmp.ne.s32.totalorder %s298, %s314
      %p316 = scmp.eq.s32.totalorder %s29, 0
      %p317 = por %p315, %p316
      %s318 = ssub.s32 %s23, %s30
      %p319 = scmp.eq.s32.totalorder %s318, 0
      %s321 = sadd.s32 %s320, 1
      %s322 = scalar_select %p319, %s320, %s321
      %p325 = pneg %p319
      %p326 = scmp.eq.s32.totalorder %s23, 2
      %p327 = por %p325, %p326
      %p328 = scmp.ne.s32.totalorder %s320, %s323
      %p329 = scmp.eq.s32.totalorder %s23, 0
      %p330 = por %p328, %p329
      %p331 = scmp.ne.s32.totalorder %s320, %s323
      %p332 = scmp.eq.s32.totalorder %s28, 2
      %p333 = por %p331, %p332
      %p334 = scmp.ne.s32.totalorder %s323, %s324
      %p335 = scmp.eq.s32.totalorder %s28, 0
      %p336 = por %p334, %p335
      %p337 = scmp.ne.s32.totalorder %s323, %s324
      %p338 = scmp.eq.s32.totalorder %s29, 2
      %p339 = por %p337, %p338
      %p341 = scmp.ne.s32.totalorder %s324, %s340
      %p342 = scmp.eq.s32.totalorder %s29, 0
      %p343 = por %p341, %p342
      %s345 = sadd.s32 %s344, 1
      %p348 = scmp.eq.s32.totalorder %s23, 2
      %p349 = scmp.ne.s32.totalorder %s344, %s346
      %p350 = scmp.eq.s32.totalorder %s23, 0
      %p351 = por %p349, %p350
      %p352 = scmp.ne.s32.totalorder %s344, %s346
      %p353 = scmp.eq.s32.totalorder %s28, 2
      %p354 = por %p352, %p353
      %p355 = scmp.ne.s32.totalorder %s346, %s347
      %p356 = scmp.eq.s32.totalorder %s28, 0
      %p357 = por %p355, %p356
      %p358 = scmp.ne.s32.totalorder %s346, %s347
      %p359 = scmp.eq.s32.totalorder %s29, 2
      %p360 = por %p358, %p359
      %p362 = scmp.ne.s32.totalorder %s347, %s361
      %p363 = scmp.eq.s32.totalorder %s29, 0
      %p364 = por %p362, %p363
      %p365 = scmp.le.s32.totalorder 1, %s23
      %p366 = scmp.lt.s32.totalorder %s23, 4
      %p367 = pnand %p365, %p366
      %p368 = pneg %p367
      // Predicated region
      $region9: #{tpu_custom_call.1} parent=5 // pred_check
        _
      $region10: #{tpu_custom_call.1} parent=5 // pred_check_branch
        %370 = sbr.rel (%p367) target = $region12
      $region11: #{tpu_custom_call.1} parent=5 // pred_region
        %s371 = ssub.s32 %s23, 1
        // Predicated region
        $region13: #{tpu_custom_call.1} parent=11 // pred_check
          %p372 = pneg %p44
        $region14: #{tpu_custom_call.1} parent=11 // pred_check_branch
          %374 = sbr.rel (%p372) target = $region16
        $region15: #{tpu_custom_call.1} parent=11 // pred_region
          _
        $region16: #{tpu_custom_call.1} parent=11 // pred_fallthru
          _
        // Predicated region
        $region17: #{tpu_custom_call.1} parent=11 // pred_check
          %p375 = pneg %p65
        $region18: #{tpu_custom_call.1} parent=11 // pred_check_branch
          %377 = sbr.rel (%p375) target = $region20
        $region19: #{tpu_custom_call.1} parent=11 // pred_region
          %s379 = ssub.s32 32, 32
          %380 = vsyncadd [#allocation7], %s379
          %s382 = sshll.u32 [#allocation6], 4
          %s383 = int_to_ptr.vmem [resolvable:$true] %s382
          %385 = dma.hbm_to_vmem [thread:$0]  %s1, 32, %s383, [#allocation7]
        $region20: #{tpu_custom_call.1} parent=11 // pred_fallthru
          _
        // Predicated region
        $region21: #{tpu_custom_call.1} parent=11 // pred_check
          %p386 = pneg %p86
        $region22: #{tpu_custom_call.1} parent=11 // pred_check_branch
          %388 = sbr.rel (%p386) target = $region24
        $region23: #{tpu_custom_call.1} parent=11 // pred_region
          %s390 = ssub.s32 1024, 1024
          %391 = vsyncadd [#allocation11], %s390
          %s392 = sshll.u32 [#allocation10], 4
          %s393 = int_to_ptr.vmem [resolvable:$true] %s392
          %398 = dma.hbm_to_vmem [thread:$0]  %s2, 1024, %s393, [#allocation11], 128, 128, 8
        $region24: #{tpu_custom_call.1} parent=11 // pred_fallthru
          _
        // Predicated region
        $region25: #{tpu_custom_call.1} parent=11 // pred_check
          %p399 = pneg %p107
        $region26: #{tpu_custom_call.1} parent=11 // pred_check_branch
          %401 = sbr.rel (%p399) target = $region28
        $region27: #{tpu_custom_call.1} parent=11 // pred_region
          _
        $region28: #{tpu_custom_call.1} parent=11 // pred_fallthru
          _
        // Predicated region
        $region29: #{tpu_custom_call.1} parent=11 // pred_check
          %p402 = pneg %p128
        $region30: #{tpu_custom_call.1} parent=11 // pred_check_branch
          %404 = sbr.rel (%p402) target = $region32
        $region31: #{tpu_custom_call.1} parent=11 // pred_region
          %s406 = ssub.s32 64, 64
          %407 = vsyncadd [#allocation9], %s406
          %s409 = sshll.u32 %s4, 4
          %s410 = int_to_ptr.vmem [resolvable:$true] %s409
          %412 = dma.vmem_to_smem %s410, 64, [#allocation12], [#allocation9]
        $region32: #{tpu_custom_call.1} parent=11 // pred_fallthru
          _
      $region12: #{tpu_custom_call.1} parent=5 // pred_fallthru
        _
      %p413 = scmp.lt.s32.totalorder %s23, 3
      // Predicated region
      $region33: #{tpu_custom_call.1} parent=5 // pred_check
        %p414 = pneg %p413
      $region34: #{tpu_custom_call.1} parent=5 // pred_check_branch
        %416 = sbr.rel (%p414) target = $region36
      $region35: #{tpu_custom_call.1} parent=5 // pred_region
        // Predicated region
        $region37: #{tpu_custom_call.1} parent=35 // pred_check
          %p417 = pneg %p148
        $region38: #{tpu_custom_call.1} parent=35 // pred_check_branch
          %419 = sbr.rel (%p417) target = $region40
        $region39: #{tpu_custom_call.1} parent=35 // pred_region
          %p420 = scmp.lt.s32.totalorder %s23, 2
          %s421 = scalar_select %p420, %s23, 2
          %s422 = scalar_lea.vmem %s5, %s421
        $region40: #{tpu_custom_call.1} parent=35 // pred_fallthru
          _
        // Predicated region
        $region41: #{tpu_custom_call.1} parent=35 // pred_check
          %p423 = pneg %p174
        $region42: #{tpu_custom_call.1} parent=35 // pred_check_branch
          %425 = sbr.rel (%p423) target = $region44
        $region43: #{tpu_custom_call.1} parent=35 // pred_region
          %p426 = scmp.lt.s32.totalorder %s23, 2
          %s427 = scalar_select %p426, %s23, 2
          %s428 = scalar_lea.vmem %s6, %s427
        $region44: #{tpu_custom_call.1} parent=35 // pred_fallthru
          _
        // Predicated region
        $region45: #{tpu_custom_call.1} parent=35 // pred_check
          %p429 = pneg %p200
        $region46: #{tpu_custom_call.1} parent=35 // pred_check_branch
          %431 = sbr.rel (%p429) target = $region48
        $region47: #{tpu_custom_call.1} parent=35 // pred_region
          %s432 = sand.u32 %s23, 1
          %s433 = scalar_lea.sflag [#allocation7], %s432
          %s434 = sand.u32 %s190, 1
          %s435 = smul.addr %s434, 128
          %s436 = scalar_lea.vmem [#allocation13], %s435
          %s438 = ssub.s32 2048, 2048
          %439 = vsyncadd %s433, %s438
          %s440 = smul.addr %s23, 32
          %s441 = smul.addr %s440, 64
          %s442 = scalar_lea.hbm %s7, %s441
          %s443 = sshll.u32 %s436, 4
          %s444 = int_to_ptr.vmem [resolvable:$true] %s443
          %449 = dma.hbm_to_vmem [thread:$0]  %s442, 2048, %s444, %s433, 128, 128, 8
        $region48: #{tpu_custom_call.1} parent=35 // pred_fallthru
          _
        // Predicated region
        $region49: #{tpu_custom_call.1} parent=35 // pred_check
          %p450 = pneg %p226
        $region50: #{tpu_custom_call.1} parent=35 // pred_check_branch
          %452 = sbr.rel (%p450) target = $region52
        $region51: #{tpu_custom_call.1} parent=35 // pred_region
          %p453 = scmp.lt.s32.totalorder %s23, 2
          %s454 = scalar_select %p453, %s23, 2
          %s455 = smul.addr %s454, 2
          %s456 = scalar_lea.vmem %s8, %s455
        $region52: #{tpu_custom_call.1} parent=35 // pred_fallthru
          _
        // Predicated region
        $region53: #{tpu_custom_call.1} parent=35 // pred_check
          %p457 = pneg %p252
        $region54: #{tpu_custom_call.1} parent=35 // pred_check_branch
          %459 = sbr.rel (%p457) target = $region56
        $region55: #{tpu_custom_call.1} parent=35 // pred_region
          %p460 = scmp.lt.s32.totalorder %s23, 2
          %s461 = scalar_select %p460, %s23, 2
          %s462 = smul.addr %s461, 2
          %s463 = scalar_lea.vmem %s9, %s462
        $region56: #{tpu_custom_call.1} parent=35 // pred_fallthru
          _
        // Predicated region
        $region57: #{tpu_custom_call.1} parent=35 // pred_check
          %p464 = pneg %p278
        $region58: #{tpu_custom_call.1} parent=35 // pred_check_branch
          %466 = sbr.rel (%p464) target = $region60
        $region59: #{tpu_custom_call.1} parent=35 // pred_region
          %p467 = scmp.lt.s32.totalorder %s23, 2
          %s468 = scalar_select %p467, %s23, 2
          %s469 = smul.addr %s468, 2
          %s470 = scalar_lea.vmem %s10, %s469
        $region60: #{tpu_custom_call.1} parent=35 // pred_fallthru
          _
        // Predicated region
        $region61: #{tpu_custom_call.1} parent=35 // pred_check
          %p471 = pneg %p304
        $region62: #{tpu_custom_call.1} parent=35 // pred_check_branch
          %473 = sbr.rel (%p471) target = $region64
        $region63: #{tpu_custom_call.1} parent=35 // pred_region
          %s474 = sand.u32 %s23, 1
          %s475 = scalar_lea.sflag [#allocation7], %s474
          %s476 = sand.u32 %s294, 1
          %s477 = smul.addr %s476, 128
          %s478 = scalar_lea.vmem [#allocation14], %s477
          %s480 = ssub.s32 2048, 2048
          %481 = vsyncadd %s475, %s480
          %s482 = smul.addr %s23, 32
          %s483 = smul.addr %s482, 64
          %s484 = scalar_lea.hbm %s11, %s483
          %s485 = sshll.u32 %s478, 4
          %s486 = int_to_ptr.vmem [resolvable:$true] %s485
          %491 = dma.hbm_to_vmem [thread:$0]  %s484, 2048, %s486, %s475, 64, 64, 4
        $region64: #{tpu_custom_call.1} parent=35 // pred_fallthru
          _
        // Predicated region
        $region65: #{tpu_custom_call.1} parent=35 // pred_check
          %p492 = pneg %p330
        $region66: #{tpu_custom_call.1} parent=35 // pred_check_branch
          %494 = sbr.rel (%p492) target = $region68
        $region67: #{tpu_custom_call.1} parent=35 // pred_region
          %p495 = scmp.lt.s32.totalorder %s23, 2
          %s496 = scalar_select %p495, %s23, 2
          %s497 = scalar_lea.vmem %s12, %s496
        $region68: #{tpu_custom_call.1} parent=35 // pred_fallthru
          _
      $region36: #{tpu_custom_call.1} parent=5 // pred_fallthru
        _
      %p498 = scmp.le.s32.totalorder 1, %s23
      %p499 = scmp.lt.s32.totalorder %s23, 4
      %p500 = pnand %p498, %p499
      %p501 = pneg %p500
      // Predicated region
      $region69: #{tpu_custom_call.1} parent=5 // pred_check
        _
      $region70: #{tpu_custom_call.1} parent=5 // pred_check_branch
        %503 = sbr.rel (%p500) target = $region72
      $region71: #{tpu_custom_call.1} parent=5 // pred_region
        %s504 = ssub.s32 %s23, 1
        // Predicated region
        $region73: #{tpu_custom_call.1} parent=71 // pred_check
          %p505 = pneg %p65
        $region74: #{tpu_custom_call.1} parent=71 // pred_check_branch
          %507 = sbr.rel (%p505) target = $region76
        $region75: #{tpu_custom_call.1} parent=71 // pred_region
          %508 = dma.done [#allocation7], 32
        $region76: #{tpu_custom_call.1} parent=71 // pred_fallthru
          _
        // Predicated region
        $region77: #{tpu_custom_call.1} parent=71 // pred_check
          %p509 = pneg %p86
        $region78: #{tpu_custom_call.1} parent=71 // pred_check_branch
          %511 = sbr.rel (%p509) target = $region80
        $region79: #{tpu_custom_call.1} parent=71 // pred_region
          %512 = dma.done [#allocation11], 1024
        $region80: #{tpu_custom_call.1} parent=71 // pred_fallthru
          _
        // Predicated region
        $region81: #{tpu_custom_call.1} parent=71 // pred_check
          %p513 = pneg %p128
        $region82: #{tpu_custom_call.1} parent=71 // pred_check_branch
          %515 = sbr.rel (%p513) target = $region84
        $region83: #{tpu_custom_call.1} parent=71 // pred_region
          %516 = dma.done [#allocation9], 64
        $region84: #{tpu_custom_call.1} parent=71 // pred_fallthru
          _
        %s517 = sand.u32 %s28, 1
        %s518 = scalar_lea.sflag [#allocation7], %s517
        %s519 = sand.u32 %s193, 1
        %s520 = smul.addr %s519, 128
        %s521 = scalar_lea.vmem [#allocation13], %s520
        // Predicated region
        $region85: #{tpu_custom_call.1} parent=71 // pred_check
          %p522 = pneg %p206
        $region86: #{tpu_custom_call.1} parent=71 // pred_check_branch
          %524 = sbr.rel (%p522) target = $region88
        $region87: #{tpu_custom_call.1} parent=71 // pred_region
          %525 = dma.done %s518, 2048
        $region88: #{tpu_custom_call.1} parent=71 // pred_fallthru
          _
        %s526 = sand.u32 %s28, 1
        %s527 = scalar_lea.sflag [#allocation7], %s526
        %s528 = sand.u32 %s297, 1
        %s529 = smul.addr %s528, 128
        %s530 = scalar_lea.vmem [#allocation14], %s529
        // Predicated region
        $region89: #{tpu_custom_call.1} parent=71 // pred_check
          %p531 = pneg %p310
        $region90: #{tpu_custom_call.1} parent=71 // pred_check_branch
          %533 = sbr.rel (%p531) target = $region92
        $region91: #{tpu_custom_call.1} parent=71 // pred_region
          %534 = dma.done %s527, 2048
        $region92: #{tpu_custom_call.1} parent=71 // pred_fallthru
          _
        %535 = sfence
        %p536 = pneg %p44
        %p537 = pneg %p41
        %p538 = pneg %p65
        %p539 = pneg %p62
        %p540 = pneg %p86
        %p541 = pneg %p83
        %p542 = pneg %p107
        %p543 = pneg %p104
        %p544 = pneg %p128
        %p545 = pneg %p125
        %p546 = scmp.lt.s32.totalorder %s28, 2
        %s547 = scalar_select %p546, %s28, 2
        %s548 = scalar_lea.vmem %s5, %s547
        %p549 = pneg %p154
        %p550 = pneg %p151
        %p551 = scmp.lt.s32.totalorder %s28, 2
        %s552 = scalar_select %p551, %s28, 2
        %s553 = scalar_lea.vmem %s6, %s552
        %p554 = pneg %p180
        %p555 = pneg %p177
        %s556 = sand.u32 %s28, 1
        %s557 = scalar_lea.sflag [#allocation7], %s556
        %s558 = sand.u32 %s193, 1
        %s559 = smul.addr %s558, 128
        %s560 = scalar_lea.vmem [#allocation13], %s559
        %p561 = pneg %p206
        %p562 = pneg %p203
        %p563 = scmp.lt.s32.totalorder %s28, 2
        %s564 = scalar_select %p563, %s28, 2
        %s565 = smul.addr %s564, 2
        %s566 = scalar_lea.vmem %s8, %s565
        %p567 = pneg %p232
        %p568 = pneg %p229
        %p569 = scmp.lt.s32.totalorder %s28, 2
        %s570 = scalar_select %p569, %s28, 2
        %s571 = smul.addr %s570, 2
        %s572 = scalar_lea.vmem %s9, %s571
        %p573 = pneg %p258
        %p574 = pneg %p255
        %p575 = scmp.lt.s32.totalorder %s28, 2
        %s576 = scalar_select %p575, %s28, 2
        %s577 = smul.addr %s576, 2
        %s578 = scalar_lea.vmem %s10, %s577
        %p579 = pneg %p284
        %p580 = pneg %p281
        %s581 = sand.u32 %s28, 1
        %s582 = scalar_lea.sflag [#allocation7], %s581
        %s583 = sand.u32 %s297, 1
        %s584 = smul.addr %s583, 128
        %s585 = scalar_lea.vmem [#allocation14], %s584
        %p586 = pneg %p310
        %p587 = pneg %p307
        %p588 = scmp.lt.s32.totalorder %s28, 2
        %s589 = scalar_select %p588, %s28, 2
        %s590 = scalar_lea.vmem %s12, %s589
        %p591 = pneg %p336
        %p592 = pneg %p333
        %p593 = pneg %p357
        %p594 = pneg %p354
        %p595 = scmp.lt.s32.totalorder %s28, 2
        %s596 = scalar_select %p595, %s28, 2
        %s597 = scalar_lea.vmem %s5, %s596
        %p598 = scmp.lt.s32.totalorder %s28, 2
        %s599 = scalar_select %p598, %s28, 2
        %s600 = scalar_lea.vmem %s6, %s599
        %p601 = scmp.lt.s32.totalorder %s28, 2
        %s602 = scalar_select %p601, %s28, 2
        %s603 = smul.addr %s602, 2
        %s604 = scalar_lea.vmem %s8, %s603
        %p605 = scmp.lt.s32.totalorder %s28, 2
        %s606 = scalar_select %p605, %s28, 2
        %s607 = smul.addr %s606, 2
        %s608 = scalar_lea.vmem %s9, %s607
        %p609 = scmp.lt.s32.totalorder %s28, 2
        %s610 = scalar_select %p609, %s28, 2
        %s611 = smul.addr %s610, 2
        %s612 = scalar_lea.vmem %s10, %s611
        %p613 = scmp.lt.s32.totalorder %s28, 2
        %s614 = scalar_select %p613, %s28, 2
        %s615 = scalar_lea.vmem %s12, %s614
        %p617 = scmp.eq.s32.totalorder %s28, 0
        // Predicated region
        $region93: #{tpu_custom_call.1} parent=71 // pred_check
          %p618 = pneg %p617
        $region94: #{tpu_custom_call.1} parent=71 // pred_check_branch
          %620 = sbr.rel (%p618) target = $region96
        $region95: #{tpu_custom_call.1} parent=71 // pred_region
          %v621 = vld [vmem:[#allocation10] sm:$0xff]
          %v622 = vld [vmem:[#allocation10 + $0x8] sm:$0xff]
          %v623 = vld [vmem:[#allocation10 + $0x10] sm:$0xff]
          %v624 = vld [vmem:[#allocation10 + $0x18] sm:$0xff]
          %v625 = vld [vmem:[#allocation10 + $0x20] sm:$0xff]
          %v626 = vld [vmem:[#allocation10 + $0x28] sm:$0xff]
          %v627 = vld [vmem:[#allocation10 + $0x30] sm:$0xff]
          %v628 = vld [vmem:[#allocation10 + $0x38] sm:$0xff]
          %629 = vst [vmem:[#allocation2] sm:$0xff] %v621
          %630 = vst [vmem:[#allocation2 + $0x8] sm:$0xff] %v622
          %631 = vst [vmem:[#allocation2 + $0x10] sm:$0xff] %v623
          %632 = vst [vmem:[#allocation2 + $0x18] sm:$0xff] %v624
          %633 = vst [vmem:[#allocation2 + $0x20] sm:$0xff] %v625
          %634 = vst [vmem:[#allocation2 + $0x28] sm:$0xff] %v626
          %635 = vst [vmem:[#allocation2 + $0x30] sm:$0xff] %v627
          %636 = vst [vmem:[#allocation2 + $0x38] sm:$0xff] %v628
          %v637 = vld [vmem:[#allocation10] sm:$0xff]
          %v638 = vld [vmem:[#allocation10 + $0x8] sm:$0xff]
          %v639 = vld [vmem:[#allocation10 + $0x10] sm:$0xff]
          %v640 = vld [vmem:[#allocation10 + $0x18] sm:$0xff]
          %v641 = vld [vmem:[#allocation10 + $0x20] sm:$0xff]
          %v642 = vld [vmem:[#allocation10 + $0x28] sm:$0xff]
          %v643 = vld [vmem:[#allocation10 + $0x30] sm:$0xff]
          %v644 = vld [vmem:[#allocation10 + $0x38] sm:$0xff]
          %645 = vst [vmem:[#allocation3] sm:$0xff] %v637
          %646 = vst [vmem:[#allocation3 + $0x8] sm:$0xff] %v638
          %647 = vst [vmem:[#allocation3 + $0x10] sm:$0xff] %v639
          %648 = vst [vmem:[#allocation3 + $0x18] sm:$0xff] %v640
          %649 = vst [vmem:[#allocation3 + $0x20] sm:$0xff] %v641
          %650 = vst [vmem:[#allocation3 + $0x28] sm:$0xff] %v642
          %651 = vst [vmem:[#allocation3 + $0x30] sm:$0xff] %v643
          %652 = vst [vmem:[#allocation3 + $0x38] sm:$0xff] %v644
          %v653 = vlaneseq
          %v654 = vand.u32 %v653, 127
          %v655 = vld [vmem:[%s0] sm:$0xff]
          %v656 = vld [vmem:[%s0 + $0x8] sm:$0xff]
          %v657 = vld [vmem:[%s0 + $0x10] sm:$0xff]
          %v658 = vld [vmem:[%s0 + $0x18] sm:$0xff]
          %v659 = vld [vmem:[%s0 + $0x20] sm:$0xff]
          %v660 = vld [vmem:[%s0 + $0x28] sm:$0xff]
          %v661 = vld [vmem:[%s0 + $0x30] sm:$0xff]
          %v662 = vld [vmem:[%s0 + $0x38] sm:$0xff]
          %v663 = vld [vmem:[%s0 + $0x40] sm:$0xff]
          %v664 = vld [vmem:[%s0 + $0x48] sm:$0xff]
          %v665 = vld [vmem:[%s0 + $0x50] sm:$0xff]
          %v666 = vld [vmem:[%s0 + $0x58] sm:$0xff]
          %v667 = vld [vmem:[%s0 + $0x60] sm:$0xff]
          %v668 = vld [vmem:[%s0 + $0x68] sm:$0xff]
          %v669 = vld [vmem:[%s0 + $0x70] sm:$0xff]
          %v670 = vld [vmem:[%s0 + $0x78] sm:$0xff]
          %v671 = vld [vmem:[%s0 + $0x80] sm:$0xff]
          %v672 = vld [vmem:[%s0 + $0x88] sm:$0xff]
          %v673 = vld [vmem:[%s0 + $0x90] sm:$0xff]
          %v674 = vld [vmem:[%s0 + $0x98] sm:$0xff]
          %v675 = vld [vmem:[%s0 + $0xa0] sm:$0xff]
          %v676 = vld [vmem:[%s0 + $0xa8] sm:$0xff]
          %v677 = vld [vmem:[%s0 + $0xb0] sm:$0xff]
          %v678 = vld [vmem:[%s0 + $0xb8] sm:$0xff]
          %v679 = vld [vmem:[%s0 + $0xc0] sm:$0xff]
          %v680 = vld [vmem:[%s0 + $0xc8] sm:$0xff]
          %v681 = vld [vmem:[%s0 + $0xd0] sm:$0xff]
          %v682 = vld [vmem:[%s0 + $0xd8] sm:$0xff]
          %v683 = vld [vmem:[%s0 + $0xe0] sm:$0xff]
          %v684 = vld [vmem:[%s0 + $0xe8] sm:$0xff]
          %v685 = vld [vmem:[%s0 + $0xf0] sm:$0xff]
          %v686 = vld [vmem:[%s0 + $0xf8] sm:$0xff]
          %687 = vset.pattern.permute.xlu0 0
          %688 = vperm.xlu0 %687, %v655
          %v689 = vpop.permute.xlu0 %688
          %690 = vset.pattern.permute.xlu0 0
          %691 = vperm.xlu0 %690, %v656
          %v692 = vpop.permute.xlu0 %691
          %693 = vset.pattern.permute.xlu0 0
          %694 = vperm.xlu0 %693, %v657
          %v695 = vpop.permute.xlu0 %694
          %696 = vset.pattern.permute.xlu0 0
          %697 = vperm.xlu0 %696, %v658
          %v698 = vpop.permute.xlu0 %697
          %699 = vset.pattern.permute.xlu0 0
          %700 = vperm.xlu0 %699, %v659
          %v701 = vpop.permute.xlu0 %700
          %702 = vset.pattern.permute.xlu0 0
          %703 = vperm.xlu0 %702, %v660
          %v704 = vpop.permute.xlu0 %703
          %705 = vset.pattern.permute.xlu0 0
          %706 = vperm.xlu0 %705, %v661
          %v707 = vpop.permute.xlu0 %706
          %708 = vset.pattern.permute.xlu0 0
          %709 = vperm.xlu0 %708, %v662
          %v710 = vpop.permute.xlu0 %709
          %711 = vset.pattern.permute.xlu0 0
          %712 = vperm.xlu0 %711, %v663
          %v713 = vpop.permute.xlu0 %712
          %714 = vset.pattern.permute.xlu0 0
          %715 = vperm.xlu0 %714, %v664
          %v716 = vpop.permute.xlu0 %715
          %717 = vset.pattern.permute.xlu0 0
          %718 = vperm.xlu0 %717, %v665
          %v719 = vpop.permute.xlu0 %718
          %720 = vset.pattern.permute.xlu0 0
          %721 = vperm.xlu0 %720, %v666
          %v722 = vpop.permute.xlu0 %721
          %723 = vset.pattern.permute.xlu0 0
          %724 = vperm.xlu0 %723, %v667
          %v725 = vpop.permute.xlu0 %724
          %726 = vset.pattern.permute.xlu0 0
          %727 = vperm.xlu0 %726, %v668
          %v728 = vpop.permute.xlu0 %727
          %729 = vset.pattern.permute.xlu0 0
          %730 = vperm.xlu0 %729, %v669
          %v731 = vpop.permute.xlu0 %730
          %732 = vset.pattern.permute.xlu0 0
          %733 = vperm.xlu0 %732, %v670
          %v734 = vpop.permute.xlu0 %733
          %735 = vset.pattern.permute.xlu0 0
          %736 = vperm.xlu0 %735, %v671
          %v737 = vpop.permute.xlu0 %736
          %738 = vset.pattern.permute.xlu0 0
          %739 = vperm.xlu0 %738, %v672
          %v740 = vpop.permute.xlu0 %739
          %741 = vset.pattern.permute.xlu0 0
          %742 = vperm.xlu0 %741, %v673
          %v743 = vpop.permute.xlu0 %742
          %744 = vset.pattern.permute.xlu0 0
          %745 = vperm.xlu0 %744, %v674
          %v746 = vpop.permute.xlu0 %745
          %747 = vset.pattern.permute.xlu0 0
          %748 = vperm.xlu0 %747, %v675
          %v749 = vpop.permute.xlu0 %748
          %750 = vset.pattern.permute.xlu0 0
          %751 = vperm.xlu0 %750, %v676
          %v752 = vpop.permute.xlu0 %751
          %753 = vset.pattern.permute.xlu0 0
          %754 = vperm.xlu0 %753, %v677
          %v755 = vpop.permute.xlu0 %754
          %756 = vset.pattern.permute.xlu0 0
          %757 = vperm.xlu0 %756, %v678
          %v758 = vpop.permute.xlu0 %757
          %759 = vset.pattern.permute.xlu0 0
          %760 = vperm.xlu0 %759, %v679
          %v761 = vpop.permute.xlu0 %760
          %762 = vset.pattern.permute.xlu0 0
          %763 = vperm.xlu0 %762, %v680
          %v764 = vpop.permute.xlu0 %763
          %765 = vset.pattern.permute.xlu0 0
          %766 = vperm.xlu0 %765, %v681
          %v767 = vpop.permute.xlu0 %766
          %768 = vset.pattern.permute.xlu0 0
          %769 = vperm.xlu0 %768, %v682
          %v770 = vpop.permute.xlu0 %769
          %771 = vset.pattern.permute.xlu0 0
          %772 = vperm.xlu0 %771, %v683
          %v773 = vpop.permute.xlu0 %772
          %774 = vset.pattern.permute.xlu0 0
          %775 = vperm.xlu0 %774, %v684
          %v776 = vpop.permute.xlu0 %775
          %777 = vset.pattern.permute.xlu0 0
          %778 = vperm.xlu0 %777, %v685
          %v779 = vpop.permute.xlu0 %778
          %780 = vset.pattern.permute.xlu0 0
          %781 = vperm.xlu0 %780, %v686
          %v782 = vpop.permute.xlu0 %781
          %vm783 = vcmp.eq.s32.totalorder %v654, %v689
          %vm784 = vcmp.eq.s32.totalorder %v654, %v692
          %vm785 = vcmp.eq.s32.totalorder %v654, %v695
          %vm786 = vcmp.eq.s32.totalorder %v654, %v698
          %vm787 = vcmp.eq.s32.totalorder %v654, %v701
          %vm788 = vcmp.eq.s32.totalorder %v654, %v704
          %vm789 = vcmp.eq.s32.totalorder %v654, %v707
          %vm790 = vcmp.eq.s32.totalorder %v654, %v710
          %vm791 = vcmp.eq.s32.totalorder %v654, %v713
          %vm792 = vcmp.eq.s32.totalorder %v654, %v716
          %vm793 = vcmp.eq.s32.totalorder %v654, %v719
          %vm794 = vcmp.eq.s32.totalorder %v654, %v722
          %vm795 = vcmp.eq.s32.totalorder %v654, %v725
          %vm796 = vcmp.eq.s32.totalorder %v654, %v728
          %vm797 = vcmp.eq.s32.totalorder %v654, %v731
          %vm798 = vcmp.eq.s32.totalorder %v654, %v734
          %vm799 = vcmp.eq.s32.totalorder %v654, %v737
          %vm800 = vcmp.eq.s32.totalorder %v654, %v740
          %vm801 = vcmp.eq.s32.totalorder %v654, %v743
          %vm802 = vcmp.eq.s32.totalorder %v654, %v746
          %vm803 = vcmp.eq.s32.totalorder %v654, %v749
          %vm804 = vcmp.eq.s32.totalorder %v654, %v752
          %vm805 = vcmp.eq.s32.totalorder %v654, %v755
          %vm806 = vcmp.eq.s32.totalorder %v654, %v758
          %vm807 = vcmp.eq.s32.totalorder %v654, %v761
          %vm808 = vcmp.eq.s32.totalorder %v654, %v764
          %vm809 = vcmp.eq.s32.totalorder %v654, %v767
          %vm810 = vcmp.eq.s32.totalorder %v654, %v770
          %vm811 = vcmp.eq.s32.totalorder %v654, %v773
          %vm812 = vcmp.eq.s32.totalorder %v654, %v776
          %vm813 = vcmp.eq.s32.totalorder %v654, %v779
          %vm814 = vcmp.eq.s32.totalorder %v654, %v782
          %v815 = vsel %vm783, 1, 0
          %v816 = vsel %vm784, 1, 0
          %v817 = vsel %vm785, 1, 0
          %v818 = vsel %vm786, 1, 0
          %v819 = vsel %vm787, 1, 0
          %v820 = vsel %vm788, 1, 0
          %v821 = vsel %vm789, 1, 0
          %v822 = vsel %vm790, 1, 0
          %v823 = vsel %vm791, 1, 0
          %v824 = vsel %vm792, 1, 0
          %v825 = vsel %vm793, 1, 0
          %v826 = vsel %vm794, 1, 0
          %v827 = vsel %vm795, 1, 0
          %v828 = vsel %vm796, 1, 0
          %v829 = vsel %vm797, 1, 0
          %v830 = vsel %vm798, 1, 0
          %v831 = vsel %vm799, 1, 0
          %v832 = vsel %vm800, 1, 0
          %v833 = vsel %vm801, 1, 0
          %v834 = vsel %vm802, 1, 0
          %v835 = vsel %vm803, 1, 0
          %v836 = vsel %vm804, 1, 0
          %v837 = vsel %vm805, 1, 0
          %v838 = vsel %vm806, 1, 0
          %v839 = vsel %vm807, 1, 0
          %v840 = vsel %vm808, 1, 0
          %v841 = vsel %vm809, 1, 0
          %v842 = vsel %vm810, 1, 0
          %v843 = vsel %vm811, 1, 0
          %v844 = vsel %vm812, 1, 0
          %v845 = vsel %vm813, 1, 0
          %v846 = vsel %vm814, 1, 0
          %v847 = vcvt.s32.f32 %v815
          %v848 = vcvt.s32.f32 %v816
          %v849 = vcvt.s32.f32 %v817
          %v850 = vcvt.s32.f32 %v818
          %v851 = vcvt.s32.f32 %v819
          %v852 = vcvt.s32.f32 %v820
          %v853 = vcvt.s32.f32 %v821
          %v854 = vcvt.s32.f32 %v822
          %v855 = vcvt.s32.f32 %v823
          %v856 = vcvt.s32.f32 %v824
          %v857 = vcvt.s32.f32 %v825
          %v858 = vcvt.s32.f32 %v826
          %v859 = vcvt.s32.f32 %v827
          %v860 = vcvt.s32.f32 %v828
          %v861 = vcvt.s32.f32 %v829
          %v862 = vcvt.s32.f32 %v830
          %v863 = vcvt.s32.f32 %v831
          %v864 = vcvt.s32.f32 %v832
          %v865 = vcvt.s32.f32 %v833
          %v866 = vcvt.s32.f32 %v834
          %v867 = vcvt.s32.f32 %v835
          %v868 = vcvt.s32.f32 %v836
          %v869 = vcvt.s32.f32 %v837
          %v870 = vcvt.s32.f32 %v838
          %v871 = vcvt.s32.f32 %v839
          %v872 = vcvt.s32.f32 %v840
          %v873 = vcvt.s32.f32 %v841
          %v874 = vcvt.s32.f32 %v842
          %v875 = vcvt.s32.f32 %v843
          %v876 = vcvt.s32.f32 %v844
          %v877 = vcvt.s32.f32 %v845
          %v878 = vcvt.s32.f32 %v846
          %vm879 = vcmask 523264
          %880 = vst.msk [vmem:[#allocation4] sm:$0xff] %vm879, %v847
          %881 = vst.msk [vmem:[#allocation4 + $0x8] sm:$0xff] %vm879, %v848
          %882 = vst.msk [vmem:[#allocation4 + $0x10] sm:$0xff] %vm879, %v849
          %883 = vst.msk [vmem:[#allocation4 + $0x18] sm:$0xff] %vm879, %v850
          %884 = vst.msk [vmem:[#allocation4 + $0x20] sm:$0xff] %vm879, %v851
          %885 = vst.msk [vmem:[#allocation4 + $0x28] sm:$0xff] %vm879, %v852
          %886 = vst.msk [vmem:[#allocation4 + $0x30] sm:$0xff] %vm879, %v853
          %887 = vst.msk [vmem:[#allocation4 + $0x38] sm:$0xff] %vm879, %v854
          %888 = vst.msk [vmem:[#allocation4 + $0x40] sm:$0xff] %vm879, %v855
          %889 = vst.msk [vmem:[#allocation4 + $0x48] sm:$0xff] %vm879, %v856
          %890 = vst.msk [vmem:[#allocation4 + $0x50] sm:$0xff] %vm879, %v857
          %891 = vst.msk [vmem:[#allocation4 + $0x58] sm:$0xff] %vm879, %v858
          %892 = vst.msk [vmem:[#allocation4 + $0x60] sm:$0xff] %vm879, %v859
          %893 = vst.msk [vmem:[#allocation4 + $0x68] sm:$0xff] %vm879, %v860
          %894 = vst.msk [vmem:[#allocation4 + $0x70] sm:$0xff] %vm879, %v861
          %895 = vst.msk [vmem:[#allocation4 + $0x78] sm:$0xff] %vm879, %v862
          %896 = vst.msk [vmem:[#allocation4 + $0x80] sm:$0xff] %vm879, %v863
          %897 = vst.msk [vmem:[#allocation4 + $0x88] sm:$0xff] %vm879, %v864
          %898 = vst.msk [vmem:[#allocation4 + $0x90] sm:$0xff] %vm879, %v865
          %899 = vst.msk [vmem:[#allocation4 + $0x98] sm:$0xff] %vm879, %v866
          %900 = vst.msk [vmem:[#allocation4 + $0xa0] sm:$0xff] %vm879, %v867
          %901 = vst.msk [vmem:[#allocation4 + $0xa8] sm:$0xff] %vm879, %v868
          %902 = vst.msk [vmem:[#allocation4 + $0xb0] sm:$0xff] %vm879, %v869
          %903 = vst.msk [vmem:[#allocation4 + $0xb8] sm:$0xff] %vm879, %v870
          %904 = vst.msk [vmem:[#allocation4 + $0xc0] sm:$0xff] %vm879, %v871
          %905 = vst.msk [vmem:[#allocation4 + $0xc8] sm:$0xff] %vm879, %v872
          %906 = vst.msk [vmem:[#allocation4 + $0xd0] sm:$0xff] %vm879, %v873
          %907 = vst.msk [vmem:[#allocation4 + $0xd8] sm:$0xff] %vm879, %v874
          %908 = vst.msk [vmem:[#allocation4 + $0xe0] sm:$0xff] %vm879, %v875
          %909 = vst.msk [vmem:[#allocation4 + $0xe8] sm:$0xff] %vm879, %v876
          %910 = vst.msk [vmem:[#allocation4 + $0xf0] sm:$0xff] %vm879, %v877
          %911 = vst.msk [vmem:[#allocation4 + $0xf8] sm:$0xff] %vm879, %v878
          %v912 = vlaneseq
          %v913 = vshrl.u32 %v912, 7
          %v914 = vadd.s32 %v913, 8
          %v915 = vadd.s32 %v913, 16
          %v916 = vadd.s32 %v913, 24
          %v917 = vadd.s32 %v913, 32
          %v918 = vadd.s32 %v913, 40
          %v919 = vadd.s32 %v913, 48
          %v920 = vadd.s32 %v913, 56
          %v921 = vld [vmem:[#allocation6] sm:$0x3]
          %v922 = vlaneseq
          %v923 = vshrl.u32 %v922, 7
          %v924 = vsub.s32 0, %v923
          %v925 = vrot.slane %v921, %v924
          %v926 = vlaneseq
          %v927 = vshrl.u32 %v926, 7
          %v928 = vsub.s32 1, %v927
          %v929 = vrot.slane %v921, %v928
          %vm930 = vcmp.eq.s32.totalorder %v913, %v925
          %vm931 = vcmp.eq.s32.totalorder %v913, %v929
          %vm932 = vcmp.eq.s32.totalorder %v914, %v925
          %vm933 = vcmp.eq.s32.totalorder %v914, %v929
          %vm934 = vcmp.eq.s32.totalorder %v915, %v925
          %vm935 = vcmp.eq.s32.totalorder %v915, %v929
          %vm936 = vcmp.eq.s32.totalorder %v916, %v925
          %vm937 = vcmp.eq.s32.totalorder %v916, %v929
          %vm938 = vcmp.eq.s32.totalorder %v917, %v925
          %vm939 = vcmp.eq.s32.totalorder %v917, %v929
          %vm940 = vcmp.eq.s32.totalorder %v918, %v925
          %vm941 = vcmp.eq.s32.totalorder %v918, %v929
          %vm942 = vcmp.eq.s32.totalorder %v919, %v925
          %vm943 = vcmp.eq.s32.totalorder %v919, %v929
          %vm944 = vcmp.eq.s32.totalorder %v920, %v925
          %vm945 = vcmp.eq.s32.totalorder %v920, %v929
          %v946 = vsel %vm930, 1, 0
          %v947 = vsel %vm931, 1, 0
          %v948 = vsel %vm932, 1, 0
          %v949 = vsel %vm933, 1, 0
          %v950 = vsel %vm934, 1, 0
          %v951 = vsel %vm935, 1, 0
          %v952 = vsel %vm936, 1, 0
          %v953 = vsel %vm937, 1, 0
          %v954 = vsel %vm938, 1, 0
          %v955 = vsel %vm939, 1, 0
          %v956 = vsel %vm940, 1, 0
          %v957 = vsel %vm941, 1, 0
          %v958 = vsel %vm942, 1, 0
          %v959 = vsel %vm943, 1, 0
          %v960 = vsel %vm944, 1, 0
          %v961 = vsel %vm945, 1, 0
          %v962 = vcvt.s32.f32 %v946
          %v963 = vcvt.s32.f32 %v947
          %v964 = vcvt.s32.f32 %v948
          %v965 = vcvt.s32.f32 %v949
          %v966 = vcvt.s32.f32 %v950
          %v967 = vcvt.s32.f32 %v951
          %v968 = vcvt.s32.f32 %v952
          %v969 = vcvt.s32.f32 %v953
          %v970 = vcvt.s32.f32 %v954
          %v971 = vcvt.s32.f32 %v955
          %v972 = vcvt.s32.f32 %v956
          %v973 = vcvt.s32.f32 %v957
          %v974 = vcvt.s32.f32 %v958
          %v975 = vcvt.s32.f32 %v959
          %v976 = vcvt.s32.f32 %v960
          %v977 = vcvt.s32.f32 %v961
          %978 = vst [vmem:[#allocation5] sm:$0xff] %v962
          %979 = vst [vmem:[#allocation5 + $0x8] sm:$0xff] %v963
          %980 = vst [vmem:[#allocation5 + $0x10] sm:$0xff] %v964
          %981 = vst [vmem:[#allocation5 + $0x18] sm:$0xff] %v965
          %982 = vst [vmem:[#allocation5 + $0x20] sm:$0xff] %v966
          %983 = vst [vmem:[#allocation5 + $0x28] sm:$0xff] %v967
          %984 = vst [vmem:[#allocation5 + $0x30] sm:$0xff] %v968
          %985 = vst [vmem:[#allocation5 + $0x38] sm:$0xff] %v969
          %986 = vst [vmem:[#allocation5 + $0x40] sm:$0xff] %v970
          %987 = vst [vmem:[#allocation5 + $0x48] sm:$0xff] %v971
          %988 = vst [vmem:[#allocation5 + $0x50] sm:$0xff] %v972
          %989 = vst [vmem:[#allocation5 + $0x58] sm:$0xff] %v973
          %990 = vst [vmem:[#allocation5 + $0x60] sm:$0xff] %v974
          %991 = vst [vmem:[#allocation5 + $0x68] sm:$0xff] %v975
          %992 = vst [vmem:[#allocation5 + $0x70] sm:$0xff] %v976
          %993 = vst [vmem:[#allocation5 + $0x78] sm:$0xff] %v977
        $region96: #{tpu_custom_call.1} parent=71 // pred_fallthru
          _
        %p994 = scmp.gt.s32.totalorder %s28, 0
        // Predicated region
        $region97: #{tpu_custom_call.1} parent=71 // pred_check
          %p995 = pneg %p994
        $region98: #{tpu_custom_call.1} parent=71 // pred_check_branch
          %997 = sbr.rel (%p995) target = $region100
        $region99: #{tpu_custom_call.1} parent=71 // pred_region
          %v998 = vld [vmem:[#allocation2] sm:$0xff]
          %v999 = vld [vmem:[#allocation2 + $0x8] sm:$0xff]
          %v1000 = vld [vmem:[#allocation2 + $0x10] sm:$0xff]
          %v1001 = vld [vmem:[#allocation2 + $0x18] sm:$0xff]
          %v1002 = vld [vmem:[#allocation2 + $0x20] sm:$0xff]
          %v1003 = vld [vmem:[#allocation2 + $0x28] sm:$0xff]
          %v1004 = vld [vmem:[#allocation2 + $0x30] sm:$0xff]
          %v1005 = vld [vmem:[#allocation2 + $0x38] sm:$0xff]
          %v1006 = vld [vmem:[%s597] sm:$0x1]
          %v1007 = vld [vmem:[%s600] sm:$0x1]
          %1008 = vadd.xlane.f32.xlu0 %v998
          %v1009 = vpop.xlane.xlu0 %1008
          %1010 = vadd.xlane.f32.xlu0 %v999
          %v1011 = vpop.xlane.xlu0 %1010
          %1012 = vadd.xlane.f32.xlu0 %v1000
          %v1013 = vpop.xlane.xlu0 %1012
          %1014 = vadd.xlane.f32.xlu0 %v1001
          %v1015 = vpop.xlane.xlu0 %1014
          %1016 = vadd.xlane.f32.xlu0 %v1002
          %v1017 = vpop.xlane.xlu0 %1016
          %1018 = vadd.xlane.f32.xlu0 %v1003
          %v1019 = vpop.xlane.xlu0 %1018
          %1020 = vadd.xlane.f32.xlu0 %v1004
          %v1021 = vpop.xlane.xlu0 %1020
          %1022 = vadd.xlane.f32.xlu0 %v1005
          %v1023 = vpop.xlane.xlu0 %1022
          %v1024 = vrcp.pop 128.0
          %v1025 = vmul.f32 %v1009, %v1024
          %v1026 = vmul.f32 %v1011, %v1024
          %v1027 = vmul.f32 %v1013, %v1024
          %v1028 = vmul.f32 %v1015, %v1024
          %v1029 = vmul.f32 %v1017, %v1024
          %v1030 = vmul.f32 %v1019, %v1024
          %v1031 = vmul.f32 %v1021, %v1024
          %v1032 = vmul.f32 %v1023, %v1024
          %v1033 = vsub.f32 %v998, %v1025
          %v1034 = vsub.f32 %v999, %v1026
          %v1035 = vsub.f32 %v1000, %v1027
          %v1036 = vsub.f32 %v1001, %v1028
          %v1037 = vsub.f32 %v1002, %v1029
          %v1038 = vsub.f32 %v1003, %v1030
          %v1039 = vsub.f32 %v1004, %v1031
          %v1040 = vsub.f32 %v1005, %v1032
          %v1041 = vmul.f32 %v1033, %v1033
          %v1042 = vmul.f32 %v1034, %v1034
          %v1043 = vmul.f32 %v1035, %v1035
          %v1044 = vmul.f32 %v1036, %v1036
          %v1045 = vmul.f32 %v1037, %v1037
          %v1046 = vmul.f32 %v1038, %v1038
          %v1047 = vmul.f32 %v1039, %v1039
          %v1048 = vmul.f32 %v1040, %v1040
          %1049 = vadd.xlane.f32.xlu0 %v1041
          %v1050 = vpop.xlane.xlu0 %1049
          %1051 = vadd.xlane.f32.xlu0 %v1042
          %v1052 = vpop.xlane.xlu0 %1051
          %1053 = vadd.xlane.f32.xlu0 %v1043
          %v1054 = vpop.xlane.xlu0 %1053
          %1055 = vadd.xlane.f32.xlu0 %v1044
          %v1056 = vpop.xlane.xlu0 %1055
          %1057 = vadd.xlane.f32.xlu0 %v1045
          %v1058 = vpop.xlane.xlu0 %1057
          %1059 = vadd.xlane.f32.xlu0 %v1046
          %v1060 = vpop.xlane.xlu0 %1059
          %1061 = vadd.xlane.f32.xlu0 %v1047
          %v1062 = vpop.xlane.xlu0 %1061
          %1063 = vadd.xlane.f32.xlu0 %v1048
          %v1064 = vpop.xlane.xlu0 %1063
          %v1065 = vmul.f32 %v1050, %v1024
          %v1066 = vmul.f32 %v1052, %v1024
          %v1067 = vmul.f32 %v1054, %v1024
          %v1068 = vmul.f32 %v1056, %v1024
          %v1069 = vmul.f32 %v1058, %v1024
          %v1070 = vmul.f32 %v1060, %v1024
          %v1071 = vmul.f32 %v1062, %v1024
          %v1072 = vmul.f32 %v1064, %v1024
          %v1073 = vadd.f32 %v1065, 1e-05
          %v1074 = vadd.f32 %v1066, 1e-05
          %v1075 = vadd.f32 %v1067, 1e-05
          %v1076 = vadd.f32 %v1068, 1e-05
          %v1077 = vadd.f32 %v1069, 1e-05
          %v1078 = vadd.f32 %v1070, 1e-05
          %v1079 = vadd.f32 %v1071, 1e-05
          %v1080 = vadd.f32 %v1072, 1e-05
          %v1081 = vrsqrt.pop %v1073
          %v1082 = vrsqrt.pop %v1074
          %v1083 = vrsqrt.pop %v1075
          %v1084 = vrsqrt.pop %v1076
          %v1085 = vrsqrt.pop %v1077
          %v1086 = vrsqrt.pop %v1078
          %v1087 = vrsqrt.pop %v1079
          %v1088 = vrsqrt.pop %v1080
          %v1089 = vmul.f32 %v1033, %v1081
          %v1090 = vmul.f32 %v1034, %v1082
          %v1091 = vmul.f32 %v1035, %v1083
          %v1092 = vmul.f32 %v1036, %v1084
          %v1093 = vmul.f32 %v1037, %v1085
          %v1094 = vmul.f32 %v1038, %v1086
          %v1095 = vmul.f32 %v1039, %v1087
          %v1096 = vmul.f32 %v1040, %v1088
          %v1098 = vlaneseq
          %v1099 = vshrl.u32 %v1098, 7
          %v1100 = vsub.s32 0, %v1099
          %v1101 = vrot.slane %v1006, %v1100
          %v1103 = vmul.f32 %v1089, %v1101
          %v1104 = vmul.f32 %v1090, %v1101
          %v1105 = vmul.f32 %v1091, %v1101
          %v1106 = vmul.f32 %v1092, %v1101
          %v1107 = vmul.f32 %v1093, %v1101
          %v1108 = vmul.f32 %v1094, %v1101
          %v1109 = vmul.f32 %v1095, %v1101
          %v1110 = vmul.f32 %v1096, %v1101
          %v1112 = vlaneseq
          %v1113 = vshrl.u32 %v1112, 7
          %v1114 = vsub.s32 0, %v1113
          %v1115 = vrot.slane %v1007, %v1114
          %v1117 = vadd.f32 %v1103, %v1115
          %v1118 = vadd.f32 %v1104, %v1115
          %v1119 = vadd.f32 %v1105, %v1115
          %v1120 = vadd.f32 %v1106, %v1115
          %v1121 = vadd.f32 %v1107, %v1115
          %v1122 = vadd.f32 %v1108, %v1115
          %v1123 = vadd.f32 %v1109, %v1115
          %v1124 = vadd.f32 %v1110, %v1115
          %v1125 = vmax.f32 %v1117, 0.0
          %v1126 = vmax.f32 %v1118, 0.0
          %v1127 = vmax.f32 %v1119, 0.0
          %v1128 = vmax.f32 %v1120, 0.0
          %v1129 = vmax.f32 %v1121, 0.0
          %v1130 = vmax.f32 %v1122, 0.0
          %v1131 = vmax.f32 %v1123, 0.0
          %v1132 = vmax.f32 %v1124, 0.0
          %1133 = vst [vmem:[#allocation3] sm:$0xff] %v1125
          %1134 = vst [vmem:[#allocation3 + $0x8] sm:$0xff] %v1126
          %1135 = vst [vmem:[#allocation3 + $0x10] sm:$0xff] %v1127
          %1136 = vst [vmem:[#allocation3 + $0x18] sm:$0xff] %v1128
          %1137 = vst [vmem:[#allocation3 + $0x20] sm:$0xff] %v1129
          %1138 = vst [vmem:[#allocation3 + $0x28] sm:$0xff] %v1130
          %1139 = vst [vmem:[#allocation3 + $0x30] sm:$0xff] %v1131
          %1140 = vst [vmem:[#allocation3 + $0x38] sm:$0xff] %v1132
        $region100: #{tpu_custom_call.1} parent=71 // pred_fallthru
          _
        %v1141 = vld [vmem:[#allocation3] sm:$0xff]
        %v1142 = vld [vmem:[#allocation3 + $0x8] sm:$0xff]
        %v1143 = vld [vmem:[#allocation3 + $0x10] sm:$0xff]
        %v1144 = vld [vmem:[#allocation3 + $0x18] sm:$0xff]
        %v1145 = vld [vmem:[#allocation3 + $0x20] sm:$0xff]
        %v1146 = vld [vmem:[#allocation3 + $0x28] sm:$0xff]
        %v1147 = vld [vmem:[#allocation3 + $0x30] sm:$0xff]
        %v1148 = vld [vmem:[#allocation3 + $0x38] sm:$0xff]
        %s1149 = smul.u32 %s28, 128
        %s1150 = sld [smem:[#allocation12 + %s1149]]
        %v1151 = vld [vmem:[#allocation4] sm:$0xff]
        %v1152 = vld [vmem:[#allocation4 + $0x8] sm:$0xff]
        %v1153 = vld [vmem:[#allocation4 + $0x10] sm:$0xff]
        %v1154 = vld [vmem:[#allocation4 + $0x18] sm:$0xff]
        %v1155 = vld [vmem:[#allocation4 + $0x20] sm:$0xff]
        %v1156 = vld [vmem:[#allocation4 + $0x28] sm:$0xff]
        %v1157 = vld [vmem:[#allocation4 + $0x30] sm:$0xff]
        %v1158 = vld [vmem:[#allocation4 + $0x38] sm:$0xff]
        %v1159 = vld [vmem:[#allocation4 + $0x40] sm:$0xff]
        %v1160 = vld [vmem:[#allocation4 + $0x48] sm:$0xff]
        %v1161 = vld [vmem:[#allocation4 + $0x50] sm:$0xff]
        %v1162 = vld [vmem:[#allocation4 + $0x58] sm:$0xff]
        %v1163 = vld [vmem:[#allocation4 + $0x60] sm:$0xff]
        %v1164 = vld [vmem:[#allocation4 + $0x68] sm:$0xff]
        %v1165 = vld [vmem:[#allocation4 + $0x70] sm:$0xff]
        %v1166 = vld [vmem:[#allocation4 + $0x78] sm:$0xff]
        %v1167 = vld [vmem:[#allocation4 + $0x80] sm:$0xff]
        %v1168 = vld [vmem:[#allocation4 + $0x88] sm:$0xff]
        %v1169 = vld [vmem:[#allocation4 + $0x90] sm:$0xff]
        %v1170 = vld [vmem:[#allocation4 + $0x98] sm:$0xff]
        %v1171 = vld [vmem:[#allocation4 + $0xa0] sm:$0xff]
        %v1172 = vld [vmem:[#allocation4 + $0xa8] sm:$0xff]
        %v1173 = vld [vmem:[#allocation4 + $0xb0] sm:$0xff]
        %v1174 = vld [vmem:[#allocation4 + $0xb8] sm:$0xff]
        %v1175 = vld [vmem:[#allocation4 + $0xc0] sm:$0xff]
        %v1176 = vld [vmem:[#allocation4 + $0xc8] sm:$0xff]
        %v1177 = vld [vmem:[#allocation4 + $0xd0] sm:$0xff]
        %v1178 = vld [vmem:[#allocation4 + $0xd8] sm:$0xff]
        %v1179 = vld [vmem:[#allocation4 + $0xe0] sm:$0xff]
        %v1180 = vld [vmem:[#allocation4 + $0xe8] sm:$0xff]
        %v1181 = vld [vmem:[#allocation4 + $0xf0] sm:$0xff]
        %v1182 = vld [vmem:[#allocation4 + $0xf8] sm:$0xff]
        %v1183 = vld [vmem:[%s3] sm:$0xff]
        %v1184 = vld [vmem:[%s3 + $0x8] sm:$0xff]
        %v1185 = vld [vmem:[%s3 + $0x10] sm:$0xff]
        %v1186 = vld [vmem:[%s3 + $0x18] sm:$0xff]
        %v1187 = vld [vmem:[%s3 + $0x20] sm:$0xff]
        %v1188 = vld [vmem:[%s3 + $0x28] sm:$0xff]
        %v1189 = vld [vmem:[%s3 + $0x30] sm:$0xff]
        %v1190 = vld [vmem:[%s3 + $0x38] sm:$0xff]
        %v1191 = vld [vmem:[%s3 + $0x40] sm:$0xff]
        %v1192 = vld [vmem:[%s3 + $0x48] sm:$0xff]
        %v1193 = vld [vmem:[%s3 + $0x50] sm:$0xff]
        %v1194 = vld [vmem:[%s3 + $0x58] sm:$0xff]
        %v1195 = vld [vmem:[%s3 + $0x60] sm:$0xff]
        %v1196 = vld [vmem:[%s3 + $0x68] sm:$0xff]
        %v1197 = vld [vmem:[%s3 + $0x70] sm:$0xff]
        %v1198 = vld [vmem:[%s3 + $0x78] sm:$0xff]
        %v1199 = vld [vmem:[%s3 + $0x80] sm:$0xff]
        %v1200 = vld [vmem:[%s3 + $0x88] sm:$0xff]
        %v1201 = vld [vmem:[%s3 + $0x90] sm:$0xff]
        %v1202 = vld [vmem:[%s3 + $0x98] sm:$0xff]
        %v1203 = vld [vmem:[%s3 + $0xa0] sm:$0xff]
        %v1204 = vld [vmem:[%s3 + $0xa8] sm:$0xff]
        %v1205 = vld [vmem:[%s3 + $0xb0] sm:$0xff]
        %v1206 = vld [vmem:[%s3 + $0xb8] sm:$0xff]
        %v1207 = vld [vmem:[%s3 + $0xc0] sm:$0xff]
        %v1208 = vld [vmem:[%s3 + $0xc8] sm:$0xff]
        %v1209 = vld [vmem:[%s3 + $0xd0] sm:$0xff]
        %v1210 = vld [vmem:[%s3 + $0xd8] sm:$0xff]
        %v1211 = vld [vmem:[%s3 + $0xe0] sm:$0xff]
        %v1212 = vld [vmem:[%s3 + $0xe8] sm:$0xff]
        %v1213 = vld [vmem:[%s3 + $0xf0] sm:$0xff]
        %v1214 = vld [vmem:[%s3 + $0xf8] sm:$0xff]
        %vm1215 = vcmask 523264
        %v1217 = vsel %vm1215, %v1151, 0
        %v1220 = vsel %vm1215, %v1152, 0
        %v1223 = vsel %vm1215, %v1153, 0
        %v1226 = vsel %vm1215, %v1154, 0
        %v1229 = vsel %vm1215, %v1155, 0
        %v1232 = vsel %vm1215, %v1156, 0
        %v1235 = vsel %vm1215, %v1157, 0
        %v1238 = vsel %vm1215, %v1158, 0
        %v1241 = vsel %vm1215, %v1159, 0
        %v1244 = vsel %vm1215, %v1160, 0
        %v1247 = vsel %vm1215, %v1161, 0
        %v1250 = vsel %vm1215, %v1162, 0
        %v1253 = vsel %vm1215, %v1163, 0
        %v1256 = vsel %vm1215, %v1164, 0
        %v1259 = vsel %vm1215, %v1165, 0
        %v1262 = vsel %vm1215, %v1166, 0
        %v1265 = vsel %vm1215, %v1167, 0
        %v1268 = vsel %vm1215, %v1168, 0
        %v1271 = vsel %vm1215, %v1169, 0
        %v1274 = vsel %vm1215, %v1170, 0
        %v1277 = vsel %vm1215, %v1171, 0
        %v1280 = vsel %vm1215, %v1172, 0
        %v1283 = vsel %vm1215, %v1173, 0
        %v1286 = vsel %vm1215, %v1174, 0
        %v1289 = vsel %vm1215, %v1175, 0
        %v1292 = vsel %vm1215, %v1176, 0
        %v1295 = vsel %vm1215, %v1177, 0
        %v1298 = vsel %vm1215, %v1178, 0
        %v1301 = vsel %vm1215, %v1179, 0
        %v1304 = vsel %vm1215, %v1180, 0
        %v1307 = vsel %vm1215, %v1181, 0
        %v1310 = vsel %vm1215, %v1182, 0
        %1312 = vmatprep.subr.mxu0 0.0
        %1313 = vmatpush1.msra.mxu0 %v1141
        %1314 = vmatprep.subr.mxu0 0.0
        %1315 = vmatpush1.msra.mxu0 %v1142
        %1316 = vmatprep.subr.mxu0 0.0
        %1317 = vmatpush1.msra.mxu0 %v1143
        %1318 = vmatprep.subr.mxu0 0.0
        %1319 = vmatpush1.msra.mxu0 %v1144
        %1320 = vmatprep.subr.mxu0 0.0
        %1321 = vmatpush1.msra.mxu0 %v1145
        %1322 = vmatprep.subr.mxu0 0.0
        %1323 = vmatpush1.msra.mxu0 %v1146
        %1324 = vmatprep.subr.mxu0 0.0
        %1325 = vmatpush1.msra.mxu0 %v1147
        %1326 = vmatprep.subr.mxu0 0.0
        %1327 = vmatpush1.msra.mxu0 %v1148
        %1328 = vmatprep.subr.mxu0 0.0
        %1329 = vmatpush1.msra.mxu0 0.0
        %1330 = vmatprep.subr.mxu0 0.0
        %1331 = vmatpush1.msra.mxu0 0.0
        %1332 = vmatprep.subr.mxu0 0.0
        %1333 = vmatpush1.msra.mxu0 0.0
        %1334 = vmatprep.subr.mxu0 0.0
        %1335 = vmatpush1.msra.mxu0 0.0
        %1336 = vmatprep.subr.mxu0 0.0
        %1337 = vmatpush1.msra.mxu0 0.0
        %1338 = vmatprep.subr.mxu0 0.0
        %1339 = vmatpush1.msra.mxu0 0.0
        %1340 = vmatprep.subr.mxu0 0.0
        %1341 = vmatpush1.msra.mxu0 0.0
        %1342 = vmatprep.subr.mxu0 0.0
        %1343 = vmatpush1.msra.mxu0 0.0
        %1344 = vmatprep.subr.mxu0 0.0
        %1345 = vmatpush1.msra.mxu0 0.0
        %1346 = vmatprep.subr.mxu0 0.0
        %1347 = vmatpush1.msra.mxu0 0.0
        %1348 = vmatprep.subr.mxu0 0.0
        %1349 = vmatpush1.msra.mxu0 0.0
        %1350 = vmatprep.subr.mxu0 0.0
        %1351 = vmatpush1.msra.mxu0 0.0
        %1352 = vmatprep.subr.mxu0 0.0
        %1353 = vmatpush1.msra.mxu0 0.0
        %1354 = vmatprep.subr.mxu0 0.0
        %1355 = vmatpush1.msra.mxu0 0.0
        %1356 = vmatprep.subr.mxu0 0.0
        %1357 = vmatpush1.msra.mxu0 0.0
        %1358 = vmatprep.subr.mxu0 0.0
        %1359 = vmatpush1.msra.mxu0 0.0
        %1360 = vmatprep.subr.mxu0 0.0
        %1361 = vmatpush1.msra.mxu0 0.0
        %1362 = vmatprep.subr.mxu0 0.0
        %1363 = vmatpush1.msra.mxu0 0.0
        %1364 = vmatprep.subr.mxu0 0.0
        %1365 = vmatpush1.msra.mxu0 0.0
        %1366 = vmatprep.subr.mxu0 0.0
        %1367 = vmatpush1.msra.mxu0 0.0
        %1368 = vmatprep.subr.mxu0 0.0
        %1369 = vmatpush1.msra.mxu0 0.0
        %1370 = vmatprep.subr.mxu0 0.0
        %1371 = vmatpush1.msra.mxu0 0.0
        %1372 = vmatprep.subr.mxu0 0.0
        %1373 = vmatpush1.msra.mxu0 0.0
        %1374 = vmatprep.subr.mxu0 0.0
        %1375 = vmatpush1.msra.mxu0 0.0
        %1376 = vmatprep.mubr.f32.mxu0 0.0
        %1377 = vmatmul.mubr.f32.gmra.mrb[0].mxu0 %v1217
        %v1378 = vpop.f32.mrb[0].mxu0
        %v1379 = vadd.f32 %v1183, %v1378
        %v1380 = vpop.f32.mrb[0].mxu0
        %1381 = vmatprep.mubr.f32.mxu0 0.0
        %1382 = vmatmul.mubr.f32.gmra.mrb[0].mxu0 %v1220
        %v1383 = vpop.f32.mrb[0].mxu0
        %v1384 = vadd.f32 %v1184, %v1383
        %v1385 = vpop.f32.mrb[0].mxu0
        %1386 = vmatprep.mubr.f32.mxu0 0.0
        %1387 = vmatmul.mubr.f32.gmra.mrb[0].mxu0 %v1223
        %v1388 = vpop.f32.mrb[0].mxu0
        %v1389 = vadd.f32 %v1185, %v1388
        %v1390 = vpop.f32.mrb[0].mxu0
        %1391 = vmatprep.mubr.f32.mxu0 0.0
        %1392 = vmatmul.mubr.f32.gmra.mrb[0].mxu0 %v1226
        %v1393 = vpop.f32.mrb[0].mxu0
        %v1394 = vadd.f32 %v1186, %v1393
        %v1395 = vpop.f32.mrb[0].mxu0
        %1396 = vmatprep.mubr.f32.mxu0 0.0
        %1397 = vmatmul.mubr.f32.gmra.mrb[0].mxu0 %v1229
        %v1398 = vpop.f32.mrb[0].mxu0
        %v1399 = vadd.f32 %v1187, %v1398
        %v1400 = vpop.f32.mrb[0].mxu0
        %1401 = vmatprep.mubr.f32.mxu0 0.0
        %1402 = vmatmul.mubr.f32.gmra.mrb[0].mxu0 %v1232
        %v1403 = vpop.f32.mrb[0].mxu0
        %v1404 = vadd.f32 %v1188, %v1403
        %v1405 = vpop.f32.mrb[0].mxu0
        %1406 = vmatprep.mubr.f32.mxu0 0.0
        %1407 = vmatmul.mubr.f32.gmra.mrb[0].mxu0 %v1235
        %v1408 = vpop.f32.mrb[0].mxu0
        %v1409 = vadd.f32 %v1189, %v1408
        %v1410 = vpop.f32.mrb[0].mxu0
        %1411 = vmatprep.mubr.f32.mxu0 0.0
        %1412 = vmatmul.mubr.f32.gmra.mrb[0].mxu0 %v1238
        %v1413 = vpop.f32.mrb[0].mxu0
        %v1414 = vadd.f32 %v1190, %v1413
        %v1415 = vpop.f32.mrb[0].mxu0
        %1416 = vmatprep.mubr.f32.mxu0 0.0
        %1417 = vmatmul.mubr.f32.gmra.mrb[0].mxu0 %v1241
        %v1418 = vpop.f32.mrb[0].mxu0
        %v1419 = vadd.f32 %v1191, %v1418
        %v1420 = vpop.f32.mrb[0].mxu0
        %1421 = vmatprep.mubr.f32.mxu0 0.0
        %1422 = vmatmul.mubr.f32.gmra.mrb[0].mxu0 %v1244
        %v1423 = vpop.f32.mrb[0].mxu0
        %v1424 = vadd.f32 %v1192, %v1423
        %v1425 = vpop.f32.mrb[0].mxu0
        %1426 = vmatprep.mubr.f32.mxu0 0.0
        %1427 = vmatmul.mubr.f32.gmra.mrb[0].mxu0 %v1247
        %v1428 = vpop.f32.mrb[0].mxu0
        %v1429 = vadd.f32 %v1193, %v1428
        %v1430 = vpop.f32.mrb[0].mxu0
        %1431 = vmatprep.mubr.f32.mxu0 0.0
        %1432 = vmatmul.mubr.f32.gmra.mrb[0].mxu0 %v1250
        %v1433 = vpop.f32.mrb[0].mxu0
        %v1434 = vadd.f32 %v1194, %v1433
        %v1435 = vpop.f32.mrb[0].mxu0
        %1436 = vmatprep.mubr.f32.mxu0 0.0
        %1437 = vmatmul.mubr.f32.gmra.mrb[0].mxu0 %v1253
        %v1438 = vpop.f32.mrb[0].mxu0
        %v1439 = vadd.f32 %v1195, %v1438
        %v1440 = vpop.f32.mrb[0].mxu0
        %1441 = vmatprep.mubr.f32.mxu0 0.0
        %1442 = vmatmul.mubr.f32.gmra.mrb[0].mxu0 %v1256
        %v1443 = vpop.f32.mrb[0].mxu0
        %v1444 = vadd.f32 %v1196, %v1443
        %v1445 = vpop.f32.mrb[0].mxu0
        %1446 = vmatprep.mubr.f32.mxu0 0.0
        %1447 = vmatmul.mubr.f32.gmra.mrb[0].mxu0 %v1259
        %v1448 = vpop.f32.mrb[0].mxu0
        %v1449 = vadd.f32 %v1197, %v1448
        %v1450 = vpop.f32.mrb[0].mxu0
        %1451 = vmatprep.mubr.f32.mxu0 0.0
        %1452 = vmatmul.mubr.f32.gmra.mrb[0].mxu0 %v1262
        %v1453 = vpop.f32.mrb[0].mxu0
        %v1454 = vadd.f32 %v1198, %v1453
        %v1455 = vpop.f32.mrb[0].mxu0
        %1456 = vmatprep.mubr.f32.mxu0 0.0
        %1457 = vmatmul.mubr.f32.gmra.mrb[0].mxu0 %v1265
        %v1458 = vpop.f32.mrb[0].mxu0
        %v1459 = vadd.f32 %v1199, %v1458
        %v1460 = vpop.f32.mrb[0].mxu0
        %1461 = vmatprep.mubr.f32.mxu0 0.0
        %1462 = vmatmul.mubr.f32.gmra.mrb[0].mxu0 %v1268
        %v1463 = vpop.f32.mrb[0].mxu0
        %v1464 = vadd.f32 %v1200, %v1463
        %v1465 = vpop.f32.mrb[0].mxu0
        %1466 = vmatprep.mubr.f32.mxu0 0.0
        %1467 = vmatmul.mubr.f32.gmra.mrb[0].mxu0 %v1271
        %v1468 = vpop.f32.mrb[0].mxu0
        %v1469 = vadd.f32 %v1201, %v1468
        %v1470 = vpop.f32.mrb[0].mxu0
        %1471 = vmatprep.mubr.f32.mxu0 0.0
        %1472 = vmatmul.mubr.f32.gmra.mrb[0].mxu0 %v1274
        %v1473 = vpop.f32.mrb[0].mxu0
        %v1474 = vadd.f32 %v1202, %v1473
        %v1475 = vpop.f32.mrb[0].mxu0
        %1476 = vmatprep.mubr.f32.mxu0 0.0
        %1477 = vmatmul.mubr.f32.gmra.mrb[0].mxu0 %v1277
        %v1478 = vpop.f32.mrb[0].mxu0
        %v1479 = vadd.f32 %v1203, %v1478
        %v1480 = vpop.f32.mrb[0].mxu0
        %1481 = vmatprep.mubr.f32.mxu0 0.0
        %1482 = vmatmul.mubr.f32.gmra.mrb[0].mxu0 %v1280
        %v1483 = vpop.f32.mrb[0].mxu0
        %v1484 = vadd.f32 %v1204, %v1483
        %v1485 = vpop.f32.mrb[0].mxu0
        %1486 = vmatprep.mubr.f32.mxu0 0.0
        %1487 = vmatmul.mubr.f32.gmra.mrb[0].mxu0 %v1283
        %v1488 = vpop.f32.mrb[0].mxu0
        %v1489 = vadd.f32 %v1205, %v1488
        %v1490 = vpop.f32.mrb[0].mxu0
        %1491 = vmatprep.mubr.f32.mxu0 0.0
        %1492 = vmatmul.mubr.f32.gmra.mrb[0].mxu0 %v1286
        %v1493 = vpop.f32.mrb[0].mxu0
        %v1494 = vadd.f32 %v1206, %v1493
        %v1495 = vpop.f32.mrb[0].mxu0
        %1496 = vmatprep.mubr.f32.mxu0 0.0
        %1497 = vmatmul.mubr.f32.gmra.mrb[0].mxu0 %v1289
        %v1498 = vpop.f32.mrb[0].mxu0
        %v1499 = vadd.f32 %v1207, %v1498
        %v1500 = vpop.f32.mrb[0].mxu0
        %1501 = vmatprep.mubr.f32.mxu0 0.0
        %1502 = vmatmul.mubr.f32.gmra.mrb[0].mxu0 %v1292
        %v1503 = vpop.f32.mrb[0].mxu0
        %v1504 = vadd.f32 %v1208, %v1503
        %v1505 = vpop.f32.mrb[0].mxu0
        %1506 = vmatprep.mubr.f32.mxu0 0.0
        %1507 = vmatmul.mubr.f32.gmra.mrb[0].mxu0 %v1295
        %v1508 = vpop.f32.mrb[0].mxu0
        %v1509 = vadd.f32 %v1209, %v1508
        %v1510 = vpop.f32.mrb[0].mxu0
        %1511 = vmatprep.mubr.f32.mxu0 0.0
        %1512 = vmatmul.mubr.f32.gmra.mrb[0].mxu0 %v1298
        %v1513 = vpop.f32.mrb[0].mxu0
        %v1514 = vadd.f32 %v1210, %v1513
        %v1515 = vpop.f32.mrb[0].mxu0
        %1516 = vmatprep.mubr.f32.mxu0 0.0
        %1517 = vmatmul.mubr.f32.gmra.mrb[0].mxu0 %v1301
        %v1518 = vpop.f32.mrb[0].mxu0
        %v1519 = vadd.f32 %v1211, %v1518
        %v1520 = vpop.f32.mrb[0].mxu0
        %1521 = vmatprep.mubr.f32.mxu0 0.0
        %1522 = vmatmul.mubr.f32.gmra.mrb[0].mxu0 %v1304
        %v1523 = vpop.f32.mrb[0].mxu0
        %v1524 = vadd.f32 %v1212, %v1523
        %v1525 = vpop.f32.mrb[0].mxu0
        %1526 = vmatprep.mubr.f32.mxu0 0.0
        %1527 = vmatmul.mubr.f32.gmra.mrb[0].mxu0 %v1307
        %v1528 = vpop.f32.mrb[0].mxu0
        %v1529 = vadd.f32 %v1213, %v1528
        %v1530 = vpop.f32.mrb[0].mxu0
        %1531 = vmatprep.mubr.f32.mxu0 0.0
        %1532 = vmatmul.mubr.f32.gmra.mrb[0].mxu0 %v1310
        %v1533 = vpop.f32.mrb[0].mxu0
        %v1534 = vadd.f32 %v1214, %v1533
        %v1535 = vpop.f32.mrb[0].mxu0
        %1536 = vdwg.mxu0
        %v1537 = vmax.f32 %v1379, 0.0
        %v1538 = vmax.f32 %v1384, 0.0
        %v1539 = vmax.f32 %v1389, 0.0
        %v1540 = vmax.f32 %v1394, 0.0
        %v1541 = vmax.f32 %v1399, 0.0
        %v1542 = vmax.f32 %v1404, 0.0
        %v1543 = vmax.f32 %v1409, 0.0
        %v1544 = vmax.f32 %v1414, 0.0
        %v1545 = vmax.f32 %v1419, 0.0
        %v1546 = vmax.f32 %v1424, 0.0
        %v1547 = vmax.f32 %v1429, 0.0
        %v1548 = vmax.f32 %v1434, 0.0
        %v1549 = vmax.f32 %v1439, 0.0
        %v1550 = vmax.f32 %v1444, 0.0
        %v1551 = vmax.f32 %v1449, 0.0
        %v1552 = vmax.f32 %v1454, 0.0
        %v1553 = vmax.f32 %v1459, 0.0
        %v1554 = vmax.f32 %v1464, 0.0
        %v1555 = vmax.f32 %v1469, 0.0
        %v1556 = vmax.f32 %v1474, 0.0
        %v1557 = vmax.f32 %v1479, 0.0
        %v1558 = vmax.f32 %v1484, 0.0
        %v1559 = vmax.f32 %v1489, 0.0
        %v1560 = vmax.f32 %v1494, 0.0
        %v1561 = vmax.f32 %v1499, 0.0
        %v1562 = vmax.f32 %v1504, 0.0
        %v1563 = vmax.f32 %v1509, 0.0
        %v1564 = vmax.f32 %v1514, 0.0
        %v1565 = vmax.f32 %v1519, 0.0
        %v1566 = vmax.f32 %v1524, 0.0
        %v1567 = vmax.f32 %v1529, 0.0
        %v1568 = vmax.f32 %v1534, 0.0
        %v1569 = vadd.f32 %v1537, 1e-07
        %v1570 = vadd.f32 %v1538, 1e-07
        %v1571 = vadd.f32 %v1539, 1e-07
        %v1572 = vadd.f32 %v1540, 1e-07
        %v1573 = vadd.f32 %v1541, 1e-07
        %v1574 = vadd.f32 %v1542, 1e-07
        %v1575 = vadd.f32 %v1543, 1e-07
        %v1576 = vadd.f32 %v1544, 1e-07
        %v1577 = vadd.f32 %v1545, 1e-07
        %v1578 = vadd.f32 %v1546, 1e-07
        %v1579 = vadd.f32 %v1547, 1e-07
        %v1580 = vadd.f32 %v1548, 1e-07
        %v1581 = vadd.f32 %v1549, 1e-07
        %v1582 = vadd.f32 %v1550, 1e-07
        %v1583 = vadd.f32 %v1551, 1e-07
        %v1584 = vadd.f32 %v1552, 1e-07
        %v1585 = vadd.f32 %v1553, 1e-07
        %v1586 = vadd.f32 %v1554, 1e-07
        %v1587 = vadd.f32 %v1555, 1e-07
        %v1588 = vadd.f32 %v1556, 1e-07
        %v1589 = vadd.f32 %v1557, 1e-07
        %v1590 = vadd.f32 %v1558, 1e-07
        %v1591 = vadd.f32 %v1559, 1e-07
        %v1592 = vadd.f32 %v1560, 1e-07
        %v1593 = vadd.f32 %v1561, 1e-07
        %v1594 = vadd.f32 %v1562, 1e-07
        %v1595 = vadd.f32 %v1563, 1e-07
        %v1596 = vadd.f32 %v1564, 1e-07
        %v1597 = vadd.f32 %v1565, 1e-07
        %v1598 = vadd.f32 %v1566, 1e-07
        %v1599 = vadd.f32 %v1567, 1e-07
        %v1600 = vadd.f32 %v1568, 1e-07
        %v1601 = vstv %s1150
        %v1602 = vmul.f32 %v1601, %v1569
        %v1603 = vmul.f32 %v1601, %v1570
        %v1604 = vmul.f32 %v1601, %v1571
        %v1605 = vmul.f32 %v1601, %v1572
        %v1606 = vmul.f32 %v1601, %v1573
        %v1607 = vmul.f32 %v1601, %v1574
        %v1608 = vmul.f32 %v1601, %v1575
        %v1609 = vmul.f32 %v1601, %v1576
        %v1610 = vmul.f32 %v1601, %v1577
        %v1611 = vmul.f32 %v1601, %v1578
        %v1612 = vmul.f32 %v1601, %v1579
        %v1613 = vmul.f32 %v1601, %v1580
        %v1614 = vmul.f32 %v1601, %v1581
        %v1615 = vmul.f32 %v1601, %v1582
        %v1616 = vmul.f32 %v1601, %v1583
        %v1617 = vmul.f32 %v1601, %v1584
        %v1618 = vmul.f32 %v1601, %v1585
        %v1619 = vmul.f32 %v1601, %v1586
        %v1620 = vmul.f32 %v1601, %v1587
        %v1621 = vmul.f32 %v1601, %v1588
        %v1622 = vmul.f32 %v1601, %v1589
        %v1623 = vmul.f32 %v1601, %v1590
        %v1624 = vmul.f32 %v1601, %v1591
        %v1625 = vmul.f32 %v1601, %v1592
        %v1626 = vmul.f32 %v1601, %v1593
        %v1627 = vmul.f32 %v1601, %v1594
        %v1628 = vmul.f32 %v1601, %v1595
        %v1629 = vmul.f32 %v1601, %v1596
        %v1630 = vmul.f32 %v1601, %v1597
        %v1631 = vmul.f32 %v1601, %v1598
        %v1632 = vmul.f32 %v1601, %v1599
        %v1633 = vmul.f32 %v1601, %v1600
        %v1634 = vmax.f32 %v1602, %v1606
        %v1635 = vmax.f32 %v1603, %v1607
        %v1636 = vmax.f32 %v1604, %v1608
        %v1637 = vmax.f32 %v1605, %v1609
        %v1638 = vmax.f32 %v1634, %v1610
        %v1639 = vmax.f32 %v1635, %v1611
        %v1640 = vmax.f32 %v1636, %v1612
        %v1641 = vmax.f32 %v1637, %v1613
        %v1642 = vmax.f32 %v1638, %v1614
        %v1643 = vmax.f32 %v1639, %v1615
        %v1644 = vmax.f32 %v1640, %v1616
        %v1645 = vmax.f32 %v1641, %v1617
        %v1646 = vmax.f32 %v1642, %v1618
        %v1647 = vmax.f32 %v1643, %v1619
        %v1648 = vmax.f32 %v1644, %v1620
        %v1649 = vmax.f32 %v1645, %v1621
        %v1650 = vmax.f32 %v1646, %v1622
        %v1651 = vmax.f32 %v1647, %v1623
        %v1652 = vmax.f32 %v1648, %v1624
        %v1653 = vmax.f32 %v1649, %v1625
        %v1654 = vmax.f32 %v1650, %v1626
        %v1655 = vmax.f32 %v1651, %v1627
        %v1656 = vmax.f32 %v1652, %v1628
        %v1657 = vmax.f32 %v1653, %v1629
        %v1658 = vmax.f32 %v1654, %v1630
        %v1659 = vmax.f32 %v1655, %v1631
        %v1660 = vmax.f32 %v1656, %v1632
        %v1661 = vmax.f32 %v1657, %v1633
        %v1662 = vmax.f32 %v1658, %v1659
        %v1663 = vmax.f32 %v1660, %v1661
        %v1664 = vmax.f32 %v1662, %v1663
        %v1665 = vrot.slane %v1664, 4
        %v1666 = vmax.f32 %v1664, %v1665
        %v1667 = vrot.slane %v1666, 2
        %v1668 = vmax.f32 %v1666, %v1667
        %v1669 = vrot.slane %v1668, 1
        %v1670 = vmax.f32 %v1668, %v1669
        %v1671 = vsub.f32 %v1602, %v1670
        %v1672 = vsub.f32 %v1603, %v1670
        %v1673 = vsub.f32 %v1604, %v1670
        %v1674 = vsub.f32 %v1605, %v1670
        %v1675 = vsub.f32 %v1606, %v1670
        %v1676 = vsub.f32 %v1607, %v1670
        %v1677 = vsub.f32 %v1608, %v1670
        %v1678 = vsub.f32 %v1609, %v1670
        %v1679 = vsub.f32 %v1610, %v1670
        %v1680 = vsub.f32 %v1611, %v1670
        %v1681 = vsub.f32 %v1612, %v1670
        %v1682 = vsub.f32 %v1613, %v1670
        %v1683 = vsub.f32 %v1614, %v1670
        %v1684 = vsub.f32 %v1615, %v1670
        %v1685 = vsub.f32 %v1616, %v1670
        %v1686 = vsub.f32 %v1617, %v1670
        %v1687 = vsub.f32 %v1618, %v1670
        %v1688 = vsub.f32 %v1619, %v1670
        %v1689 = vsub.f32 %v1620, %v1670
        %v1690 = vsub.f32 %v1621, %v1670
        %v1691 = vsub.f32 %v1622, %v1670
        %v1692 = vsub.f32 %v1623, %v1670
        %v1693 = vsub.f32 %v1624, %v1670
        %v1694 = vsub.f32 %v1625, %v1670
        %v1695 = vsub.f32 %v1626, %v1670
        %v1696 = vsub.f32 %v1627, %v1670
        %v1697 = vsub.f32 %v1628, %v1670
        %v1698 = vsub.f32 %v1629, %v1670
        %v1699 = vsub.f32 %v1630, %v1670
        %v1700 = vsub.f32 %v1631, %v1670
        %v1701 = vsub.f32 %v1632, %v1670
        %v1702 = vsub.f32 %v1633, %v1670
        %v1703 = vmul.f32 %v1671, 1.442695
        %v1704 = vpow.pop %v1703
        %v1705 = vmul.f32 %v1672, 1.442695
        %v1706 = vpow.pop %v1705
        %v1707 = vmul.f32 %v1673, 1.442695
        %v1708 = vpow.pop %v1707
        %v1709 = vmul.f32 %v1674, 1.442695
        %v1710 = vpow.pop %v1709
        %v1711 = vmul.f32 %v1675, 1.442695
        %v1712 = vpow.pop %v1711
        %v1713 = vmul.f32 %v1676, 1.442695
        %v1714 = vpow.pop %v1713
        %v1715 = vmul.f32 %v1677, 1.442695
        %v1716 = vpow.pop %v1715
        %v1717 = vmul.f32 %v1678, 1.442695
        %v1718 = vpow.pop %v1717
        %v1719 = vmul.f32 %v1679, 1.442695
        %v1720 = vpow.pop %v1719
        %v1721 = vmul.f32 %v1680, 1.442695
        %v1722 = vpow.pop %v1721
        %v1723 = vmul.f32 %v1681, 1.442695
        %v1724 = vpow.pop %v1723
        %v1725 = vmul.f32 %v1682, 1.442695
        %v1726 = vpow.pop %v1725
        %v1727 = vmul.f32 %v1683, 1.442695
        %v1728 = vpow.pop %v1727
        %v1729 = vmul.f32 %v1684, 1.442695
        %v1730 = vpow.pop %v1729
        %v1731 = vmul.f32 %v1685, 1.442695
        %v1732 = vpow.pop %v1731
        %v1733 = vmul.f32 %v1686, 1.442695
        %v1734 = vpow.pop %v1733
        %v1735 = vmul.f32 %v1687, 1.442695
        %v1736 = vpow.pop %v1735
        %v1737 = vmul.f32 %v1688, 1.442695
        %v1738 = vpow.pop %v1737
        %v1739 = vmul.f32 %v1689, 1.442695
        %v1740 = vpow.pop %v1739
        %v1741 = vmul.f32 %v1690, 1.442695
        %v1742 = vpow.pop %v1741
        %v1743 = vmul.f32 %v1691, 1.442695
        %v1744 = vpow.pop %v1743
        %v1745 = vmul.f32 %v1692, 1.442695
        %v1746 = vpow.pop %v1745
        %v1747 = vmul.f32 %v1693, 1.442695
        %v1748 = vpow.pop %v1747
        %v1749 = vmul.f32 %v1694, 1.442695
        %v1750 = vpow.pop %v1749
        %v1751 = vmul.f32 %v1695, 1.442695
        %v1752 = vpow.pop %v1751
        %v1753 = vmul.f32 %v1696, 1.442695
        %v1754 = vpow.pop %v1753
        %v1755 = vmul.f32 %v1697, 1.442695
        %v1756 = vpow.pop %v1755
        %v1757 = vmul.f32 %v1698, 1.442695
        %v1758 = vpow.pop %v1757
        %v1759 = vmul.f32 %v1699, 1.442695
        %v1760 = vpow.pop %v1759
        %v1761 = vmul.f32 %v1700, 1.442695
        %v1762 = vpow.pop %v1761
        %v1763 = vmul.f32 %v1701, 1.442695
        %v1764 = vpow.pop %v1763
        %v1765 = vmul.f32 %v1702, 1.442695
        %v1766 = vpow.pop %v1765
        %v1767 = vmul.f32 %v1704, %v1569
        %v1768 = vmul.f32 %v1706, %v1570
        %v1769 = vmul.f32 %v1708, %v1571
        %v1770 = vmul.f32 %v1710, %v1572
        %v1771 = vmul.f32 %v1712, %v1573
        %v1772 = vmul.f32 %v1714, %v1574
        %v1773 = vmul.f32 %v1716, %v1575
        %v1774 = vmul.f32 %v1718, %v1576
        %v1775 = vmul.f32 %v1720, %v1577
        %v1776 = vmul.f32 %v1722, %v1578
        %v1777 = vmul.f32 %v1724, %v1579
        %v1778 = vmul.f32 %v1726, %v1580
        %v1779 = vmul.f32 %v1728, %v1581
        %v1780 = vmul.f32 %v1730, %v1582
        %v1781 = vmul.f32 %v1732, %v1583
        %v1782 = vmul.f32 %v1734, %v1584
        %v1783 = vmul.f32 %v1736, %v1585
        %v1784 = vmul.f32 %v1738, %v1586
        %v1785 = vmul.f32 %v1740, %v1587
        %v1786 = vmul.f32 %v1742, %v1588
        %v1787 = vmul.f32 %v1744, %v1589
        %v1788 = vmul.f32 %v1746, %v1590
        %v1789 = vmul.f32 %v1748, %v1591
        %v1790 = vmul.f32 %v1750, %v1592
        %v1791 = vmul.f32 %v1752, %v1593
        %v1792 = vmul.f32 %v1754, %v1594
        %v1793 = vmul.f32 %v1756, %v1595
        %v1794 = vmul.f32 %v1758, %v1596
        %v1795 = vmul.f32 %v1760, %v1597
        %v1796 = vmul.f32 %v1762, %v1598
        %v1797 = vmul.f32 %v1764, %v1599
        %v1798 = vmul.f32 %v1766, %v1600
        %v1799 = vld [vmem:[#allocation5] sm:$0xff]
        %v1800 = vld [vmem:[#allocation5 + $0x8] sm:$0xff]
        %v1801 = vld [vmem:[#allocation5 + $0x10] sm:$0xff]
        %v1802 = vld [vmem:[#allocation5 + $0x18] sm:$0xff]
        %v1803 = vld [vmem:[#allocation5 + $0x20] sm:$0xff]
        %v1804 = vld [vmem:[#allocation5 + $0x28] sm:$0xff]
        %v1805 = vld [vmem:[#allocation5 + $0x30] sm:$0xff]
        %v1806 = vld [vmem:[#allocation5 + $0x38] sm:$0xff]
        %v1807 = vld [vmem:[#allocation5 + $0x40] sm:$0xff]
        %v1808 = vld [vmem:[#allocation5 + $0x48] sm:$0xff]
        %v1809 = vld [vmem:[#allocation5 + $0x50] sm:$0xff]
        %v1810 = vld [vmem:[#allocation5 + $0x58] sm:$0xff]
        %v1811 = vld [vmem:[#allocation5 + $0x60] sm:$0xff]
        %v1812 = vld [vmem:[#allocation5 + $0x68] sm:$0xff]
        %v1813 = vld [vmem:[#allocation5 + $0x70] sm:$0xff]
        %v1814 = vld [vmem:[#allocation5 + $0x78] sm:$0xff]
        %1815 = vmatprep.subr.mxu0 0.0
        %1816 = vmatpush1.msra.mxu0 %v1704
        %1817 = vmatprep.subr.mxu0 0.0
        %1818 = vmatpush1.msra.mxu0 %v1706
        %1819 = vmatprep.subr.mxu0 0.0
        %1820 = vmatpush1.msra.mxu0 %v1708
        %1821 = vmatprep.subr.mxu0 0.0
        %1822 = vmatpush1.msra.mxu0 %v1710
        %1823 = vmatprep.subr.mxu0 0.0
        %1824 = vmatpush1.msra.mxu0 %v1712
        %1825 = vmatprep.subr.mxu0 0.0
        %1826 = vmatpush1.msra.mxu0 %v1714
        %1827 = vmatprep.subr.mxu0 0.0
        %1828 = vmatpush1.msra.mxu0 %v1716
        %1829 = vmatprep.subr.mxu0 0.0
        %1830 = vmatpush1.msra.mxu0 %v1718
        %1831 = vmatprep.subr.mxu0 0.0
        %1832 = vmatpush1.msra.mxu0 %v1720
        %1833 = vmatprep.subr.mxu0 0.0
        %1834 = vmatpush1.msra.mxu0 %v1722
        %1835 = vmatprep.subr.mxu0 0.0
        %1836 = vmatpush1.msra.mxu0 %v1724
        %1837 = vmatprep.subr.mxu0 0.0
        %1838 = vmatpush1.msra.mxu0 %v1726
        %1839 = vmatprep.subr.mxu0 0.0
        %1840 = vmatpush1.msra.mxu0 %v1728
        %1841 = vmatprep.subr.mxu0 0.0
        %1842 = vmatpush1.msra.mxu0 %v1730
        %1843 = vmatprep.subr.mxu0 0.0
        %1844 = vmatpush1.msra.mxu0 %v1732
        %1845 = vmatprep.subr.mxu0 0.0
        %1846 = vmatpush1.msra.mxu0 %v1734
        %1847 = vmatprep.subr.mxu0 0.0
        %1848 = vmatpush1.msra.mxu0 %v1736
        %1849 = vmatprep.subr.mxu0 0.0
        %1850 = vmatpush1.msra.mxu0 %v1738
        %1851 = vmatprep.subr.mxu0 0.0
        %1852 = vmatpush1.msra.mxu0 %v1740
        %1853 = vmatprep.subr.mxu0 0.0
        %1854 = vmatpush1.msra.mxu0 %v1742
        %1855 = vmatprep.subr.mxu0 0.0
        %1856 = vmatpush1.msra.mxu0 %v1744
        %1857 = vmatprep.subr.mxu0 0.0
        %1858 = vmatpush1.msra.mxu0 %v1746
        %1859 = vmatprep.subr.mxu0 0.0
        %1860 = vmatpush1.msra.mxu0 %v1748
        %1861 = vmatprep.subr.mxu0 0.0
        %1862 = vmatpush1.msra.mxu0 %v1750
        %1863 = vmatprep.subr.mxu0 0.0
        %1864 = vmatpush1.msra.mxu0 %v1752
        %1865 = vmatprep.subr.mxu0 0.0
        %1866 = vmatpush1.msra.mxu0 %v1754
        %1867 = vmatprep.subr.mxu0 0.0
        %1868 = vmatpush1.msra.mxu0 %v1756
        %1869 = vmatprep.subr.mxu0 0.0
        %1870 = vmatpush1.msra.mxu0 %v1758
        %1871 = vmatprep.subr.mxu0 0.0
        %1872 = vmatpush1.msra.mxu0 %v1760
        %1873 = vmatprep.subr.mxu0 0.0
        %1874 = vmatpush1.msra.mxu0 %v1762
        %1875 = vmatprep.subr.mxu0 0.0
        %1876 = vmatpush1.msra.mxu0 %v1764
        %1877 = vmatprep.subr.mxu0 0.0
        %1878 = vmatpush1.msra.mxu0 %v1766
        %1879 = vmatprep.mubr.f32.mxu0 %v1800
        %1880 = vmatmul.mubr.f32.gmra.mrb[0].mxu0 %v1799
        %v1881 = vpop.f32.mrb[0].mxu0
        %v1882 = vadd.f32 0.0, %v1881
        %v1883 = vpop.f32.mrb[0].mxu0
        %1884 = vmatprep.mubr.f32.mxu0 %v1802
        %1885 = vmatmul.mubr.f32.gmra.mrb[0].mxu0 %v1801
        %v1886 = vpop.f32.mrb[0].mxu0
        %v1887 = vadd.f32 0.0, %v1886
        %v1888 = vpop.f32.mrb[0].mxu0
        %1889 = vmatprep.mubr.f32.mxu0 %v1804
        %1890 = vmatmul.mubr.f32.gmra.mrb[0].mxu0 %v1803
        %v1891 = vpop.f32.mrb[0].mxu0
        %v1892 = vadd.f32 0.0, %v1891
        %v1893 = vpop.f32.mrb[0].mxu0
        %1894 = vmatprep.mubr.f32.mxu0 %v1806
        %1895 = vmatmul.mubr.f32.gmra.mrb[0].mxu0 %v1805
        %v1896 = vpop.f32.mrb[0].mxu0
        %v1897 = vadd.f32 0.0, %v1896
        %v1898 = vpop.f32.mrb[0].mxu0
        %1899 = vmatprep.mubr.f32.mxu0 %v1808
        %1900 = vmatmul.mubr.f32.gmra.mrb[0].mxu0 %v1807
        %v1901 = vpop.f32.mrb[0].mxu0
        %v1902 = vadd.f32 0.0, %v1901
        %v1903 = vpop.f32.mrb[0].mxu0
        %1904 = vmatprep.mubr.f32.mxu0 %v1810
        %1905 = vmatmul.mubr.f32.gmra.mrb[0].mxu0 %v1809
        %v1906 = vpop.f32.mrb[0].mxu0
        %v1907 = vadd.f32 0.0, %v1906
        %v1908 = vpop.f32.mrb[0].mxu0
        %1909 = vmatprep.mubr.f32.mxu0 %v1812
        %1910 = vmatmul.mubr.f32.gmra.mrb[0].mxu0 %v1811
        %v1911 = vpop.f32.mrb[0].mxu0
        %v1912 = vadd.f32 0.0, %v1911
        %v1913 = vpop.f32.mrb[0].mxu0
        %1914 = vmatprep.mubr.f32.mxu0 %v1814
        %1915 = vmatmul.mubr.f32.gmra.mrb[0].mxu0 %v1813
        %v1916 = vpop.f32.mrb[0].mxu0
        %v1917 = vadd.f32 0.0, %v1916
        %v1918 = vpop.f32.mrb[0].mxu0
        %1919 = vdwg.mxu0
        %1920 = vmatprep.subr.mxu0 0.0
        %1921 = vmatpush1.msra.mxu0 %v1767
        %1922 = vmatprep.subr.mxu0 0.0
        %1923 = vmatpush1.msra.mxu0 %v1768
        %1924 = vmatprep.subr.mxu0 0.0
        %1925 = vmatpush1.msra.mxu0 %v1769
        %1926 = vmatprep.subr.mxu0 0.0
        %1927 = vmatpush1.msra.mxu0 %v1770
        %1928 = vmatprep.subr.mxu0 0.0
        %1929 = vmatpush1.msra.mxu0 %v1771
        %1930 = vmatprep.subr.mxu0 0.0
        %1931 = vmatpush1.msra.mxu0 %v1772
        %1932 = vmatprep.subr.mxu0 0.0
        %1933 = vmatpush1.msra.mxu0 %v1773
        %1934 = vmatprep.subr.mxu0 0.0
        %1935 = vmatpush1.msra.mxu0 %v1774
        %1936 = vmatprep.subr.mxu0 0.0
        %1937 = vmatpush1.msra.mxu0 %v1775
        %1938 = vmatprep.subr.mxu0 0.0
        %1939 = vmatpush1.msra.mxu0 %v1776
        %1940 = vmatprep.subr.mxu0 0.0
        %1941 = vmatpush1.msra.mxu0 %v1777
        %1942 = vmatprep.subr.mxu0 0.0
        %1943 = vmatpush1.msra.mxu0 %v1778
        %1944 = vmatprep.subr.mxu0 0.0
        %1945 = vmatpush1.msra.mxu0 %v1779
        %1946 = vmatprep.subr.mxu0 0.0
        %1947 = vmatpush1.msra.mxu0 %v1780
        %1948 = vmatprep.subr.mxu0 0.0
        %1949 = vmatpush1.msra.mxu0 %v1781
        %1950 = vmatprep.subr.mxu0 0.0
        %1951 = vmatpush1.msra.mxu0 %v1782
        %1952 = vmatprep.subr.mxu0 0.0
        %1953 = vmatpush1.msra.mxu0 %v1783
        %1954 = vmatprep.subr.mxu0 0.0
        %1955 = vmatpush1.msra.mxu0 %v1784
        %1956 = vmatprep.subr.mxu0 0.0
        %1957 = vmatpush1.msra.mxu0 %v1785
        %1958 = vmatprep.subr.mxu0 0.0
        %1959 = vmatpush1.msra.mxu0 %v1786
        %1960 = vmatprep.subr.mxu0 0.0
        %1961 = vmatpush1.msra.mxu0 %v1787
        %1962 = vmatprep.subr.mxu0 0.0
        %1963 = vmatpush1.msra.mxu0 %v1788
        %1964 = vmatprep.subr.mxu0 0.0
        %1965 = vmatpush1.msra.mxu0 %v1789
        %1966 = vmatprep.subr.mxu0 0.0
        %1967 = vmatpush1.msra.mxu0 %v1790
        %1968 = vmatprep.subr.mxu0 0.0
        %1969 = vmatpush1.msra.mxu0 %v1791
        %1970 = vmatprep.subr.mxu0 0.0
        %1971 = vmatpush1.msra.mxu0 %v1792
        %1972 = vmatprep.subr.mxu0 0.0
        %1973 = vmatpush1.msra.mxu0 %v1793
        %1974 = vmatprep.subr.mxu0 0.0
        %1975 = vmatpush1.msra.mxu0 %v1794
        %1976 = vmatprep.subr.mxu0 0.0
        %1977 = vmatpush1.msra.mxu0 %v1795
        %1978 = vmatprep.subr.mxu0 0.0
        %1979 = vmatpush1.msra.mxu0 %v1796
        %1980 = vmatprep.subr.mxu0 0.0
        %1981 = vmatpush1.msra.mxu0 %v1797
        %1982 = vmatprep.subr.mxu0 0.0
        %1983 = vmatpush1.msra.mxu0 %v1798
        %1984 = vmatprep.mubr.f32.mxu0 %v1800
        %1985 = vmatmul.mubr.f32.gmra.mrb[0].mxu0 %v1799
        %v1986 = vpop.f32.mrb[0].mxu0
        %v1987 = vadd.f32 0.0, %v1986
        %v1988 = vpop.f32.mrb[0].mxu0
        %1989 = vmatprep.mubr.f32.mxu0 %v1802
        %1990 = vmatmul.mubr.f32.gmra.mrb[0].mxu0 %v1801
        %v1991 = vpop.f32.mrb[0].mxu0
        %v1992 = vadd.f32 0.0, %v1991
        %v1993 = vpop.f32.mrb[0].mxu0
        %1994 = vmatprep.mubr.f32.mxu0 %v1804
        %1995 = vmatmul.mubr.f32.gmra.mrb[0].mxu0 %v1803
        %v1996 = vpop.f32.mrb[0].mxu0
        %v1997 = vadd.f32 0.0, %v1996
        %v1998 = vpop.f32.mrb[0].mxu0
        %1999 = vmatprep.mubr.f32.mxu0 %v1806
        %2000 = vmatmul.mubr.f32.gmra.mrb[0].mxu0 %v1805
        %v2001 = vpop.f32.mrb[0].mxu0
        %v2002 = vadd.f32 0.0, %v2001
        %v2003 = vpop.f32.mrb[0].mxu0
        %2004 = vmatprep.mubr.f32.mxu0 %v1808
        %2005 = vmatmul.mubr.f32.gmra.mrb[0].mxu0 %v1807
        %v2006 = vpop.f32.mrb[0].mxu0
        %v2007 = vadd.f32 0.0, %v2006
        %v2008 = vpop.f32.mrb[0].mxu0
        %2009 = vmatprep.mubr.f32.mxu0 %v1810
        %2010 = vmatmul.mubr.f32.gmra.mrb[0].mxu0 %v1809
        %v2011 = vpop.f32.mrb[0].mxu0
        %v2012 = vadd.f32 0.0, %v2011
        %v2013 = vpop.f32.mrb[0].mxu0
        %2014 = vmatprep.mubr.f32.mxu0 %v1812
        %2015 = vmatmul.mubr.f32.gmra.mrb[0].mxu0 %v1811
        %v2016 = vpop.f32.mrb[0].mxu0
        %v2017 = vadd.f32 0.0, %v2016
        %v2018 = vpop.f32.mrb[0].mxu0
        %2019 = vmatprep.mubr.f32.mxu0 %v1814
        %2020 = vmatmul.mubr.f32.gmra.mrb[0].mxu0 %v1813
        %v2021 = vpop.f32.mrb[0].mxu0
        %v2022 = vadd.f32 0.0, %v2021
        %v2023 = vpop.f32.mrb[0].mxu0
        %2024 = vdwg.mxu0
        %v2025 = vmax.f32 %v1882, 1e-30
        %v2026 = vmax.f32 %v1887, 1e-30
        %v2027 = vmax.f32 %v1892, 1e-30
        %v2028 = vmax.f32 %v1897, 1e-30
        %v2029 = vmax.f32 %v1902, 1e-30
        %v2030 = vmax.f32 %v1907, 1e-30
        %v2031 = vmax.f32 %v1912, 1e-30
        %v2032 = vmax.f32 %v1917, 1e-30
        %v2033 = vrcp.pop %v2025
        %v2034 = vrcp.pop %v2026
        %v2035 = vrcp.pop %v2027
        %v2036 = vrcp.pop %v2028
        %v2037 = vrcp.pop %v2029
        %v2038 = vrcp.pop %v2030
        %v2039 = vrcp.pop %v2031
        %v2040 = vrcp.pop %v2032
        %vm2041 = vcmp.gt.f32.partialorder %v1882, 0.0
        %vm2042 = vcmp.gt.f32.partialorder %v1887, 0.0
        %vm2043 = vcmp.gt.f32.partialorder %v1892, 0.0
        %vm2044 = vcmp.gt.f32.partialorder %v1897, 0.0
        %vm2045 = vcmp.gt.f32.partialorder %v1902, 0.0
        %vm2046 = vcmp.gt.f32.partialorder %v1907, 0.0
        %vm2047 = vcmp.gt.f32.partialorder %v1912, 0.0
        %vm2048 = vcmp.gt.f32.partialorder %v1917, 0.0
        %v2049 = vmul.f32 %v1987, %v2033
        %v2050 = vmul.f32 %v1992, %v2034
        %v2051 = vmul.f32 %v1997, %v2035
        %v2052 = vmul.f32 %v2002, %v2036
        %v2053 = vmul.f32 %v2007, %v2037
        %v2054 = vmul.f32 %v2012, %v2038
        %v2055 = vmul.f32 %v2017, %v2039
        %v2056 = vmul.f32 %v2022, %v2040
        %v2057 = vsel %vm2041, %v2049, 0.0
        %v2058 = vsel %vm2042, %v2050, 0.0
        %v2059 = vsel %vm2043, %v2051, 0.0
        %v2060 = vsel %vm2044, %v2052, 0.0
        %v2061 = vsel %vm2045, %v2053, 0.0
        %v2062 = vsel %vm2046, %v2054, 0.0
        %v2063 = vsel %vm2047, %v2055, 0.0
        %v2064 = vsel %vm2048, %v2056, 0.0
        %v2065 = vadd.f32 %v2057, %v1141
        %v2066 = vadd.f32 %v2058, %v1142
        %v2067 = vadd.f32 %v2059, %v1143
        %v2068 = vadd.f32 %v2060, %v1144
        %v2069 = vadd.f32 %v2061, %v1145
        %v2070 = vadd.f32 %v2062, %v1146
        %v2071 = vadd.f32 %v2063, %v1147
        %v2072 = vadd.f32 %v2064, %v1148
        %v2073 = vld [vmem:[%s521] sm:$0xff]
        %v2074 = vld [vmem:[%s521 + $0x8] sm:$0xff]
        %v2075 = vld [vmem:[%s521 + $0x10] sm:$0xff]
        %v2076 = vld [vmem:[%s521 + $0x18] sm:$0xff]
        %v2077 = vld [vmem:[%s521 + $0x20] sm:$0xff]
        %v2078 = vld [vmem:[%s521 + $0x28] sm:$0xff]
        %v2079 = vld [vmem:[%s521 + $0x30] sm:$0xff]
        %v2080 = vld [vmem:[%s521 + $0x38] sm:$0xff]
        %v2081 = vld [vmem:[%s521 + $0x40] sm:$0xff]
        %v2082 = vld [vmem:[%s521 + $0x48] sm:$0xff]
        %v2083 = vld [vmem:[%s521 + $0x50] sm:$0xff]
        %v2084 = vld [vmem:[%s521 + $0x58] sm:$0xff]
        %v2085 = vld [vmem:[%s521 + $0x60] sm:$0xff]
        %v2086 = vld [vmem:[%s521 + $0x68] sm:$0xff]
        %v2087 = vld [vmem:[%s521 + $0x70] sm:$0xff]
        %v2088 = vld [vmem:[%s521 + $0x78] sm:$0xff]
        %v2089 = vpack.c.bf16 %v2066, %v2065
        %v2090 = vpack.c.bf16 %v2068, %v2067
        %v2091 = vpack.c.bf16 %v2070, %v2069
        %v2092 = vpack.c.bf16 %v2072, %v2071
        %v2093 = vld [vmem:[%s604] sm:$0x3]
        %v2095 = vlaneseq
        %v2096 = vshrl.u32 %v2095, 7
        %v2097 = vsub.s32 0, %v2096
        %v2098 = vrot.slane %v2093, %v2097
        %v2099 = vlaneseq
        %v2100 = vshrl.u32 %v2099, 7
        %v2101 = vsub.s32 1, %v2100
        %v2102 = vrot.slane %v2093, %v2101
        %v2121 = vunpack.c.l.b16 %v2073
        %v2122 = vunpack.c.h.b16 %v2073
        %v2123 = vunpack.c.l.b16 %v2074
        %v2124 = vunpack.c.h.b16 %v2074
        %v2125 = vunpack.c.l.b16 %v2075
        %v2126 = vunpack.c.h.b16 %v2075
        %v2127 = vunpack.c.l.b16 %v2076
        %v2128 = vunpack.c.h.b16 %v2076
        %v2129 = vunpack.c.l.b16 %v2077
        %v2130 = vunpack.c.h.b16 %v2077
        %v2131 = vunpack.c.l.b16 %v2078
        %v2132 = vunpack.c.h.b16 %v2078
        %v2133 = vunpack.c.l.b16 %v2079
        %v2134 = vunpack.c.h.b16 %v2079
        %v2135 = vunpack.c.l.b16 %v2080
        %v2136 = vunpack.c.h.b16 %v2080
        %v2137 = vunpack.c.l.b16 %v2081
        %v2138 = vunpack.c.h.b16 %v2081
        %v2139 = vunpack.c.l.b16 %v2082
        %v2140 = vunpack.c.h.b16 %v2082
        %v2141 = vunpack.c.l.b16 %v2083
        %v2142 = vunpack.c.h.b16 %v2083
        %v2143 = vunpack.c.l.b16 %v2084
        %v2144 = vunpack.c.h.b16 %v2084
        %v2145 = vunpack.c.l.b16 %v2085
        %v2146 = vunpack.c.h.b16 %v2085
        %v2147 = vunpack.c.l.b16 %v2086
        %v2148 = vunpack.c.h.b16 %v2086
        %v2149 = vunpack.c.l.b16 %v2087
        %v2150 = vunpack.c.h.b16 %v2087
        %v2151 = vunpack.c.l.b16 %v2088
        %v2152 = vunpack.c.h.b16 %v2088
        %v2153 = vpack.c.b16 %v2123, %v2121
        %v2154 = vpack.c.b16 %v2124, %v2122
        %v2155 = vpack.c.b16 %v2127, %v2125
        %v2156 = vpack.c.b16 %v2128, %v2126
        %v2157 = vpack.c.b16 %v2131, %v2129
        %v2158 = vpack.c.b16 %v2132, %v2130
        %v2159 = vpack.c.b16 %v2135, %v2133
        %v2160 = vpack.c.b16 %v2136, %v2134
        %v2161 = vpack.c.b16 %v2139, %v2137
        %v2162 = vpack.c.b16 %v2140, %v2138
        %v2163 = vpack.c.b16 %v2143, %v2141
        %v2164 = vpack.c.b16 %v2144, %v2142
        %v2165 = vpack.c.b16 %v2147, %v2145
        %v2166 = vpack.c.b16 %v2148, %v2146
        %v2167 = vpack.c.b16 %v2151, %v2149
        %v2168 = vpack.c.b16 %v2152, %v2150
        %2185 = vmatprep.subr.bf16.mxu0 %v2154
        %2186 = vmatpush1.bf16.msra.mxu0 %v2153
        %2187 = vmatprep.subr.bf16.mxu0 %v2156
        %2188 = vmatpush1.bf16.msra.mxu0 %v2155
        %2189 = vmatprep.subr.bf16.mxu0 %v2158
        %2190 = vmatpush1.bf16.msra.mxu0 %v2157
        %2191 = vmatprep.subr.bf16.mxu0 %v2160
        %2192 = vmatpush1.bf16.msra.mxu0 %v2159
        %2193 = vmatprep.subr.bf16.mxu0 %v2162
        %2194 = vmatpush1.bf16.msra.mxu0 %v2161
        %2195 = vmatprep.subr.bf16.mxu0 %v2164
        %2196 = vmatpush1.bf16.msra.mxu0 %v2163
        %2197 = vmatprep.subr.bf16.mxu0 %v2166
        %2198 = vmatpush1.bf16.msra.mxu0 %v2165
        %2199 = vmatprep.subr.bf16.mxu0 %v2168
        %2200 = vmatpush1.bf16.msra.mxu0 %v2167
        %2201 = vmatprep.subr.bf16.mxu0 0
        %2202 = vmatpush1.bf16.msra.mxu0 0
        %2203 = vmatprep.subr.bf16.mxu0 0
        %2204 = vmatpush1.bf16.msra.mxu0 0
        %2205 = vmatprep.subr.bf16.mxu0 0
        %2206 = vmatpush1.bf16.msra.mxu0 0
        %2207 = vmatprep.subr.bf16.mxu0 0
        %2208 = vmatpush1.bf16.msra.mxu0 0
        %2209 = vmatprep.subr.bf16.mxu0 0
        %2210 = vmatpush1.bf16.msra.mxu0 0
        %2211 = vmatprep.subr.bf16.mxu0 0
        %2212 = vmatpush1.bf16.msra.mxu0 0
        %2213 = vmatprep.subr.bf16.mxu0 0
        %2214 = vmatpush1.bf16.msra.mxu0 0
        %2215 = vmatprep.subr.bf16.mxu0 0
        %2216 = vmatpush1.bf16.msra.mxu0 0
        %2217 = vmatprep.mubr.bf16.mxu0 0
        %2218 = vmatmul.mubr.bf16.gmra.mrb[0].mxu0 %v2089
        %v2219 = vpop.f32.mrb[0].mxu0
        %v2220 = vadd.f32 %v2098, %v2219
        %v2221 = vpop.f32.mrb[0].mxu0
        %v2222 = vadd.f32 %v2102, %v2221
        %v2223 = vpop.f32.mrb[0].mxu0
        %v2224 = vadd.f32 %v2098, %v2223
        %v2225 = vpop.f32.mrb[0].mxu0
        %v2226 = vadd.f32 %v2102, %v2225
        %2227 = vmatprep.mubr.bf16.mxu0 0
        %2228 = vmatmul.mubr.bf16.gmra.mrb[0].mxu0 %v2090
        %v2229 = vpop.f32.mrb[0].mxu0
        %v2230 = vadd.f32 %v2098, %v2229
        %v2231 = vpop.f32.mrb[0].mxu0
        %v2232 = vadd.f32 %v2102, %v2231
        %v2233 = vpop.f32.mrb[0].mxu0
        %v2234 = vadd.f32 %v2098, %v2233
        %v2235 = vpop.f32.mrb[0].mxu0
        %v2236 = vadd.f32 %v2102, %v2235
        %2237 = vmatprep.mubr.bf16.mxu0 0
        %2238 = vmatmul.mubr.bf16.gmra.mrb[0].mxu0 %v2091
        %v2239 = vpop.f32.mrb[0].mxu0
        %v2240 = vadd.f32 %v2098, %v2239
        %v2241 = vpop.f32.mrb[0].mxu0
        %v2242 = vadd.f32 %v2102, %v2241
        %v2243 = vpop.f32.mrb[0].mxu0
        %v2244 = vadd.f32 %v2098, %v2243
        %v2245 = vpop.f32.mrb[0].mxu0
        %v2246 = vadd.f32 %v2102, %v2245
        %2247 = vmatprep.mubr.bf16.mxu0 0
        %2248 = vmatmul.mubr.bf16.gmra.mrb[0].mxu0 %v2092
        %v2249 = vpop.f32.mrb[0].mxu0
        %v2250 = vadd.f32 %v2098, %v2249
        %v2251 = vpop.f32.mrb[0].mxu0
        %v2252 = vadd.f32 %v2102, %v2251
        %v2253 = vpop.f32.mrb[0].mxu0
        %v2254 = vadd.f32 %v2098, %v2253
        %v2255 = vpop.f32.mrb[0].mxu0
        %v2256 = vadd.f32 %v2102, %v2255
        %2257 = vdwg.mxu0
        %v2258 = vld [vmem:[%s608] sm:$0x3]
        %v2259 = vld [vmem:[%s612] sm:$0x3]
        %v2260 = vadd.f32 %v2220, %v2222
        %2261 = vadd.xlane.f32.xlu0 %v2260
        %v2262 = vpop.xlane.xlu0 %2261
        %v2263 = vadd.f32 %v2224, %v2226
        %2264 = vadd.xlane.f32.xlu0 %v2263
        %v2265 = vpop.xlane.xlu0 %2264
        %v2266 = vadd.f32 %v2230, %v2232
        %2267 = vadd.xlane.f32.xlu0 %v2266
        %v2268 = vpop.xlane.xlu0 %2267
        %v2269 = vadd.f32 %v2234, %v2236
        %2270 = vadd.xlane.f32.xlu0 %v2269
        %v2271 = vpop.xlane.xlu0 %2270
        %v2272 = vadd.f32 %v2240, %v2242
        %2273 = vadd.xlane.f32.xlu0 %v2272
        %v2274 = vpop.xlane.xlu0 %2273
        %v2275 = vadd.f32 %v2244, %v2246
        %2276 = vadd.xlane.f32.xlu0 %v2275
        %v2277 = vpop.xlane.xlu0 %2276
        %v2278 = vadd.f32 %v2250, %v2252
        %2279 = vadd.xlane.f32.xlu0 %v2278
        %v2280 = vpop.xlane.xlu0 %2279
        %v2281 = vadd.f32 %v2254, %v2256
        %2282 = vadd.xlane.f32.xlu0 %v2281
        %v2283 = vpop.xlane.xlu0 %2282
        %v2284 = vrcp.pop 256.0
        %v2285 = vmul.f32 %v2262, %v2284
        %v2286 = vmul.f32 %v2265, %v2284
        %v2287 = vmul.f32 %v2268, %v2284
        %v2288 = vmul.f32 %v2271, %v2284
        %v2289 = vmul.f32 %v2274, %v2284
        %v2290 = vmul.f32 %v2277, %v2284
        %v2291 = vmul.f32 %v2280, %v2284
        %v2292 = vmul.f32 %v2283, %v2284
        %v2293 = vsub.f32 %v2220, %v2285
        %v2294 = vsub.f32 %v2222, %v2285
        %v2295 = vsub.f32 %v2224, %v2286
        %v2296 = vsub.f32 %v2226, %v2286
        %v2297 = vsub.f32 %v2230, %v2287
        %v2298 = vsub.f32 %v2232, %v2287
        %v2299 = vsub.f32 %v2234, %v2288
        %v2300 = vsub.f32 %v2236, %v2288
        %v2301 = vsub.f32 %v2240, %v2289
        %v2302 = vsub.f32 %v2242, %v2289
        %v2303 = vsub.f32 %v2244, %v2290
        %v2304 = vsub.f32 %v2246, %v2290
        %v2305 = vsub.f32 %v2250, %v2291
        %v2306 = vsub.f32 %v2252, %v2291
        %v2307 = vsub.f32 %v2254, %v2292
        %v2308 = vsub.f32 %v2256, %v2292
        %v2309 = vmul.f32 %v2293, %v2293
        %v2310 = vmul.f32 %v2294, %v2294
        %v2311 = vmul.f32 %v2295, %v2295
        %v2312 = vmul.f32 %v2296, %v2296
        %v2313 = vmul.f32 %v2297, %v2297
        %v2314 = vmul.f32 %v2298, %v2298
        %v2315 = vmul.f32 %v2299, %v2299
        %v2316 = vmul.f32 %v2300, %v2300
        %v2317 = vmul.f32 %v2301, %v2301
        %v2318 = vmul.f32 %v2302, %v2302
        %v2319 = vmul.f32 %v2303, %v2303
        %v2320 = vmul.f32 %v2304, %v2304
        %v2321 = vmul.f32 %v2305, %v2305
        %v2322 = vmul.f32 %v2306, %v2306
        %v2323 = vmul.f32 %v2307, %v2307
        %v2324 = vmul.f32 %v2308, %v2308
        %v2325 = vadd.f32 %v2309, %v2310
        %2326 = vadd.xlane.f32.xlu0 %v2325
        %v2327 = vpop.xlane.xlu0 %2326
        %v2328 = vadd.f32 %v2311, %v2312
        %2329 = vadd.xlane.f32.xlu0 %v2328
        %v2330 = vpop.xlane.xlu0 %2329
        %v2331 = vadd.f32 %v2313, %v2314
        %2332 = vadd.xlane.f32.xlu0 %v2331
        %v2333 = vpop.xlane.xlu0 %2332
        %v2334 = vadd.f32 %v2315, %v2316
        %2335 = vadd.xlane.f32.xlu0 %v2334
        %v2336 = vpop.xlane.xlu0 %2335
        %v2337 = vadd.f32 %v2317, %v2318
        %2338 = vadd.xlane.f32.xlu0 %v2337
        %v2339 = vpop.xlane.xlu0 %2338
        %v2340 = vadd.f32 %v2319, %v2320
        %2341 = vadd.xlane.f32.xlu0 %v2340
        %v2342 = vpop.xlane.xlu0 %2341
        %v2343 = vadd.f32 %v2321, %v2322
        %2344 = vadd.xlane.f32.xlu0 %v2343
        %v2345 = vpop.xlane.xlu0 %2344
        %v2346 = vadd.f32 %v2323, %v2324
        %2347 = vadd.xlane.f32.xlu0 %v2346
        %v2348 = vpop.xlane.xlu0 %2347
        %v2349 = vmul.f32 %v2327, %v2284
        %v2350 = vmul.f32 %v2330, %v2284
        %v2351 = vmul.f32 %v2333, %v2284
        %v2352 = vmul.f32 %v2336, %v2284
        %v2353 = vmul.f32 %v2339, %v2284
        %v2354 = vmul.f32 %v2342, %v2284
        %v2355 = vmul.f32 %v2345, %v2284
        %v2356 = vmul.f32 %v2348, %v2284
        %v2357 = vadd.f32 %v2349, 1e-05
        %v2358 = vadd.f32 %v2350, 1e-05
        %v2359 = vadd.f32 %v2351, 1e-05
        %v2360 = vadd.f32 %v2352, 1e-05
        %v2361 = vadd.f32 %v2353, 1e-05
        %v2362 = vadd.f32 %v2354, 1e-05
        %v2363 = vadd.f32 %v2355, 1e-05
        %v2364 = vadd.f32 %v2356, 1e-05
        %v2365 = vrsqrt.pop %v2357
        %v2366 = vrsqrt.pop %v2358
        %v2367 = vrsqrt.pop %v2359
        %v2368 = vrsqrt.pop %v2360
        %v2369 = vrsqrt.pop %v2361
        %v2370 = vrsqrt.pop %v2362
        %v2371 = vrsqrt.pop %v2363
        %v2372 = vrsqrt.pop %v2364
        %v2373 = vmul.f32 %v2293, %v2365
        %v2374 = vmul.f32 %v2294, %v2365
        %v2375 = vmul.f32 %v2295, %v2366
        %v2376 = vmul.f32 %v2296, %v2366
        %v2377 = vmul.f32 %v2297, %v2367
        %v2378 = vmul.f32 %v2298, %v2367
        %v2379 = vmul.f32 %v2299, %v2368
        %v2380 = vmul.f32 %v2300, %v2368
        %v2381 = vmul.f32 %v2301, %v2369
        %v2382 = vmul.f32 %v2302, %v2369
        %v2383 = vmul.f32 %v2303, %v2370
        %v2384 = vmul.f32 %v2304, %v2370
        %v2385 = vmul.f32 %v2305, %v2371
        %v2386 = vmul.f32 %v2306, %v2371
        %v2387 = vmul.f32 %v2307, %v2372
        %v2388 = vmul.f32 %v2308, %v2372
        %v2390 = vlaneseq
        %v2391 = vshrl.u32 %v2390, 7
        %v2392 = vsub.s32 0, %v2391
        %v2393 = vrot.slane %v2258, %v2392
        %v2394 = vlaneseq
        %v2395 = vshrl.u32 %v2394, 7
        %v2396 = vsub.s32 1, %v2395
        %v2397 = vrot.slane %v2258, %v2396
        %v2400 = vmul.f32 %v2373, %v2393
        %v2401 = vmul.f32 %v2374, %v2397
        %v2402 = vmul.f32 %v2375, %v2393
        %v2403 = vmul.f32 %v2376, %v2397
        %v2404 = vmul.f32 %v2377, %v2393
        %v2405 = vmul.f32 %v2378, %v2397
        %v2406 = vmul.f32 %v2379, %v2393
        %v2407 = vmul.f32 %v2380, %v2397
        %v2408 = vmul.f32 %v2381, %v2393
        %v2409 = vmul.f32 %v2382, %v2397
        %v2410 = vmul.f32 %v2383, %v2393
        %v2411 = vmul.f32 %v2384, %v2397
        %v2412 = vmul.f32 %v2385, %v2393
        %v2413 = vmul.f32 %v2386, %v2397
        %v2414 = vmul.f32 %v2387, %v2393
        %v2415 = vmul.f32 %v2388, %v2397
        %v2417 = vlaneseq
        %v2418 = vshrl.u32 %v2417, 7
        %v2419 = vsub.s32 0, %v2418
        %v2420 = vrot.slane %v2259, %v2419
        %v2421 = vlaneseq
        %v2422 = vshrl.u32 %v2421, 7
        %v2423 = vsub.s32 1, %v2422
        %v2424 = vrot.slane %v2259, %v2423
        %v2427 = vadd.f32 %v2400, %v2420
        %v2428 = vadd.f32 %v2401, %v2424
        %v2429 = vadd.f32 %v2402, %v2420
        %v2430 = vadd.f32 %v2403, %v2424
        %v2431 = vadd.f32 %v2404, %v2420
        %v2432 = vadd.f32 %v2405, %v2424
        %v2433 = vadd.f32 %v2406, %v2420
        %v2434 = vadd.f32 %v2407, %v2424
        %v2435 = vadd.f32 %v2408, %v2420
        %v2436 = vadd.f32 %v2409, %v2424
        %v2437 = vadd.f32 %v2410, %v2420
        %v2438 = vadd.f32 %v2411, %v2424
        %v2439 = vadd.f32 %v2412, %v2420
        %v2440 = vadd.f32 %v2413, %v2424
        %v2441 = vadd.f32 %v2414, %v2420
        %v2442 = vadd.f32 %v2415, %v2424
        %v2443 = vmax.f32 %v2427, 0.0
        %v2444 = vmax.f32 %v2428, 0.0
        %v2445 = vmax.f32 %v2429, 0.0
        %v2446 = vmax.f32 %v2430, 0.0
        %v2447 = vmax.f32 %v2431, 0.0
        %v2448 = vmax.f32 %v2432, 0.0
        %v2449 = vmax.f32 %v2433, 0.0
        %v2450 = vmax.f32 %v2434, 0.0
        %v2451 = vmax.f32 %v2435, 0.0
        %v2452 = vmax.f32 %v2436, 0.0
        %v2453 = vmax.f32 %v2437, 0.0
        %v2454 = vmax.f32 %v2438, 0.0
        %v2455 = vmax.f32 %v2439, 0.0
        %v2456 = vmax.f32 %v2440, 0.0
        %v2457 = vmax.f32 %v2441, 0.0
        %v2458 = vmax.f32 %v2442, 0.0
        %v2459 = vld [vmem:[%s530] sm:$0xf]
        %v2460 = vld [vmem:[%s530 + $0x4] sm:$0xf]
        %v2461 = vld [vmem:[%s530 + $0x8] sm:$0xf]
        %v2462 = vld [vmem:[%s530 + $0xc] sm:$0xf]
        %v2463 = vld [vmem:[%s530 + $0x10] sm:$0xf]
        %v2464 = vld [vmem:[%s530 + $0x14] sm:$0xf]
        %v2465 = vld [vmem:[%s530 + $0x18] sm:$0xf]
        %v2466 = vld [vmem:[%s530 + $0x1c] sm:$0xf]
        %v2467 = vld [vmem:[%s530 + $0x20] sm:$0xf]
        %v2468 = vld [vmem:[%s530 + $0x24] sm:$0xf]
        %v2469 = vld [vmem:[%s530 + $0x28] sm:$0xf]
        %v2470 = vld [vmem:[%s530 + $0x2c] sm:$0xf]
        %v2471 = vld [vmem:[%s530 + $0x30] sm:$0xf]
        %v2472 = vld [vmem:[%s530 + $0x34] sm:$0xf]
        %v2473 = vld [vmem:[%s530 + $0x38] sm:$0xf]
        %v2474 = vld [vmem:[%s530 + $0x3c] sm:$0xf]
        %v2475 = vld [vmem:[%s530 + $0x40] sm:$0xf]
        %v2476 = vld [vmem:[%s530 + $0x44] sm:$0xf]
        %v2477 = vld [vmem:[%s530 + $0x48] sm:$0xf]
        %v2478 = vld [vmem:[%s530 + $0x4c] sm:$0xf]
        %v2479 = vld [vmem:[%s530 + $0x50] sm:$0xf]
        %v2480 = vld [vmem:[%s530 + $0x54] sm:$0xf]
        %v2481 = vld [vmem:[%s530 + $0x58] sm:$0xf]
        %v2482 = vld [vmem:[%s530 + $0x5c] sm:$0xf]
        %v2483 = vld [vmem:[%s530 + $0x60] sm:$0xf]
        %v2484 = vld [vmem:[%s530 + $0x64] sm:$0xf]
        %v2485 = vld [vmem:[%s530 + $0x68] sm:$0xf]
        %v2486 = vld [vmem:[%s530 + $0x6c] sm:$0xf]
        %v2487 = vld [vmem:[%s530 + $0x70] sm:$0xf]
        %v2488 = vld [vmem:[%s530 + $0x74] sm:$0xf]
        %v2489 = vld [vmem:[%s530 + $0x78] sm:$0xf]
        %v2490 = vld [vmem:[%s530 + $0x7c] sm:$0xf]
        %v2491 = vpack.c.bf16 %v2445, %v2443
        %v2492 = vpack.c.bf16 %v2446, %v2444
        %v2493 = vpack.c.bf16 %v2449, %v2447
        %v2494 = vpack.c.bf16 %v2450, %v2448
        %v2495 = vpack.c.bf16 %v2453, %v2451
        %v2496 = vpack.c.bf16 %v2454, %v2452
        %v2497 = vpack.c.bf16 %v2457, %v2455
        %v2498 = vpack.c.bf16 %v2458, %v2456
        %v2499 = vld [vmem:[%s615] sm:$0x1]
        %v2501 = vlaneseq
        %v2502 = vshrl.u32 %v2501, 7
        %v2503 = vsub.s32 0, %v2502
        %v2504 = vrot.slane %v2499, %v2503
        %v2538 = vunpack.c.l.b16 %v2459
        %v2539 = vunpack.c.l.b16 %v2460
        %v2540 = vunpack.c.l.b16 %v2461
        %v2541 = vunpack.c.l.b16 %v2462
        %v2542 = vunpack.c.l.b16 %v2463
        %v2543 = vunpack.c.l.b16 %v2464
        %v2544 = vunpack.c.l.b16 %v2465
        %v2545 = vunpack.c.l.b16 %v2466
        %v2546 = vunpack.c.l.b16 %v2467
        %v2547 = vunpack.c.l.b16 %v2468
        %v2548 = vunpack.c.l.b16 %v2469
        %v2549 = vunpack.c.l.b16 %v2470
        %v2550 = vunpack.c.l.b16 %v2471
        %v2551 = vunpack.c.l.b16 %v2472
        %v2552 = vunpack.c.l.b16 %v2473
        %v2553 = vunpack.c.l.b16 %v2474
        %v2554 = vunpack.c.l.b16 %v2475
        %v2555 = vunpack.c.l.b16 %v2476
        %v2556 = vunpack.c.l.b16 %v2477
        %v2557 = vunpack.c.l.b16 %v2478
        %v2558 = vunpack.c.l.b16 %v2479
        %v2559 = vunpack.c.l.b16 %v2480
        %v2560 = vunpack.c.l.b16 %v2481
        %v2561 = vunpack.c.l.b16 %v2482
        %v2562 = vunpack.c.l.b16 %v2483
        %v2563 = vunpack.c.l.b16 %v2484
        %v2564 = vunpack.c.l.b16 %v2485
        %v2565 = vunpack.c.l.b16 %v2486
        %v2566 = vunpack.c.l.b16 %v2487
        %v2567 = vunpack.c.l.b16 %v2488
        %v2568 = vunpack.c.l.b16 %v2489
        %v2569 = vunpack.c.l.b16 %v2490
        %v2570 = vpack.c.b16 %v2539, %v2538
        %v2571 = vpack.c.b16 %v2541, %v2540
        %v2572 = vpack.c.b16 %v2543, %v2542
        %v2573 = vpack.c.b16 %v2545, %v2544
        %v2574 = vpack.c.b16 %v2547, %v2546
        %v2575 = vpack.c.b16 %v2549, %v2548
        %v2576 = vpack.c.b16 %v2551, %v2550
        %v2577 = vpack.c.b16 %v2553, %v2552
        %v2578 = vpack.c.b16 %v2555, %v2554
        %v2579 = vpack.c.b16 %v2557, %v2556
        %v2580 = vpack.c.b16 %v2559, %v2558
        %v2581 = vpack.c.b16 %v2561, %v2560
        %v2582 = vpack.c.b16 %v2563, %v2562
        %v2583 = vpack.c.b16 %v2565, %v2564
        %v2584 = vpack.c.b16 %v2567, %v2566
        %v2585 = vpack.c.b16 %v2569, %v2568
        %2602 = vmatprep.subr.bf16.mxu0 0
        %2603 = vmatpush1.bf16.msra.mxu0 %v2570
        %2604 = vmatprep.subr.bf16.mxu0 0
        %2605 = vmatpush1.bf16.msra.mxu0 %v2571
        %2606 = vmatprep.subr.bf16.mxu0 0
        %2607 = vmatpush1.bf16.msra.mxu0 %v2572
        %2608 = vmatprep.subr.bf16.mxu0 0
        %2609 = vmatpush1.bf16.msra.mxu0 %v2573
        %2610 = vmatprep.subr.bf16.mxu0 0
        %2611 = vmatpush1.bf16.msra.mxu0 %v2574
        %2612 = vmatprep.subr.bf16.mxu0 0
        %2613 = vmatpush1.bf16.msra.mxu0 %v2575
        %2614 = vmatprep.subr.bf16.mxu0 0
        %2615 = vmatpush1.bf16.msra.mxu0 %v2576
        %2616 = vmatprep.subr.bf16.mxu0 0
        %2617 = vmatpush1.bf16.msra.mxu0 %v2577
        %2618 = vmatprep.subr.bf16.mxu0 0
        %2619 = vmatpush1.bf16.msra.mxu0 %v2578
        %2620 = vmatprep.subr.bf16.mxu0 0
        %2621 = vmatpush1.bf16.msra.mxu0 %v2579
        %2622 = vmatprep.subr.bf16.mxu0 0
        %2623 = vmatpush1.bf16.msra.mxu0 %v2580
        %2624 = vmatprep.subr.bf16.mxu0 0
        %2625 = vmatpush1.bf16.msra.mxu0 %v2581
        %2626 = vmatprep.subr.bf16.mxu0 0
        %2627 = vmatpush1.bf16.msra.mxu0 %v2582
        %2628 = vmatprep.subr.bf16.mxu0 0
        %2629 = vmatpush1.bf16.msra.mxu0 %v2583
        %2630 = vmatprep.subr.bf16.mxu0 0
        %2631 = vmatpush1.bf16.msra.mxu0 %v2584
        %2632 = vmatprep.subr.bf16.mxu0 0
        %2633 = vmatpush1.bf16.msra.mxu0 %v2585
        %2634 = vmatprep.mubr.bf16.mxu0 %v2492
        %2635 = vmatmul.mubr.bf16.gmra.mrb[0].mxu0 %v2491
        %v2636 = vpop.f32.mrb[0].mxu0
        %v2637 = vadd.f32 %v2504, %v2636
        %v2638 = vpop.f32.mrb[0].mxu0
        %v2639 = vpop.f32.mrb[0].mxu0
        %v2640 = vadd.f32 %v2504, %v2639
        %v2641 = vpop.f32.mrb[0].mxu0
        %2642 = vmatprep.mubr.bf16.mxu0 %v2494
        %2643 = vmatmul.mubr.bf16.gmra.mrb[0].mxu0 %v2493
        %v2644 = vpop.f32.mrb[0].mxu0
        %v2645 = vadd.f32 %v2504, %v2644
        %v2646 = vpop.f32.mrb[0].mxu0
        %v2647 = vpop.f32.mrb[0].mxu0
        %v2648 = vadd.f32 %v2504, %v2647
        %v2649 = vpop.f32.mrb[0].mxu0
        %2650 = vmatprep.mubr.bf16.mxu0 %v2496
        %2651 = vmatmul.mubr.bf16.gmra.mrb[0].mxu0 %v2495
        %v2652 = vpop.f32.mrb[0].mxu0
        %v2653 = vadd.f32 %v2504, %v2652
        %v2654 = vpop.f32.mrb[0].mxu0
        %v2655 = vpop.f32.mrb[0].mxu0
        %v2656 = vadd.f32 %v2504, %v2655
        %v2657 = vpop.f32.mrb[0].mxu0
        %2658 = vmatprep.mubr.bf16.mxu0 %v2498
        %2659 = vmatmul.mubr.bf16.gmra.mrb[0].mxu0 %v2497
        %v2660 = vpop.f32.mrb[0].mxu0
        %v2661 = vadd.f32 %v2504, %v2660
        %v2662 = vpop.f32.mrb[0].mxu0
        %v2663 = vpop.f32.mrb[0].mxu0
        %v2664 = vadd.f32 %v2504, %v2663
        %v2665 = vpop.f32.mrb[0].mxu0
        %2666 = vdwg.mxu0
        // Predicated region
        $region101: #{tpu_custom_call.1} parent=71 // pred_check
          %p2667 = pneg %p617
        $region102: #{tpu_custom_call.1} parent=71 // pred_check_branch
          %2669 = sbr.rel (%p2667) target = $region104
        $region103: #{tpu_custom_call.1} parent=71 // pred_region
          %2670 = vst [vmem:[#allocation2] sm:$0xff] %v2637
          %2671 = vst [vmem:[#allocation2 + $0x8] sm:$0xff] %v2640
          %2672 = vst [vmem:[#allocation2 + $0x10] sm:$0xff] %v2645
          %2673 = vst [vmem:[#allocation2 + $0x18] sm:$0xff] %v2648
          %2674 = vst [vmem:[#allocation2 + $0x20] sm:$0xff] %v2653
          %2675 = vst [vmem:[#allocation2 + $0x28] sm:$0xff] %v2656
          %2676 = vst [vmem:[#allocation2 + $0x30] sm:$0xff] %v2661
          %2677 = vst [vmem:[#allocation2 + $0x38] sm:$0xff] %v2664
        $region104: #{tpu_custom_call.1} parent=71 // pred_fallthru
          _
        // Predicated region
        $region105: #{tpu_custom_call.1} parent=71 // pred_check
          %p2678 = pneg %p994
        $region106: #{tpu_custom_call.1} parent=71 // pred_check_branch
          %2680 = sbr.rel (%p2678) target = $region108
        $region107: #{tpu_custom_call.1} parent=71 // pred_region
          %v2681 = vld [vmem:[#allocation2] sm:$0xff]
          %v2682 = vld [vmem:[#allocation2 + $0x8] sm:$0xff]
          %v2683 = vld [vmem:[#allocation2 + $0x10] sm:$0xff]
          %v2684 = vld [vmem:[#allocation2 + $0x18] sm:$0xff]
          %v2685 = vld [vmem:[#allocation2 + $0x20] sm:$0xff]
          %v2686 = vld [vmem:[#allocation2 + $0x28] sm:$0xff]
          %v2687 = vld [vmem:[#allocation2 + $0x30] sm:$0xff]
          %v2688 = vld [vmem:[#allocation2 + $0x38] sm:$0xff]
          %v2689 = vadd.f32 %v2681, %v2637
          %v2690 = vadd.f32 %v2682, %v2640
          %v2691 = vadd.f32 %v2683, %v2645
          %v2692 = vadd.f32 %v2684, %v2648
          %v2693 = vadd.f32 %v2685, %v2653
          %v2694 = vadd.f32 %v2686, %v2656
          %v2695 = vadd.f32 %v2687, %v2661
          %v2696 = vadd.f32 %v2688, %v2664
          %2697 = vst [vmem:[#allocation2] sm:$0xff] %v2689
          %2698 = vst [vmem:[#allocation2 + $0x8] sm:$0xff] %v2690
          %2699 = vst [vmem:[#allocation2 + $0x10] sm:$0xff] %v2691
          %2700 = vst [vmem:[#allocation2 + $0x18] sm:$0xff] %v2692
          %2701 = vst [vmem:[#allocation2 + $0x20] sm:$0xff] %v2693
          %2702 = vst [vmem:[#allocation2 + $0x28] sm:$0xff] %v2694
          %2703 = vst [vmem:[#allocation2 + $0x30] sm:$0xff] %v2695
          %2704 = vst [vmem:[#allocation2 + $0x38] sm:$0xff] %v2696
        $region108: #{tpu_custom_call.1} parent=71 // pred_fallthru
          _
        %p2705 = scmp.eq.s32.totalorder %s28, 2
        // Predicated region
        $region109: #{tpu_custom_call.1} parent=71 // pred_check
          %p2706 = pneg %p2705
        $region110: #{tpu_custom_call.1} parent=71 // pred_check_branch
          %2708 = sbr.rel (%p2706) target = $region112
        $region111: #{tpu_custom_call.1} parent=71 // pred_region
          %v2709 = vld [vmem:[#allocation2] sm:$0xff]
          %v2710 = vld [vmem:[#allocation2 + $0x8] sm:$0xff]
          %v2711 = vld [vmem:[#allocation2 + $0x10] sm:$0xff]
          %v2712 = vld [vmem:[#allocation2 + $0x18] sm:$0xff]
          %v2713 = vld [vmem:[#allocation2 + $0x20] sm:$0xff]
          %v2714 = vld [vmem:[#allocation2 + $0x28] sm:$0xff]
          %v2715 = vld [vmem:[#allocation2 + $0x30] sm:$0xff]
          %v2716 = vld [vmem:[#allocation2 + $0x38] sm:$0xff]
          %2717 = vst [vmem:[#allocation15] sm:$0xff] %v2709
          %2718 = vst [vmem:[#allocation15 + $0x8] sm:$0xff] %v2710
          %2719 = vst [vmem:[#allocation15 + $0x10] sm:$0xff] %v2711
          %2720 = vst [vmem:[#allocation15 + $0x18] sm:$0xff] %v2712
          %2721 = vst [vmem:[#allocation15 + $0x20] sm:$0xff] %v2713
          %2722 = vst [vmem:[#allocation15 + $0x28] sm:$0xff] %v2714
          %2723 = vst [vmem:[#allocation15 + $0x30] sm:$0xff] %v2715
          %2724 = vst [vmem:[#allocation15 + $0x38] sm:$0xff] %v2716
        $region112: #{tpu_custom_call.1} parent=71 // pred_fallthru
          _
        // Predicated region
        $region113: #{tpu_custom_call.1} parent=71 // pred_check
          %p2725 = pneg %p354
        $region114: #{tpu_custom_call.1} parent=71 // pred_check_branch
          %2727 = sbr.rel (%p2725) target = $region116
        $region115: #{tpu_custom_call.1} parent=71 // pred_region
          %s2729 = ssub.s32 1024, 1024
          %2730 = vsyncadd [#allocation8], %s2729
          %s2731 = sshll.u32 [#allocation15], 4
          %s2732 = int_to_ptr.vmem [resolvable:$true] %s2731
          %2737 = dma.vmem_to_hbm [thread:$0]  %s2732, 1024, %s13, [#allocation8], 128, 128, 8
        $region116: #{tpu_custom_call.1} parent=71 // pred_fallthru
          _
        // Predicated region
        $region117: #{tpu_custom_call.1} parent=71 // pred_check
          %p2738 = pneg %p354
        $region118: #{tpu_custom_call.1} parent=71 // pred_check_branch
          %2740 = sbr.rel (%p2738) target = $region120
        $region119: #{tpu_custom_call.1} parent=71 // pred_region
          %2741 = dma.done [#allocation8], 1024
        $region120: #{tpu_custom_call.1} parent=71 // pred_fallthru
          _
      $region72: #{tpu_custom_call.1} parent=5 // pred_fallthru
        _
      %p2742 = scmp.le.s32.totalorder 2, %s23
      // Predicated region
      $region121: #{tpu_custom_call.1} parent=5 // pred_check
        %p2743 = pneg %p2742
      $region122: #{tpu_custom_call.1} parent=5 // pred_check_branch
        %2745 = sbr.rel (%p2743) target = $region124
      $region123: #{tpu_custom_call.1} parent=5 // pred_region
        %s2746 = ssub.s32 %s23, 2
      $region124: #{tpu_custom_call.1} parent=5 // pred_fallthru
        _
    $region6: #{tpu_custom_call.1} parent=1 // loop_footer
      %s27 = sadd.s32 1, %s23
    $region7: #{tpu_custom_call.1} parent=1 // loop_footer_branch
      %22 = sbr.rel target = $region3
    $region8: #{tpu_custom_call.1} parent=1 // loop_exit
      _
    %2747 = vsyncpa [#allocation7], 1
    %s2748 = scalar_lea.sflag [#allocation7], 1
    %2749 = vsyncpa %s2748, 1
    %2750 = vsyncpa [#allocation11], 1
    %2751 = vsyncpa [#allocation8], 1
    %s2752 = scalar_lea.sflag [#allocation8], 1
    %2753 = vsyncpa %s2752, 1
    %2754 = vsyncpa [#allocation9], 1
    %s2755 = scalar_lea.sflag [#allocation9], 1
    %2756 = vsyncpa %s2755, 1

</llo_original>
